<compile_context>
chip_gen: v5e
topology: v5e:2x2
jax: 0.10.0
libtpu: 0.0.40
codegen_flags: <defaults>
</compile_context>

<pallas_src>
import functools

import jax
import jax.numpy as jnp
from jax.experimental import pallas as pl
from jax.experimental.pallas import tpu as pltpu  # noqa: F401  (kept for TPU-specific knobs)

LN_EPS = 1e-5  # torch.nn.LayerNorm default eps


def _silu(x):
    return x * (1.0 / (1.0 + jnp.exp(-x)))


def _softplus(x):
    # numerically stable: exp(-|x|) <= 1, no overflow.
    return jnp.maximum(x, 0.0) + jnp.log(1.0 + jnp.exp(-jnp.abs(x)))


def _layernorm(x, gamma, beta):
    mu = jnp.mean(x, axis=-1, keepdims=True)
    var = jnp.mean((x - mu) ** 2, axis=-1, keepdims=True)
    return (x - mu) * jax.lax.rsqrt(var + LN_EPS) * gamma + beta


# ----------------------------------------------------------------------------
# Pallas kernel
# ----------------------------------------------------------------------------
def _ssm_precompute(u, WxpT, WdtT, bdt, AlogT, *, dt_rank, d_state):
    """Vectorized per-row precompute for the selective scan.

    u: (B*S, E), batch-major rows (row = b*S + t).
    Returns dA, dBu with shape (B*S, N, E) and C with shape (B*S, N, 1); the
    serial recurrence only needs a multiply-add and a reduce per step.
    """
    A_T = -jnp.exp(AlogT)                                              # (N, E)
    x_dbl = jnp.dot(u, WxpT, preferred_element_type=jnp.float32)       # (BS, R+2N)
    delta = _softplus(
        jnp.dot(x_dbl[:, :dt_rank], WdtT,
                preferred_element_type=jnp.float32) + bdt)             # (BS, E)
    Bc = x_dbl[:, dt_rank:dt_rank + d_state]                           # (BS, N)
    Cc = x_dbl[:, dt_rank + d_state:dt_rank + 2 * d_state]             # (BS, N)

    dA = jnp.exp(delta[:, None, :] * A_T[None, :, :])                  # (BS, N, E)
    dBu = Bc[:, :, None] * (delta * u)[:, None, :]                     # (BS, N, E)
    C_bc = Cc[:, :, None]                                              # (BS, N, 1)
    return dA, dBu, C_bc


def _fused_scan(pre_f, pre_b, u_f, u_b, Dv_f, Dv_b, *, batch, seq_len):
    """Forward + time-reversed recurrences for all batch elements, one loop.

    2*batch independent dependence chains are interleaved per unrolled step so
    the scheduler can overlap them.  Outputs are accumulated in values (single
    concatenate + store later); no per-step VMEM traffic.
    """
    dA_f, dBu_f, C_f = pre_f
    dA_b, dBu_b, C_b = pre_b
    n_state, e_dim = dA_f.shape[1], dA_f.shape[2]
    zero = jnp.zeros((n_state, e_dim), jnp.float32)

    st_f = [zero] * batch
    st_b = [zero] * batch
    rows_f = [None] * (batch * seq_len)
    rows_b = [None] * (batch * seq_len)

    # Static unroll (S is small here).  TODO(synk): lax.fori_loop for large S.
    for i in range(seq_len):
        for b in range(batch):
            rf = b * seq_len + i                    # forward time step i
            rb = b * seq_len + (seq_len - 1 - i)    # reverse time step
            st_f[b] = dA_f[rf] * st_f[b] + dBu_f[rf]
            st_b[b] = dA_b[rb] * st_b[b] + dBu_b[rb]
            rows_f[rf] = jnp.sum(st_f[b] * C_f[rf], axis=0, keepdims=True)  # (1, E)
            rows_b[rb] = jnp.sum(st_b[b] * C_b[rb], axis=0, keepdims=True)  # (1, E)

    y_f = jnp.concatenate(rows_f, axis=0) + u_f * Dv_f                 # (BS, E)
    y_b = jnp.concatenate(rows_b, axis=0) + u_b * Dv_b                 # (BS, E)
    return y_f, y_b


def _vim_mamba_kernel(x_ref, shift_ref, scale_ref, gate_ref,
                      g1, b1, g2, b2,
                      WzxT, bzx, WcT, bc, WfT, bf,
                      WxpT1, WdtT1, bdt1, AlogT1, D1,
                      WxpT2, WdtT2, bdt2, AlogT2, D2,
                      out_ref,
                      *, batch, seq_len, dt_rank, d_state, d_model, e_dim):
    xb = x_ref[...]                       # (B, S, D)
    shift = shift_ref[...]                # (B, 1, D)
    scale = scale_ref[...]                # (B, 1, D)
    gate = gate_ref[...]                  # (B, 1, D)

    x1 = _layernorm(xb, g1[...], b1[...])
    x1 = x1 * (1.0 + scale) + shift       # modulate
    skip = x1
    x2 = _layernorm(x1, g2[...], b2[...])

    # All B*S rows at once; fused [proj_z | proj_x] matmul.
    x2f = x2.reshape(batch * seq_len, d_model)                          # (BS, D)
    zx = jnp.dot(x2f, WzxT[...], preferred_element_type=jnp.float32) + bzx[...]  # (BS, 2E)
    mamba_z = zx[:, :e_dim]
    mamba_x = zx[:, e_dim:]

    # 1x1 conv1d == per-position matmul over channels; both convs fused.
    z_fb = jnp.dot(mamba_z, WcT[...], preferred_element_type=jnp.float32) + bc[...]  # (BS, 2E)
    z_fwd = z_fb[:, :e_dim]
    z_bwd = z_fb[:, e_dim:]

    act = _silu(mamba_x)

    pre_f = _ssm_precompute(z_fwd, WxpT1[...], WdtT1[...], bdt1[...], AlogT1[...],
                            dt_rank=dt_rank, d_state=d_state)
    pre_b = _ssm_precompute(z_bwd, WxpT2[...], WdtT2[...], bdt2[...], AlogT2[...],
                            dt_rank=dt_rank, d_state=d_state)
    # backward path: flip -> SSM -> flip == run the recurrence in reverse time
    # (delta/B/C are per-position), which is what _fused_scan does for pre_b.
    y_f, y_b = _fused_scan(pre_f, pre_b, z_fwd, z_bwd, D1[...], D2[...],
                           batch=batch, seq_len=seq_len)

    x_ssm = act * (y_f + y_b)                                           # (BS, E)
    x_ssm = jnp.dot(x_ssm, WfT[...], preferred_element_type=jnp.float32) + bf[...]  # (BS, D)
    x_ssm = x_ssm.reshape(batch, seq_len, d_model) + skip
    out_ref[...] = xb + gate * x_ssm


def vim_mamba_block(x, c, w, params, *, dt_rank, d_state):
    del w  # `w` is accepted but never used by the reference forward()
    b, s, d_model = x.shape
    e_dim = params["WzT"].shape[1]

    # adaLN in plain XLA (one (B, 2D) x (2D, 3D) matmul); pass shift/scale/gate.
    ada = _silu(c) @ params["WadaT"] + params["bada"]                   # (B, 3D)
    shift = ada[:, 0:d_model].reshape(b, 1, d_model)
    scale = ada[:, d_model:2 * d_model].reshape(b, 1, d_model)
    gate = ada[:, 2 * d_model:3 * d_model].reshape(b, 1, d_model)

    # Fuse matmuls that share an input (halves MXU pushes, widens N dim).
    WzxT = jnp.concatenate([params["WzT"], params["WxT"]], axis=1)      # (D, 2E)
    bzx = jnp.concatenate([params["bz"], params["bx"]], axis=1)         # (1, 2E)
    WcT = jnp.concatenate([params["Wc1T"], params["Wc2T"]], axis=1)     # (E, 2E)
    bc = jnp.concatenate([params["bc1"], params["bc2"]], axis=1)        # (1, 2E)

    weights = [
        params["g1"], params["b1"], params["g2"], params["b2"],
        WzxT, bzx, WcT, bc, params["WfT"], params["bf"],
        params["WxpT1"], params["WdtT1"], params["bdt1"], params["AlogT1"], params["D1"],
        params["WxpT2"], params["WdtT2"], params["bdt2"], params["AlogT2"], params["D2"],
    ]

    kernel = functools.partial(_vim_mamba_kernel, batch=b, seq_len=s,
                               dt_rank=dt_rank, d_state=d_state,
                               d_model=d_model, e_dim=e_dim)

    # Single gridless invocation: everything (weights + B*S rows of
    # activations) fits comfortably in VMEM at these sizes, so there is no
    # benefit to a sequential grid; all inputs/outputs are whole-array VMEM.
    return pl.pallas_call(
        kernel,
        out_shape=jax.ShapeDtypeStruct((b, s, d_model), jnp.float32),
    )(x, shift, scale, gate, *weights)


# ----------------------------------------------------------------------------
# Deterministic parameter init + pure-JAX reference
# ----------------------------------------------------------------------------
def init_params(key, d_model, e_dim, dt_rank, d_state):
    ks = jax.random.split(key, 20)

    def rnd(k, shape, scale=0.1):
        return scale * jax.random.normal(k, shape, jnp.float32)

    p = {
        "g1": jnp.ones((1, d_model), jnp.float32),
        "b1": jnp.zeros((1, d_model), jnp.float32),
        "g2": jnp.ones((1, d_model), jnp.float32),
        "b2": jnp.zeros((1, d_model), jnp.float32),
        "WadaT": rnd(ks[0], (2 * d_model, 3 * d_model)),
        "bada": jnp.zeros((1, 3 * d_model), jnp.float32),
        "WzT": rnd(ks[1], (d_model, e_dim)),
        "bz": rnd(ks[2], (1, e_dim)),
        "WxT": rnd(ks[3], (d_model, e_dim)),
        "bx": rnd(ks[4], (1, e_dim)),
        "WfT": rnd(ks[5], (e_dim, d_model)),
        "bf": rnd(ks[6], (1, d_model)),
        "Wc1T": rnd(ks[7], (e_dim, e_dim)),
        "bc1": rnd(ks[8], (1, e_dim)),
        "Wc2T": rnd(ks[9], (e_dim, e_dim)),
        "bc2": rnd(ks[10], (1, e_dim)),
    }
    # A_log[d, n] = log(n + 1)  (standard Mamba init); stored transposed (N, E).
    alogT = (jnp.log(jnp.arange(1, d_state + 1, dtype=jnp.float32))[:, None]
             * jnp.ones((1, e_dim), jnp.float32))
    for suffix, koff in (("1", 11), ("2", 14)):
        p["WxpT" + suffix] = rnd(ks[koff], (e_dim, dt_rank + 2 * d_state))
        p["WdtT" + suffix] = rnd(ks[koff + 1], (dt_rank, e_dim))
        p["bdt" + suffix] = rnd(ks[koff + 2], (1, e_dim))
        p["AlogT" + suffix] = alogT
        p["D" + suffix] = jnp.ones((1, e_dim), jnp.float32)
    return p


def reference_forward(x, c, p, *, dt_rank, d_state):
    ada = _silu(c) @ p["WadaT"] + p["bada"][0]
    shift, scale, gate = jnp.split(ada, 3, axis=1)
    x1 = _layernorm(x, p["g1"][0], p["b1"][0])
    x1 = x1 * (1.0 + scale[:, None, :]) + shift[:, None, :]
    skip = x1
    x2 = _layernorm(x1, p["g2"][0], p["b2"][0])
    mz = x2 @ p["WzT"] + p["bz"][0]
    mx = x2 @ p["WxT"] + p["bx"][0]
    z1 = mz @ p["Wc1T"] + p["bc1"][0]
    z2 = mz @ p["Wc2T"] + p["bc2"][0]

    def ssm(u, WxpT, WdtT, bdt, AlogT, Dv):
        A = -jnp.exp(AlogT.T)                                   # (E, N)
        xd = u @ WxpT
        delta = _softplus(xd[..., :dt_rank] @ WdtT + bdt[0])
        Bm = xd[..., dt_rank:dt_rank + d_state]
        Cm = xd[..., dt_rank + d_state:dt_rank + 2 * d_state]
        bsz, slen, e_dim = u.shape
        state = jnp.zeros((bsz, e_dim, d_state), jnp.float32)
        ys = []
        for t in range(slen):
            dA = jnp.exp(delta[:, t, :, None] * A[None])
            dBu = delta[:, t, :, None] * Bm[:, t, None, :] * u[:, t, :, None]
            state = dA * state + dBu
            ys.append(jnp.einsum("ben,bn->be", state, Cm[:, t]))
        return jnp.stack(ys, axis=1) + u * Dv[0]

    y1 = ssm(z1, p["WxpT1"], p["WdtT1"], p["bdt1"], p["AlogT1"], p["D1"])
    y2 = jnp.flip(
        ssm(jnp.flip(z2, axis=1), p["WxpT2"], p["WdtT2"], p["bdt2"],
            p["AlogT2"], p["D2"]), axis=1)
    act = _silu(mx)
    xs = act * y1 + act * y2
    xs = xs @ p["WfT"] + p["bf"][0] + skip
    return x + gate[:, None, :] * xs


if __name__ == "__main__":
    B, S = 2, 8
    D_DIM, E_DIM = 32, 16          # dim_inner == E_DIM (required by the SSM)
    DT_RANK, D_STATE = 4, 4

    key = jax.random.PRNGKey(0)
    kx, kc, kw, kp = jax.random.split(key, 4)
    x = jax.random.normal(kx, (B, S, D_DIM), jnp.float32)
    c = jax.random.normal(kc, (B, 2 * D_DIM), jnp.float32)
    w = jax.random.normal(kw, (B, S, D_DIM), jnp.float32)  # unused by forward()
    params = init_params(kp, D_DIM, E_DIM, DT_RANK, D_STATE)

    out = vim_mamba_block(x, c, w, params, dt_rank=DT_RANK, d_state=D_STATE)
    out = jax.block_until_ready(out)

    ref = reference_forward(x, c, params, dt_rank=DT_RANK, d_state=D_STATE)
    assert out.shape == (B, S, D_DIM)
    max_err = float(jnp.max(jnp.abs(out - ref)))
    assert jnp.allclose(out, ref, rtol=2e-2, atol=2e-2), max_err
    print("KERNEL_OK")
</pallas_src>

<mosaic_0001>
module attributes {stable_mosaic.version = 11 : i64} {
  func.func @_vim_mamba_kernel(%arg0: memref<2x8x32xf32, #tpu.memory_space<vmem>>, %arg1: memref<2x1x32xf32, #tpu.memory_space<vmem>>, %arg2: memref<2x1x32xf32, #tpu.memory_space<vmem>>, %arg3: memref<2x1x32xf32, #tpu.memory_space<vmem>>, %arg4: memref<1x32xf32, #tpu.memory_space<vmem>>, %arg5: memref<1x32xf32, #tpu.memory_space<vmem>>, %arg6: memref<1x32xf32, #tpu.memory_space<vmem>>, %arg7: memref<1x32xf32, #tpu.memory_space<vmem>>, %arg8: memref<32x32xf32, #tpu.memory_space<vmem>>, %arg9: memref<1x32xf32, #tpu.memory_space<vmem>>, %arg10: memref<16x32xf32, #tpu.memory_space<vmem>>, %arg11: memref<1x32xf32, #tpu.memory_space<vmem>>, %arg12: memref<16x32xf32, #tpu.memory_space<vmem>>, %arg13: memref<1x32xf32, #tpu.memory_space<vmem>>, %arg14: memref<16x12xf32, #tpu.memory_space<vmem>>, %arg15: memref<4x16xf32, #tpu.memory_space<vmem>>, %arg16: memref<1x16xf32, #tpu.memory_space<vmem>>, %arg17: memref<4x16xf32, #tpu.memory_space<vmem>>, %arg18: memref<1x16xf32, #tpu.memory_space<vmem>>, %arg19: memref<16x12xf32, #tpu.memory_space<vmem>>, %arg20: memref<4x16xf32, #tpu.memory_space<vmem>>, %arg21: memref<1x16xf32, #tpu.memory_space<vmem>>, %arg22: memref<4x16xf32, #tpu.memory_space<vmem>>, %arg23: memref<1x16xf32, #tpu.memory_space<vmem>>, %arg24: memref<2x8x32xf32, #tpu.memory_space<vmem>>) attributes {dimension_semantics = [], scalar_prefetch = 0 : i64, scratch_operands = 0 : i64, tpu.core_type = #tpu.core_type<tc>} {
    %c0 = arith.constant 0 : index
    %c0_0 = arith.constant 0 : index
    %c0_1 = arith.constant 0 : index
    %0 = vector.load %arg0[%c0, %c0_0, %c0_1] : memref<2x8x32xf32, #tpu.memory_space<vmem>>, vector<2x8x32xf32>
    %c0_2 = arith.constant 0 : index
    %c0_3 = arith.constant 0 : index
    %c0_4 = arith.constant 0 : index
    %1 = vector.load %arg1[%c0_2, %c0_3, %c0_4] : memref<2x1x32xf32, #tpu.memory_space<vmem>>, vector<2x1x32xf32>
    %c0_5 = arith.constant 0 : index
    %c0_6 = arith.constant 0 : index
    %c0_7 = arith.constant 0 : index
    %2 = vector.load %arg2[%c0_5, %c0_6, %c0_7] : memref<2x1x32xf32, #tpu.memory_space<vmem>>, vector<2x1x32xf32>
    %c0_8 = arith.constant 0 : index
    %c0_9 = arith.constant 0 : index
    %c0_10 = arith.constant 0 : index
    %3 = vector.load %arg3[%c0_8, %c0_9, %c0_10] : memref<2x1x32xf32, #tpu.memory_space<vmem>>, vector<2x1x32xf32>
    %c0_11 = arith.constant 0 : index
    %c0_12 = arith.constant 0 : index
    %4 = vector.load %arg4[%c0_11, %c0_12] : memref<1x32xf32, #tpu.memory_space<vmem>>, vector<1x32xf32>
    %c0_13 = arith.constant 0 : index
    %c0_14 = arith.constant 0 : index
    %5 = vector.load %arg5[%c0_13, %c0_14] : memref<1x32xf32, #tpu.memory_space<vmem>>, vector<1x32xf32>
    %cst = arith.constant dense<0.000000e+00> : vector<2x8xf32>
    %6 = vector.multi_reduction <add>, %0, %cst [2] : vector<2x8x32xf32> to vector<2x8xf32>
    %7 = vector.shape_cast %6 : vector<2x8xf32> to vector<2x8x1xf32>
    %cst_15 = arith.constant 3.200000e+01 : f32
    %8 = vector.broadcast %cst_15 : f32 to vector<2x8x1xf32>
    %9 = arith.divf %7, %8 : vector<2x8x1xf32>
    %10 = vector.broadcast %9 : vector<2x8x1xf32> to vector<2x8x32xf32>
    %11 = arith.subf %0, %10 : vector<2x8x32xf32>
    %12 = arith.mulf %11, %11 : vector<2x8x32xf32>
    %cst_16 = arith.constant dense<0.000000e+00> : vector<2x8xf32>
    %13 = vector.multi_reduction <add>, %12, %cst_16 [2] : vector<2x8x32xf32> to vector<2x8xf32>
    %14 = vector.shape_cast %13 : vector<2x8xf32> to vector<2x8x1xf32>
    %cst_17 = arith.constant 3.200000e+01 : f32
    %15 = vector.broadcast %cst_17 : f32 to vector<2x8x1xf32>
    %16 = arith.divf %14, %15 : vector<2x8x1xf32>
    %17 = vector.broadcast %9 : vector<2x8x1xf32> to vector<2x8x32xf32>
    %18 = arith.subf %0, %17 : vector<2x8x32xf32>
    %cst_18 = arith.constant 9.99999974E-6 : f32
    %19 = vector.broadcast %cst_18 : f32 to vector<2x8x1xf32>
    %20 = arith.addf %16, %19 : vector<2x8x1xf32>
    %21 = math.rsqrt %20 : vector<2x8x1xf32>
    %22 = vector.broadcast %21 : vector<2x8x1xf32> to vector<2x8x32xf32>
    %23 = arith.mulf %18, %22 : vector<2x8x32xf32>
    %24 = vector.shape_cast %4 : vector<1x32xf32> to vector<1x1x32xf32>
    %25 = vector.broadcast %24 : vector<1x1x32xf32> to vector<2x8x32xf32>
    %26 = arith.mulf %23, %25 : vector<2x8x32xf32>
    %27 = vector.shape_cast %5 : vector<1x32xf32> to vector<1x1x32xf32>
    %28 = vector.broadcast %27 : vector<1x1x32xf32> to vector<2x8x32xf32>
    %29 = arith.addf %26, %28 : vector<2x8x32xf32>
    %cst_19 = arith.constant 1.000000e+00 : f32
    %30 = vector.broadcast %cst_19 : f32 to vector<2x1x32xf32>
    %31 = arith.addf %30, %2 : vector<2x1x32xf32>
    %32 = vector.broadcast %31 : vector<2x1x32xf32> to vector<2x8x32xf32>
    %33 = arith.mulf %29, %32 : vector<2x8x32xf32>
    %34 = vector.broadcast %1 : vector<2x1x32xf32> to vector<2x8x32xf32>
    %35 = arith.addf %33, %34 : vector<2x8x32xf32>
    %c0_20 = arith.constant 0 : index
    %c0_21 = arith.constant 0 : index
    %36 = vector.load %arg6[%c0_20, %c0_21] : memref<1x32xf32, #tpu.memory_space<vmem>>, vector<1x32xf32>
    %c0_22 = arith.constant 0 : index
    %c0_23 = arith.constant 0 : index
    %37 = vector.load %arg7[%c0_22, %c0_23] : memref<1x32xf32, #tpu.memory_space<vmem>>, vector<1x32xf32>
    %cst_24 = arith.constant dense<0.000000e+00> : vector<2x8xf32>
    %38 = vector.multi_reduction <add>, %35, %cst_24 [2] : vector<2x8x32xf32> to vector<2x8xf32>
    %39 = vector.shape_cast %38 : vector<2x8xf32> to vector<2x8x1xf32>
    %cst_25 = arith.constant 3.200000e+01 : f32
    %40 = vector.broadcast %cst_25 : f32 to vector<2x8x1xf32>
    %41 = arith.divf %39, %40 : vector<2x8x1xf32>
    %42 = vector.broadcast %41 : vector<2x8x1xf32> to vector<2x8x32xf32>
    %43 = arith.subf %35, %42 : vector<2x8x32xf32>
    %44 = arith.mulf %43, %43 : vector<2x8x32xf32>
    %cst_26 = arith.constant dense<0.000000e+00> : vector<2x8xf32>
    %45 = vector.multi_reduction <add>, %44, %cst_26 [2] : vector<2x8x32xf32> to vector<2x8xf32>
    %46 = vector.shape_cast %45 : vector<2x8xf32> to vector<2x8x1xf32>
    %cst_27 = arith.constant 3.200000e+01 : f32
    %47 = vector.broadcast %cst_27 : f32 to vector<2x8x1xf32>
    %48 = arith.divf %46, %47 : vector<2x8x1xf32>
    %49 = vector.broadcast %41 : vector<2x8x1xf32> to vector<2x8x32xf32>
    %50 = arith.subf %35, %49 : vector<2x8x32xf32>
    %cst_28 = arith.constant 9.99999974E-6 : f32
    %51 = vector.broadcast %cst_28 : f32 to vector<2x8x1xf32>
    %52 = arith.addf %48, %51 : vector<2x8x1xf32>
    %53 = math.rsqrt %52 : vector<2x8x1xf32>
    %54 = vector.broadcast %53 : vector<2x8x1xf32> to vector<2x8x32xf32>
    %55 = arith.mulf %50, %54 : vector<2x8x32xf32>
    %56 = vector.shape_cast %36 : vector<1x32xf32> to vector<1x1x32xf32>
    %57 = vector.broadcast %56 : vector<1x1x32xf32> to vector<2x8x32xf32>
    %58 = arith.mulf %55, %57 : vector<2x8x32xf32>
    %59 = vector.shape_cast %37 : vector<1x32xf32> to vector<1x1x32xf32>
    %60 = vector.broadcast %59 : vector<1x1x32xf32> to vector<2x8x32xf32>
    %61 = arith.addf %58, %60 : vector<2x8x32xf32>
    %62 = vector.shape_cast %61 : vector<2x8x32xf32> to vector<16x32xf32>
    %c0_29 = arith.constant 0 : index
    %c0_30 = arith.constant 0 : index
    %63 = vector.load %arg8[%c0_29, %c0_30] : memref<32x32xf32, #tpu.memory_space<vmem>>, vector<32x32xf32>
    %cst_31 = arith.constant dense<0.000000e+00> : vector<16x32xf32>
    %64 = tpu.matmul %62, %63, %cst_31 {dimension_numbers = #tpu.dot_dimension_numbers<[1], [0], [0], [1], [0, 0, 1, 1], [], []>} : vector<16x32xf32>, vector<32x32xf32>, vector<16x32xf32> -> vector<16x32xf32>
    %c0_32 = arith.constant 0 : index
    %c0_33 = arith.constant 0 : index
    %65 = vector.load %arg9[%c0_32, %c0_33] : memref<1x32xf32, #tpu.memory_space<vmem>>, vector<1x32xf32>
    %66 = vector.broadcast %65 : vector<1x32xf32> to vector<16x32xf32>
    %67 = arith.addf %64, %66 : vector<16x32xf32>
    %68 = vector.extract_strided_slice %67 {offsets = [0, 0], sizes = [16, 16], strides = [1, 1]} : vector<16x32xf32> to vector<16x16xf32>
    %69 = vector.extract_strided_slice %67 {offsets = [0, 16], sizes = [16, 16], strides = [1, 1]} : vector<16x32xf32> to vector<16x16xf32>
    %c0_34 = arith.constant 0 : index
    %c0_35 = arith.constant 0 : index
    %70 = vector.load %arg10[%c0_34, %c0_35] : memref<16x32xf32, #tpu.memory_space<vmem>>, vector<16x32xf32>
    %cst_36 = arith.constant dense<0.000000e+00> : vector<16x32xf32>
    %71 = tpu.matmul %68, %70, %cst_36 {dimension_numbers = #tpu.dot_dimension_numbers<[1], [0], [0], [1], [0, 0, 1, 1], [], []>} : vector<16x16xf32>, vector<16x32xf32>, vector<16x32xf32> -> vector<16x32xf32>
    %c0_37 = arith.constant 0 : index
    %c0_38 = arith.constant 0 : index
    %72 = vector.load %arg11[%c0_37, %c0_38] : memref<1x32xf32, #tpu.memory_space<vmem>>, vector<1x32xf32>
    %73 = vector.broadcast %72 : vector<1x32xf32> to vector<16x32xf32>
    %74 = arith.addf %71, %73 : vector<16x32xf32>
    %75 = vector.extract_strided_slice %74 {offsets = [0, 0], sizes = [16, 16], strides = [1, 1]} : vector<16x32xf32> to vector<16x16xf32>
    %76 = vector.extract_strided_slice %74 {offsets = [0, 16], sizes = [16, 16], strides = [1, 1]} : vector<16x32xf32> to vector<16x16xf32>
    %cst_39 = arith.constant 0.000000e+00 : f32
    %77 = vector.broadcast %cst_39 : f32 to vector<16x16xf32>
    %78 = arith.subf %77, %69 : vector<16x16xf32>
    %79 = math.exp %78 : vector<16x16xf32>
    %cst_40 = arith.constant 1.000000e+00 : f32
    %80 = vector.broadcast %cst_40 : f32 to vector<16x16xf32>
    %81 = arith.addf %80, %79 : vector<16x16xf32>
    %cst_41 = arith.constant 1.000000e+00 : f32
    %82 = vector.broadcast %cst_41 : f32 to vector<16x16xf32>
    %83 = arith.divf %82, %81 : vector<16x16xf32>
    %84 = arith.mulf %69, %83 : vector<16x16xf32>
    %c0_42 = arith.constant 0 : index
    %c0_43 = arith.constant 0 : index
    %85 = vector.load %arg14[%c0_42, %c0_43] : memref<16x12xf32, #tpu.memory_space<vmem>>, vector<16x12xf32>
    %c0_44 = arith.constant 0 : index
    %c0_45 = arith.constant 0 : index
    %86 = vector.load %arg15[%c0_44, %c0_45] : memref<4x16xf32, #tpu.memory_space<vmem>>, vector<4x16xf32>
    %c0_46 = arith.constant 0 : index
    %c0_47 = arith.constant 0 : index
    %87 = vector.load %arg16[%c0_46, %c0_47] : memref<1x16xf32, #tpu.memory_space<vmem>>, vector<1x16xf32>
    %c0_48 = arith.constant 0 : index
    %c0_49 = arith.constant 0 : index
    %88 = vector.load %arg17[%c0_48, %c0_49] : memref<4x16xf32, #tpu.memory_space<vmem>>, vector<4x16xf32>
    %89 = math.exp %88 : vector<4x16xf32>
    %cst_50 = arith.constant 0.000000e+00 : f32
    %90 = vector.broadcast %cst_50 : f32 to vector<4x16xf32>
    %91 = arith.subf %90, %89 : vector<4x16xf32>
    %cst_51 = arith.constant dense<0.000000e+00> : vector<16x12xf32>
    %92 = tpu.matmul %75, %85, %cst_51 {dimension_numbers = #tpu.dot_dimension_numbers<[1], [0], [0], [1], [0, 0, 1, 1], [], []>} : vector<16x16xf32>, vector<16x12xf32>, vector<16x12xf32> -> vector<16x12xf32>
    %93 = vector.extract_strided_slice %92 {offsets = [0, 0], sizes = [16, 4], strides = [1, 1]} : vector<16x12xf32> to vector<16x4xf32>
    %cst_52 = arith.constant dense<0.000000e+00> : vector<16x16xf32>
    %94 = tpu.matmul %93, %86, %cst_52 {dimension_numbers = #tpu.dot_dimension_numbers<[1], [0], [0], [1], [0, 0, 1, 1], [], []>} : vector<16x4xf32>, vector<4x16xf32>, vector<16x16xf32> -> vector<16x16xf32>
    %95 = vector.broadcast %87 : vector<1x16xf32> to vector<16x16xf32>
    %96 = arith.addf %94, %95 : vector<16x16xf32>
    %cst_53 = arith.constant 0.000000e+00 : f32
    %97 = vector.broadcast %cst_53 : f32 to vector<16x16xf32>
    %98 = arith.maximumf %96, %97 : vector<16x16xf32>
    %99 = math.absf %96 : vector<16x16xf32>
    %cst_54 = arith.constant 0.000000e+00 : f32
    %100 = vector.broadcast %cst_54 : f32 to vector<16x16xf32>
    %101 = arith.subf %100, %99 : vector<16x16xf32>
    %102 = math.exp %101 : vector<16x16xf32>
    %cst_55 = arith.constant 1.000000e+00 : f32
    %103 = vector.broadcast %cst_55 : f32 to vector<16x16xf32>
    %104 = arith.addf %103, %102 : vector<16x16xf32>
    %105 = math.log %104 : vector<16x16xf32>
    %106 = arith.addf %98, %105 : vector<16x16xf32>
    %107 = vector.extract_strided_slice %92 {offsets = [0, 4], sizes = [16, 4], strides = [1, 1]} : vector<16x12xf32> to vector<16x4xf32>
    %108 = vector.extract_strided_slice %92 {offsets = [0, 8], sizes = [16, 4], strides = [1, 1]} : vector<16x12xf32> to vector<16x4xf32>
    %109 = vector.shape_cast %106 : vector<16x16xf32> to vector<16x1x16xf32>
    %110 = vector.shape_cast %91 : vector<4x16xf32> to vector<1x4x16xf32>
    %111 = vector.broadcast %109 : vector<16x1x16xf32> to vector<16x4x16xf32>
    %112 = vector.broadcast %110 : vector<1x4x16xf32> to vector<16x4x16xf32>
    %113 = arith.mulf %111, %112 : vector<16x4x16xf32>
    %114 = math.exp %113 : vector<16x4x16xf32>
    %115 = vector.shape_cast %107 : vector<16x4xf32> to vector<16x4x1xf32>
    %116 = arith.mulf %106, %75 : vector<16x16xf32>
    %117 = vector.shape_cast %116 : vector<16x16xf32> to vector<16x1x16xf32>
    %118 = vector.broadcast %115 : vector<16x4x1xf32> to vector<16x4x16xf32>
    %119 = vector.broadcast %117 : vector<16x1x16xf32> to vector<16x4x16xf32>
    %120 = arith.mulf %118, %119 : vector<16x4x16xf32>
    %121 = vector.shape_cast %108 : vector<16x4xf32> to vector<16x4x1xf32>
    %c0_56 = arith.constant 0 : index
    %c0_57 = arith.constant 0 : index
    %122 = vector.load %arg19[%c0_56, %c0_57] : memref<16x12xf32, #tpu.memory_space<vmem>>, vector<16x12xf32>
    %c0_58 = arith.constant 0 : index
    %c0_59 = arith.constant 0 : index
    %123 = vector.load %arg20[%c0_58, %c0_59] : memref<4x16xf32, #tpu.memory_space<vmem>>, vector<4x16xf32>
    %c0_60 = arith.constant 0 : index
    %c0_61 = arith.constant 0 : index
    %124 = vector.load %arg21[%c0_60, %c0_61] : memref<1x16xf32, #tpu.memory_space<vmem>>, vector<1x16xf32>
    %c0_62 = arith.constant 0 : index
    %c0_63 = arith.constant 0 : index
    %125 = vector.load %arg22[%c0_62, %c0_63] : memref<4x16xf32, #tpu.memory_space<vmem>>, vector<4x16xf32>
    %126 = math.exp %125 : vector<4x16xf32>
    %cst_64 = arith.constant 0.000000e+00 : f32
    %127 = vector.broadcast %cst_64 : f32 to vector<4x16xf32>
    %128 = arith.subf %127, %126 : vector<4x16xf32>
    %cst_65 = arith.constant dense<0.000000e+00> : vector<16x12xf32>
    %129 = tpu.matmul %76, %122, %cst_65 {dimension_numbers = #tpu.dot_dimension_numbers<[1], [0], [0], [1], [0, 0, 1, 1], [], []>} : vector<16x16xf32>, vector<16x12xf32>, vector<16x12xf32> -> vector<16x12xf32>
    %130 = vector.extract_strided_slice %129 {offsets = [0, 0], sizes = [16, 4], strides = [1, 1]} : vector<16x12xf32> to vector<16x4xf32>
    %cst_66 = arith.constant dense<0.000000e+00> : vector<16x16xf32>
    %131 = tpu.matmul %130, %123, %cst_66 {dimension_numbers = #tpu.dot_dimension_numbers<[1], [0], [0], [1], [0, 0, 1, 1], [], []>} : vector<16x4xf32>, vector<4x16xf32>, vector<16x16xf32> -> vector<16x16xf32>
    %132 = vector.broadcast %124 : vector<1x16xf32> to vector<16x16xf32>
    %133 = arith.addf %131, %132 : vector<16x16xf32>
    %cst_67 = arith.constant 0.000000e+00 : f32
    %134 = vector.broadcast %cst_67 : f32 to vector<16x16xf32>
    %135 = arith.maximumf %133, %134 : vector<16x16xf32>
    %136 = math.absf %133 : vector<16x16xf32>
    %cst_68 = arith.constant 0.000000e+00 : f32
    %137 = vector.broadcast %cst_68 : f32 to vector<16x16xf32>
    %138 = arith.subf %137, %136 : vector<16x16xf32>
    %139 = math.exp %138 : vector<16x16xf32>
    %cst_69 = arith.constant 1.000000e+00 : f32
    %140 = vector.broadcast %cst_69 : f32 to vector<16x16xf32>
    %141 = arith.addf %140, %139 : vector<16x16xf32>
    %142 = math.log %141 : vector<16x16xf32>
    %143 = arith.addf %135, %142 : vector<16x16xf32>
    %144 = vector.extract_strided_slice %129 {offsets = [0, 4], sizes = [16, 4], strides = [1, 1]} : vector<16x12xf32> to vector<16x4xf32>
    %145 = vector.extract_strided_slice %129 {offsets = [0, 8], sizes = [16, 4], strides = [1, 1]} : vector<16x12xf32> to vector<16x4xf32>
    %146 = vector.shape_cast %143 : vector<16x16xf32> to vector<16x1x16xf32>
    %147 = vector.shape_cast %128 : vector<4x16xf32> to vector<1x4x16xf32>
    %148 = vector.broadcast %146 : vector<16x1x16xf32> to vector<16x4x16xf32>
    %149 = vector.broadcast %147 : vector<1x4x16xf32> to vector<16x4x16xf32>
    %150 = arith.mulf %148, %149 : vector<16x4x16xf32>
    %151 = math.exp %150 : vector<16x4x16xf32>
    %152 = vector.shape_cast %144 : vector<16x4xf32> to vector<16x4x1xf32>
    %153 = arith.mulf %143, %76 : vector<16x16xf32>
    %154 = vector.shape_cast %153 : vector<16x16xf32> to vector<16x1x16xf32>
    %155 = vector.broadcast %152 : vector<16x4x1xf32> to vector<16x4x16xf32>
    %156 = vector.broadcast %154 : vector<16x1x16xf32> to vector<16x4x16xf32>
    %157 = arith.mulf %155, %156 : vector<16x4x16xf32>
    %158 = vector.shape_cast %145 : vector<16x4xf32> to vector<16x4x1xf32>
    %c0_70 = arith.constant 0 : index
    %c0_71 = arith.constant 0 : index
    %159 = vector.load %arg18[%c0_70, %c0_71] : memref<1x16xf32, #tpu.memory_space<vmem>>, vector<1x16xf32>
    %c0_72 = arith.constant 0 : index
    %c0_73 = arith.constant 0 : index
    %160 = vector.load %arg23[%c0_72, %c0_73] : memref<1x16xf32, #tpu.memory_space<vmem>>, vector<1x16xf32>
    %cst_74 = arith.constant 0.000000e+00 : f32
    %161 = vector.broadcast %cst_74 : f32 to vector<4x16xf32>
    %162 = vector.extract_strided_slice %114 {offsets = [0, 0, 0], sizes = [1, 4, 16], strides = [1, 1, 1]} : vector<16x4x16xf32> to vector<1x4x16xf32>
    %163 = vector.shape_cast %162 : vector<1x4x16xf32> to vector<4x16xf32>
    %164 = arith.mulf %163, %161 : vector<4x16xf32>
    %165 = vector.extract_strided_slice %120 {offsets = [0, 0, 0], sizes = [1, 4, 16], strides = [1, 1, 1]} : vector<16x4x16xf32> to vector<1x4x16xf32>
    %166 = vector.shape_cast %165 : vector<1x4x16xf32> to vector<4x16xf32>
    %167 = arith.addf %164, %166 : vector<4x16xf32>
    %168 = vector.extract_strided_slice %151 {offsets = [7, 0, 0], sizes = [1, 4, 16], strides = [1, 1, 1]} : vector<16x4x16xf32> to vector<1x4x16xf32>
    %169 = vector.shape_cast %168 : vector<1x4x16xf32> to vector<4x16xf32>
    %170 = arith.mulf %169, %161 : vector<4x16xf32>
    %171 = vector.extract_strided_slice %157 {offsets = [7, 0, 0], sizes = [1, 4, 16], strides = [1, 1, 1]} : vector<16x4x16xf32> to vector<1x4x16xf32>
    %172 = vector.shape_cast %171 : vector<1x4x16xf32> to vector<4x16xf32>
    %173 = arith.addf %170, %172 : vector<4x16xf32>
    %174 = vector.extract_strided_slice %121 {offsets = [0, 0, 0], sizes = [1, 4, 1], strides = [1, 1, 1]} : vector<16x4x1xf32> to vector<1x4x1xf32>
    %175 = vector.shape_cast %174 : vector<1x4x1xf32> to vector<4x1xf32>
    %176 = vector.broadcast %175 : vector<4x1xf32> to vector<4x16xf32>
    %177 = arith.mulf %167, %176 : vector<4x16xf32>
    %cst_75 = arith.constant dense<0.000000e+00> : vector<16xf32>
    %178 = vector.multi_reduction <add>, %177, %cst_75 [0] : vector<4x16xf32> to vector<16xf32>
    %179 = vector.shape_cast %178 : vector<16xf32> to vector<1x16xf32>
    %180 = vector.extract_strided_slice %158 {offsets = [7, 0, 0], sizes = [1, 4, 1], strides = [1, 1, 1]} : vector<16x4x1xf32> to vector<1x4x1xf32>
    %181 = vector.shape_cast %180 : vector<1x4x1xf32> to vector<4x1xf32>
    %182 = vector.broadcast %181 : vector<4x1xf32> to vector<4x16xf32>
    %183 = arith.mulf %173, %182 : vector<4x16xf32>
    %cst_76 = arith.constant dense<0.000000e+00> : vector<16xf32>
    %184 = vector.multi_reduction <add>, %183, %cst_76 [0] : vector<4x16xf32> to vector<16xf32>
    %185 = vector.shape_cast %184 : vector<16xf32> to vector<1x16xf32>
    %186 = vector.extract_strided_slice %114 {offsets = [8, 0, 0], sizes = [1, 4, 16], strides = [1, 1, 1]} : vector<16x4x16xf32> to vector<1x4x16xf32>
    %187 = vector.shape_cast %186 : vector<1x4x16xf32> to vector<4x16xf32>
    %188 = arith.mulf %187, %161 : vector<4x16xf32>
    %189 = vector.extract_strided_slice %120 {offsets = [8, 0, 0], sizes = [1, 4, 16], strides = [1, 1, 1]} : vector<16x4x16xf32> to vector<1x4x16xf32>
    %190 = vector.shape_cast %189 : vector<1x4x16xf32> to vector<4x16xf32>
    %191 = arith.addf %188, %190 : vector<4x16xf32>
    %192 = vector.extract_strided_slice %151 {offsets = [15, 0, 0], sizes = [1, 4, 16], strides = [1, 1, 1]} : vector<16x4x16xf32> to vector<1x4x16xf32>
    %193 = vector.shape_cast %192 : vector<1x4x16xf32> to vector<4x16xf32>
    %194 = arith.mulf %193, %161 : vector<4x16xf32>
    %195 = vector.extract_strided_slice %157 {offsets = [15, 0, 0], sizes = [1, 4, 16], strides = [1, 1, 1]} : vector<16x4x16xf32> to vector<1x4x16xf32>
    %196 = vector.shape_cast %195 : vector<1x4x16xf32> to vector<4x16xf32>
    %197 = arith.addf %194, %196 : vector<4x16xf32>
    %198 = vector.extract_strided_slice %121 {offsets = [8, 0, 0], sizes = [1, 4, 1], strides = [1, 1, 1]} : vector<16x4x1xf32> to vector<1x4x1xf32>
    %199 = vector.shape_cast %198 : vector<1x4x1xf32> to vector<4x1xf32>
    %200 = vector.broadcast %199 : vector<4x1xf32> to vector<4x16xf32>
    %201 = arith.mulf %191, %200 : vector<4x16xf32>
    %cst_77 = arith.constant dense<0.000000e+00> : vector<16xf32>
    %202 = vector.multi_reduction <add>, %201, %cst_77 [0] : vector<4x16xf32> to vector<16xf32>
    %203 = vector.shape_cast %202 : vector<16xf32> to vector<1x16xf32>
    %204 = vector.extract_strided_slice %158 {offsets = [15, 0, 0], sizes = [1, 4, 1], strides = [1, 1, 1]} : vector<16x4x1xf32> to vector<1x4x1xf32>
    %205 = vector.shape_cast %204 : vector<1x4x1xf32> to vector<4x1xf32>
    %206 = vector.broadcast %205 : vector<4x1xf32> to vector<4x16xf32>
    %207 = arith.mulf %197, %206 : vector<4x16xf32>
    %cst_78 = arith.constant dense<0.000000e+00> : vector<16xf32>
    %208 = vector.multi_reduction <add>, %207, %cst_78 [0] : vector<4x16xf32> to vector<16xf32>
    %209 = vector.shape_cast %208 : vector<16xf32> to vector<1x16xf32>
    %210 = vector.extract_strided_slice %114 {offsets = [1, 0, 0], sizes = [1, 4, 16], strides = [1, 1, 1]} : vector<16x4x16xf32> to vector<1x4x16xf32>
    %211 = vector.shape_cast %210 : vector<1x4x16xf32> to vector<4x16xf32>
    %212 = arith.mulf %211, %167 : vector<4x16xf32>
    %213 = vector.extract_strided_slice %120 {offsets = [1, 0, 0], sizes = [1, 4, 16], strides = [1, 1, 1]} : vector<16x4x16xf32> to vector<1x4x16xf32>
    %214 = vector.shape_cast %213 : vector<1x4x16xf32> to vector<4x16xf32>
    %215 = arith.addf %212, %214 : vector<4x16xf32>
    %216 = vector.extract_strided_slice %151 {offsets = [6, 0, 0], sizes = [1, 4, 16], strides = [1, 1, 1]} : vector<16x4x16xf32> to vector<1x4x16xf32>
    %217 = vector.shape_cast %216 : vector<1x4x16xf32> to vector<4x16xf32>
    %218 = arith.mulf %217, %173 : vector<4x16xf32>
    %219 = vector.extract_strided_slice %157 {offsets = [6, 0, 0], sizes = [1, 4, 16], strides = [1, 1, 1]} : vector<16x4x16xf32> to vector<1x4x16xf32>
    %220 = vector.shape_cast %219 : vector<1x4x16xf32> to vector<4x16xf32>
    %221 = arith.addf %218, %220 : vector<4x16xf32>
    %222 = vector.extract_strided_slice %121 {offsets = [1, 0, 0], sizes = [1, 4, 1], strides = [1, 1, 1]} : vector<16x4x1xf32> to vector<1x4x1xf32>
    %223 = vector.shape_cast %222 : vector<1x4x1xf32> to vector<4x1xf32>
    %224 = vector.broadcast %223 : vector<4x1xf32> to vector<4x16xf32>
    %225 = arith.mulf %215, %224 : vector<4x16xf32>
    %cst_79 = arith.constant dense<0.000000e+00> : vector<16xf32>
    %226 = vector.multi_reduction <add>, %225, %cst_79 [0] : vector<4x16xf32> to vector<16xf32>
    %227 = vector.shape_cast %226 : vector<16xf32> to vector<1x16xf32>
    %228 = vector.extract_strided_slice %158 {offsets = [6, 0, 0], sizes = [1, 4, 1], strides = [1, 1, 1]} : vector<16x4x1xf32> to vector<1x4x1xf32>
    %229 = vector.shape_cast %228 : vector<1x4x1xf32> to vector<4x1xf32>
    %230 = vector.broadcast %229 : vector<4x1xf32> to vector<4x16xf32>
    %231 = arith.mulf %221, %230 : vector<4x16xf32>
    %cst_80 = arith.constant dense<0.000000e+00> : vector<16xf32>
    %232 = vector.multi_reduction <add>, %231, %cst_80 [0] : vector<4x16xf32> to vector<16xf32>
    %233 = vector.shape_cast %232 : vector<16xf32> to vector<1x16xf32>
    %234 = vector.extract_strided_slice %114 {offsets = [9, 0, 0], sizes = [1, 4, 16], strides = [1, 1, 1]} : vector<16x4x16xf32> to vector<1x4x16xf32>
    %235 = vector.shape_cast %234 : vector<1x4x16xf32> to vector<4x16xf32>
    %236 = arith.mulf %235, %191 : vector<4x16xf32>
    %237 = vector.extract_strided_slice %120 {offsets = [9, 0, 0], sizes = [1, 4, 16], strides = [1, 1, 1]} : vector<16x4x16xf32> to vector<1x4x16xf32>
    %238 = vector.shape_cast %237 : vector<1x4x16xf32> to vector<4x16xf32>
    %239 = arith.addf %236, %238 : vector<4x16xf32>
    %240 = vector.extract_strided_slice %151 {offsets = [14, 0, 0], sizes = [1, 4, 16], strides = [1, 1, 1]} : vector<16x4x16xf32> to vector<1x4x16xf32>
    %241 = vector.shape_cast %240 : vector<1x4x16xf32> to vector<4x16xf32>
    %242 = arith.mulf %241, %197 : vector<4x16xf32>
    %243 = vector.extract_strided_slice %157 {offsets = [14, 0, 0], sizes = [1, 4, 16], strides = [1, 1, 1]} : vector<16x4x16xf32> to vector<1x4x16xf32>
    %244 = vector.shape_cast %243 : vector<1x4x16xf32> to vector<4x16xf32>
    %245 = arith.addf %242, %244 : vector<4x16xf32>
    %246 = vector.extract_strided_slice %121 {offsets = [9, 0, 0], sizes = [1, 4, 1], strides = [1, 1, 1]} : vector<16x4x1xf32> to vector<1x4x1xf32>
    %247 = vector.shape_cast %246 : vector<1x4x1xf32> to vector<4x1xf32>
    %248 = vector.broadcast %247 : vector<4x1xf32> to vector<4x16xf32>
    %249 = arith.mulf %239, %248 : vector<4x16xf32>
    %cst_81 = arith.constant dense<0.000000e+00> : vector<16xf32>
    %250 = vector.multi_reduction <add>, %249, %cst_81 [0] : vector<4x16xf32> to vector<16xf32>
    %251 = vector.shape_cast %250 : vector<16xf32> to vector<1x16xf32>
    %252 = vector.extract_strided_slice %158 {offsets = [14, 0, 0], sizes = [1, 4, 1], strides = [1, 1, 1]} : vector<16x4x1xf32> to vector<1x4x1xf32>
    %253 = vector.shape_cast %252 : vector<1x4x1xf32> to vector<4x1xf32>
    %254 = vector.broadcast %253 : vector<4x1xf32> to vector<4x16xf32>
    %255 = arith.mulf %245, %254 : vector<4x16xf32>
    %cst_82 = arith.constant dense<0.000000e+00> : vector<16xf32>
    %256 = vector.multi_reduction <add>, %255, %cst_82 [0] : vector<4x16xf32> to vector<16xf32>
    %257 = vector.shape_cast %256 : vector<16xf32> to vector<1x16xf32>
    %258 = vector.extract_strided_slice %114 {offsets = [2, 0, 0], sizes = [1, 4, 16], strides = [1, 1, 1]} : vector<16x4x16xf32> to vector<1x4x16xf32>
    %259 = vector.shape_cast %258 : vector<1x4x16xf32> to vector<4x16xf32>
    %260 = arith.mulf %259, %215 : vector<4x16xf32>
    %261 = vector.extract_strided_slice %120 {offsets = [2, 0, 0], sizes = [1, 4, 16], strides = [1, 1, 1]} : vector<16x4x16xf32> to vector<1x4x16xf32>
    %262 = vector.shape_cast %261 : vector<1x4x16xf32> to vector<4x16xf32>
    %263 = arith.addf %260, %262 : vector<4x16xf32>
    %264 = vector.extract_strided_slice %151 {offsets = [5, 0, 0], sizes = [1, 4, 16], strides = [1, 1, 1]} : vector<16x4x16xf32> to vector<1x4x16xf32>
    %265 = vector.shape_cast %264 : vector<1x4x16xf32> to vector<4x16xf32>
    %266 = arith.mulf %265, %221 : vector<4x16xf32>
    %267 = vector.extract_strided_slice %157 {offsets = [5, 0, 0], sizes = [1, 4, 16], strides = [1, 1, 1]} : vector<16x4x16xf32> to vector<1x4x16xf32>
    %268 = vector.shape_cast %267 : vector<1x4x16xf32> to vector<4x16xf32>
    %269 = arith.addf %266, %268 : vector<4x16xf32>
    %270 = vector.extract_strided_slice %121 {offsets = [2, 0, 0], sizes = [1, 4, 1], strides = [1, 1, 1]} : vector<16x4x1xf32> to vector<1x4x1xf32>
    %271 = vector.shape_cast %270 : vector<1x4x1xf32> to vector<4x1xf32>
    %272 = vector.broadcast %271 : vector<4x1xf32> to vector<4x16xf32>
    %273 = arith.mulf %263, %272 : vector<4x16xf32>
    %cst_83 = arith.constant dense<0.000000e+00> : vector<16xf32>
    %274 = vector.multi_reduction <add>, %273, %cst_83 [0] : vector<4x16xf32> to vector<16xf32>
    %275 = vector.shape_cast %274 : vector<16xf32> to vector<1x16xf32>
    %276 = vector.extract_strided_slice %158 {offsets = [5, 0, 0], sizes = [1, 4, 1], strides = [1, 1, 1]} : vector<16x4x1xf32> to vector<1x4x1xf32>
    %277 = vector.shape_cast %276 : vector<1x4x1xf32> to vector<4x1xf32>
    %278 = vector.broadcast %277 : vector<4x1xf32> to vector<4x16xf32>
    %279 = arith.mulf %269, %278 : vector<4x16xf32>
    %cst_84 = arith.constant dense<0.000000e+00> : vector<16xf32>
    %280 = vector.multi_reduction <add>, %279, %cst_84 [0] : vector<4x16xf32> to vector<16xf32>
    %281 = vector.shape_cast %280 : vector<16xf32> to vector<1x16xf32>
    %282 = vector.extract_strided_slice %114 {offsets = [10, 0, 0], sizes = [1, 4, 16], strides = [1, 1, 1]} : vector<16x4x16xf32> to vector<1x4x16xf32>
    %283 = vector.shape_cast %282 : vector<1x4x16xf32> to vector<4x16xf32>
    %284 = arith.mulf %283, %239 : vector<4x16xf32>
    %285 = vector.extract_strided_slice %120 {offsets = [10, 0, 0], sizes = [1, 4, 16], strides = [1, 1, 1]} : vector<16x4x16xf32> to vector<1x4x16xf32>
    %286 = vector.shape_cast %285 : vector<1x4x16xf32> to vector<4x16xf32>
    %287 = arith.addf %284, %286 : vector<4x16xf32>
    %288 = vector.extract_strided_slice %151 {offsets = [13, 0, 0], sizes = [1, 4, 16], strides = [1, 1, 1]} : vector<16x4x16xf32> to vector<1x4x16xf32>
    %289 = vector.shape_cast %288 : vector<1x4x16xf32> to vector<4x16xf32>
    %290 = arith.mulf %289, %245 : vector<4x16xf32>
    %291 = vector.extract_strided_slice %157 {offsets = [13, 0, 0], sizes = [1, 4, 16], strides = [1, 1, 1]} : vector<16x4x16xf32> to vector<1x4x16xf32>
    %292 = vector.shape_cast %291 : vector<1x4x16xf32> to vector<4x16xf32>
    %293 = arith.addf %290, %292 : vector<4x16xf32>
    %294 = vector.extract_strided_slice %121 {offsets = [10, 0, 0], sizes = [1, 4, 1], strides = [1, 1, 1]} : vector<16x4x1xf32> to vector<1x4x1xf32>
    %295 = vector.shape_cast %294 : vector<1x4x1xf32> to vector<4x1xf32>
    %296 = vector.broadcast %295 : vector<4x1xf32> to vector<4x16xf32>
    %297 = arith.mulf %287, %296 : vector<4x16xf32>
    %cst_85 = arith.constant dense<0.000000e+00> : vector<16xf32>
    %298 = vector.multi_reduction <add>, %297, %cst_85 [0] : vector<4x16xf32> to vector<16xf32>
    %299 = vector.shape_cast %298 : vector<16xf32> to vector<1x16xf32>
    %300 = vector.extract_strided_slice %158 {offsets = [13, 0, 0], sizes = [1, 4, 1], strides = [1, 1, 1]} : vector<16x4x1xf32> to vector<1x4x1xf32>
    %301 = vector.shape_cast %300 : vector<1x4x1xf32> to vector<4x1xf32>
    %302 = vector.broadcast %301 : vector<4x1xf32> to vector<4x16xf32>
    %303 = arith.mulf %293, %302 : vector<4x16xf32>
    %cst_86 = arith.constant dense<0.000000e+00> : vector<16xf32>
    %304 = vector.multi_reduction <add>, %303, %cst_86 [0] : vector<4x16xf32> to vector<16xf32>
    %305 = vector.shape_cast %304 : vector<16xf32> to vector<1x16xf32>
    %306 = vector.extract_strided_slice %114 {offsets = [3, 0, 0], sizes = [1, 4, 16], strides = [1, 1, 1]} : vector<16x4x16xf32> to vector<1x4x16xf32>
    %307 = vector.shape_cast %306 : vector<1x4x16xf32> to vector<4x16xf32>
    %308 = arith.mulf %307, %263 : vector<4x16xf32>
    %309 = vector.extract_strided_slice %120 {offsets = [3, 0, 0], sizes = [1, 4, 16], strides = [1, 1, 1]} : vector<16x4x16xf32> to vector<1x4x16xf32>
    %310 = vector.shape_cast %309 : vector<1x4x16xf32> to vector<4x16xf32>
    %311 = arith.addf %308, %310 : vector<4x16xf32>
    %312 = vector.extract_strided_slice %151 {offsets = [4, 0, 0], sizes = [1, 4, 16], strides = [1, 1, 1]} : vector<16x4x16xf32> to vector<1x4x16xf32>
    %313 = vector.shape_cast %312 : vector<1x4x16xf32> to vector<4x16xf32>
    %314 = arith.mulf %313, %269 : vector<4x16xf32>
    %315 = vector.extract_strided_slice %157 {offsets = [4, 0, 0], sizes = [1, 4, 16], strides = [1, 1, 1]} : vector<16x4x16xf32> to vector<1x4x16xf32>
    %316 = vector.shape_cast %315 : vector<1x4x16xf32> to vector<4x16xf32>
    %317 = arith.addf %314, %316 : vector<4x16xf32>
    %318 = vector.extract_strided_slice %121 {offsets = [3, 0, 0], sizes = [1, 4, 1], strides = [1, 1, 1]} : vector<16x4x1xf32> to vector<1x4x1xf32>
    %319 = vector.shape_cast %318 : vector<1x4x1xf32> to vector<4x1xf32>
    %320 = vector.broadcast %319 : vector<4x1xf32> to vector<4x16xf32>
    %321 = arith.mulf %311, %320 : vector<4x16xf32>
    %cst_87 = arith.constant dense<0.000000e+00> : vector<16xf32>
    %322 = vector.multi_reduction <add>, %321, %cst_87 [0] : vector<4x16xf32> to vector<16xf32>
    %323 = vector.shape_cast %322 : vector<16xf32> to vector<1x16xf32>
    %324 = vector.extract_strided_slice %158 {offsets = [4, 0, 0], sizes = [1, 4, 1], strides = [1, 1, 1]} : vector<16x4x1xf32> to vector<1x4x1xf32>
    %325 = vector.shape_cast %324 : vector<1x4x1xf32> to vector<4x1xf32>
    %326 = vector.broadcast %325 : vector<4x1xf32> to vector<4x16xf32>
    %327 = arith.mulf %317, %326 : vector<4x16xf32>
    %cst_88 = arith.constant dense<0.000000e+00> : vector<16xf32>
    %328 = vector.multi_reduction <add>, %327, %cst_88 [0] : vector<4x16xf32> to vector<16xf32>
    %329 = vector.shape_cast %328 : vector<16xf32> to vector<1x16xf32>
    %330 = vector.extract_strided_slice %114 {offsets = [11, 0, 0], sizes = [1, 4, 16], strides = [1, 1, 1]} : vector<16x4x16xf32> to vector<1x4x16xf32>
    %331 = vector.shape_cast %330 : vector<1x4x16xf32> to vector<4x16xf32>
    %332 = arith.mulf %331, %287 : vector<4x16xf32>
    %333 = vector.extract_strided_slice %120 {offsets = [11, 0, 0], sizes = [1, 4, 16], strides = [1, 1, 1]} : vector<16x4x16xf32> to vector<1x4x16xf32>
    %334 = vector.shape_cast %333 : vector<1x4x16xf32> to vector<4x16xf32>
    %335 = arith.addf %332, %334 : vector<4x16xf32>
    %336 = vector.extract_strided_slice %151 {offsets = [12, 0, 0], sizes = [1, 4, 16], strides = [1, 1, 1]} : vector<16x4x16xf32> to vector<1x4x16xf32>
    %337 = vector.shape_cast %336 : vector<1x4x16xf32> to vector<4x16xf32>
    %338 = arith.mulf %337, %293 : vector<4x16xf32>
    %339 = vector.extract_strided_slice %157 {offsets = [12, 0, 0], sizes = [1, 4, 16], strides = [1, 1, 1]} : vector<16x4x16xf32> to vector<1x4x16xf32>
    %340 = vector.shape_cast %339 : vector<1x4x16xf32> to vector<4x16xf32>
    %341 = arith.addf %338, %340 : vector<4x16xf32>
    %342 = vector.extract_strided_slice %121 {offsets = [11, 0, 0], sizes = [1, 4, 1], strides = [1, 1, 1]} : vector<16x4x1xf32> to vector<1x4x1xf32>
    %343 = vector.shape_cast %342 : vector<1x4x1xf32> to vector<4x1xf32>
    %344 = vector.broadcast %343 : vector<4x1xf32> to vector<4x16xf32>
    %345 = arith.mulf %335, %344 : vector<4x16xf32>
    %cst_89 = arith.constant dense<0.000000e+00> : vector<16xf32>
    %346 = vector.multi_reduction <add>, %345, %cst_89 [0] : vector<4x16xf32> to vector<16xf32>
    %347 = vector.shape_cast %346 : vector<16xf32> to vector<1x16xf32>
    %348 = vector.extract_strided_slice %158 {offsets = [12, 0, 0], sizes = [1, 4, 1], strides = [1, 1, 1]} : vector<16x4x1xf32> to vector<1x4x1xf32>
    %349 = vector.shape_cast %348 : vector<1x4x1xf32> to vector<4x1xf32>
    %350 = vector.broadcast %349 : vector<4x1xf32> to vector<4x16xf32>
    %351 = arith.mulf %341, %350 : vector<4x16xf32>
    %cst_90 = arith.constant dense<0.000000e+00> : vector<16xf32>
    %352 = vector.multi_reduction <add>, %351, %cst_90 [0] : vector<4x16xf32> to vector<16xf32>
    %353 = vector.shape_cast %352 : vector<16xf32> to vector<1x16xf32>
    %354 = vector.extract_strided_slice %114 {offsets = [4, 0, 0], sizes = [1, 4, 16], strides = [1, 1, 1]} : vector<16x4x16xf32> to vector<1x4x16xf32>
    %355 = vector.shape_cast %354 : vector<1x4x16xf32> to vector<4x16xf32>
    %356 = arith.mulf %355, %311 : vector<4x16xf32>
    %357 = vector.extract_strided_slice %120 {offsets = [4, 0, 0], sizes = [1, 4, 16], strides = [1, 1, 1]} : vector<16x4x16xf32> to vector<1x4x16xf32>
    %358 = vector.shape_cast %357 : vector<1x4x16xf32> to vector<4x16xf32>
    %359 = arith.addf %356, %358 : vector<4x16xf32>
    %360 = vector.extract_strided_slice %151 {offsets = [3, 0, 0], sizes = [1, 4, 16], strides = [1, 1, 1]} : vector<16x4x16xf32> to vector<1x4x16xf32>
    %361 = vector.shape_cast %360 : vector<1x4x16xf32> to vector<4x16xf32>
    %362 = arith.mulf %361, %317 : vector<4x16xf32>
    %363 = vector.extract_strided_slice %157 {offsets = [3, 0, 0], sizes = [1, 4, 16], strides = [1, 1, 1]} : vector<16x4x16xf32> to vector<1x4x16xf32>
    %364 = vector.shape_cast %363 : vector<1x4x16xf32> to vector<4x16xf32>
    %365 = arith.addf %362, %364 : vector<4x16xf32>
    %366 = vector.extract_strided_slice %121 {offsets = [4, 0, 0], sizes = [1, 4, 1], strides = [1, 1, 1]} : vector<16x4x1xf32> to vector<1x4x1xf32>
    %367 = vector.shape_cast %366 : vector<1x4x1xf32> to vector<4x1xf32>
    %368 = vector.broadcast %367 : vector<4x1xf32> to vector<4x16xf32>
    %369 = arith.mulf %359, %368 : vector<4x16xf32>
    %cst_91 = arith.constant dense<0.000000e+00> : vector<16xf32>
    %370 = vector.multi_reduction <add>, %369, %cst_91 [0] : vector<4x16xf32> to vector<16xf32>
    %371 = vector.shape_cast %370 : vector<16xf32> to vector<1x16xf32>
    %372 = vector.extract_strided_slice %158 {offsets = [3, 0, 0], sizes = [1, 4, 1], strides = [1, 1, 1]} : vector<16x4x1xf32> to vector<1x4x1xf32>
    %373 = vector.shape_cast %372 : vector<1x4x1xf32> to vector<4x1xf32>
    %374 = vector.broadcast %373 : vector<4x1xf32> to vector<4x16xf32>
    %375 = arith.mulf %365, %374 : vector<4x16xf32>
    %cst_92 = arith.constant dense<0.000000e+00> : vector<16xf32>
    %376 = vector.multi_reduction <add>, %375, %cst_92 [0] : vector<4x16xf32> to vector<16xf32>
    %377 = vector.shape_cast %376 : vector<16xf32> to vector<1x16xf32>
    %378 = vector.extract_strided_slice %114 {offsets = [12, 0, 0], sizes = [1, 4, 16], strides = [1, 1, 1]} : vector<16x4x16xf32> to vector<1x4x16xf32>
    %379 = vector.shape_cast %378 : vector<1x4x16xf32> to vector<4x16xf32>
    %380 = arith.mulf %379, %335 : vector<4x16xf32>
    %381 = vector.extract_strided_slice %120 {offsets = [12, 0, 0], sizes = [1, 4, 16], strides = [1, 1, 1]} : vector<16x4x16xf32> to vector<1x4x16xf32>
    %382 = vector.shape_cast %381 : vector<1x4x16xf32> to vector<4x16xf32>
    %383 = arith.addf %380, %382 : vector<4x16xf32>
    %384 = vector.extract_strided_slice %151 {offsets = [11, 0, 0], sizes = [1, 4, 16], strides = [1, 1, 1]} : vector<16x4x16xf32> to vector<1x4x16xf32>
    %385 = vector.shape_cast %384 : vector<1x4x16xf32> to vector<4x16xf32>
    %386 = arith.mulf %385, %341 : vector<4x16xf32>
    %387 = vector.extract_strided_slice %157 {offsets = [11, 0, 0], sizes = [1, 4, 16], strides = [1, 1, 1]} : vector<16x4x16xf32> to vector<1x4x16xf32>
    %388 = vector.shape_cast %387 : vector<1x4x16xf32> to vector<4x16xf32>
    %389 = arith.addf %386, %388 : vector<4x16xf32>
    %390 = vector.extract_strided_slice %121 {offsets = [12, 0, 0], sizes = [1, 4, 1], strides = [1, 1, 1]} : vector<16x4x1xf32> to vector<1x4x1xf32>
    %391 = vector.shape_cast %390 : vector<1x4x1xf32> to vector<4x1xf32>
    %392 = vector.broadcast %391 : vector<4x1xf32> to vector<4x16xf32>
    %393 = arith.mulf %383, %392 : vector<4x16xf32>
    %cst_93 = arith.constant dense<0.000000e+00> : vector<16xf32>
    %394 = vector.multi_reduction <add>, %393, %cst_93 [0] : vector<4x16xf32> to vector<16xf32>
    %395 = vector.shape_cast %394 : vector<16xf32> to vector<1x16xf32>
    %396 = vector.extract_strided_slice %158 {offsets = [11, 0, 0], sizes = [1, 4, 1], strides = [1, 1, 1]} : vector<16x4x1xf32> to vector<1x4x1xf32>
    %397 = vector.shape_cast %396 : vector<1x4x1xf32> to vector<4x1xf32>
    %398 = vector.broadcast %397 : vector<4x1xf32> to vector<4x16xf32>
    %399 = arith.mulf %389, %398 : vector<4x16xf32>
    %cst_94 = arith.constant dense<0.000000e+00> : vector<16xf32>
    %400 = vector.multi_reduction <add>, %399, %cst_94 [0] : vector<4x16xf32> to vector<16xf32>
    %401 = vector.shape_cast %400 : vector<16xf32> to vector<1x16xf32>
    %402 = vector.extract_strided_slice %114 {offsets = [5, 0, 0], sizes = [1, 4, 16], strides = [1, 1, 1]} : vector<16x4x16xf32> to vector<1x4x16xf32>
    %403 = vector.shape_cast %402 : vector<1x4x16xf32> to vector<4x16xf32>
    %404 = arith.mulf %403, %359 : vector<4x16xf32>
    %405 = vector.extract_strided_slice %120 {offsets = [5, 0, 0], sizes = [1, 4, 16], strides = [1, 1, 1]} : vector<16x4x16xf32> to vector<1x4x16xf32>
    %406 = vector.shape_cast %405 : vector<1x4x16xf32> to vector<4x16xf32>
    %407 = arith.addf %404, %406 : vector<4x16xf32>
    %408 = vector.extract_strided_slice %151 {offsets = [2, 0, 0], sizes = [1, 4, 16], strides = [1, 1, 1]} : vector<16x4x16xf32> to vector<1x4x16xf32>
    %409 = vector.shape_cast %408 : vector<1x4x16xf32> to vector<4x16xf32>
    %410 = arith.mulf %409, %365 : vector<4x16xf32>
    %411 = vector.extract_strided_slice %157 {offsets = [2, 0, 0], sizes = [1, 4, 16], strides = [1, 1, 1]} : vector<16x4x16xf32> to vector<1x4x16xf32>
    %412 = vector.shape_cast %411 : vector<1x4x16xf32> to vector<4x16xf32>
    %413 = arith.addf %410, %412 : vector<4x16xf32>
    %414 = vector.extract_strided_slice %121 {offsets = [5, 0, 0], sizes = [1, 4, 1], strides = [1, 1, 1]} : vector<16x4x1xf32> to vector<1x4x1xf32>
    %415 = vector.shape_cast %414 : vector<1x4x1xf32> to vector<4x1xf32>
    %416 = vector.broadcast %415 : vector<4x1xf32> to vector<4x16xf32>
    %417 = arith.mulf %407, %416 : vector<4x16xf32>
    %cst_95 = arith.constant dense<0.000000e+00> : vector<16xf32>
    %418 = vector.multi_reduction <add>, %417, %cst_95 [0] : vector<4x16xf32> to vector<16xf32>
    %419 = vector.shape_cast %418 : vector<16xf32> to vector<1x16xf32>
    %420 = vector.extract_strided_slice %158 {offsets = [2, 0, 0], sizes = [1, 4, 1], strides = [1, 1, 1]} : vector<16x4x1xf32> to vector<1x4x1xf32>
    %421 = vector.shape_cast %420 : vector<1x4x1xf32> to vector<4x1xf32>
    %422 = vector.broadcast %421 : vector<4x1xf32> to vector<4x16xf32>
    %423 = arith.mulf %413, %422 : vector<4x16xf32>
    %cst_96 = arith.constant dense<0.000000e+00> : vector<16xf32>
    %424 = vector.multi_reduction <add>, %423, %cst_96 [0] : vector<4x16xf32> to vector<16xf32>
    %425 = vector.shape_cast %424 : vector<16xf32> to vector<1x16xf32>
    %426 = vector.extract_strided_slice %114 {offsets = [13, 0, 0], sizes = [1, 4, 16], strides = [1, 1, 1]} : vector<16x4x16xf32> to vector<1x4x16xf32>
    %427 = vector.shape_cast %426 : vector<1x4x16xf32> to vector<4x16xf32>
    %428 = arith.mulf %427, %383 : vector<4x16xf32>
    %429 = vector.extract_strided_slice %120 {offsets = [13, 0, 0], sizes = [1, 4, 16], strides = [1, 1, 1]} : vector<16x4x16xf32> to vector<1x4x16xf32>
    %430 = vector.shape_cast %429 : vector<1x4x16xf32> to vector<4x16xf32>
    %431 = arith.addf %428, %430 : vector<4x16xf32>
    %432 = vector.extract_strided_slice %151 {offsets = [10, 0, 0], sizes = [1, 4, 16], strides = [1, 1, 1]} : vector<16x4x16xf32> to vector<1x4x16xf32>
    %433 = vector.shape_cast %432 : vector<1x4x16xf32> to vector<4x16xf32>
    %434 = arith.mulf %433, %389 : vector<4x16xf32>
    %435 = vector.extract_strided_slice %157 {offsets = [10, 0, 0], sizes = [1, 4, 16], strides = [1, 1, 1]} : vector<16x4x16xf32> to vector<1x4x16xf32>
    %436 = vector.shape_cast %435 : vector<1x4x16xf32> to vector<4x16xf32>
    %437 = arith.addf %434, %436 : vector<4x16xf32>
    %438 = vector.extract_strided_slice %121 {offsets = [13, 0, 0], sizes = [1, 4, 1], strides = [1, 1, 1]} : vector<16x4x1xf32> to vector<1x4x1xf32>
    %439 = vector.shape_cast %438 : vector<1x4x1xf32> to vector<4x1xf32>
    %440 = vector.broadcast %439 : vector<4x1xf32> to vector<4x16xf32>
    %441 = arith.mulf %431, %440 : vector<4x16xf32>
    %cst_97 = arith.constant dense<0.000000e+00> : vector<16xf32>
    %442 = vector.multi_reduction <add>, %441, %cst_97 [0] : vector<4x16xf32> to vector<16xf32>
    %443 = vector.shape_cast %442 : vector<16xf32> to vector<1x16xf32>
    %444 = vector.extract_strided_slice %158 {offsets = [10, 0, 0], sizes = [1, 4, 1], strides = [1, 1, 1]} : vector<16x4x1xf32> to vector<1x4x1xf32>
    %445 = vector.shape_cast %444 : vector<1x4x1xf32> to vector<4x1xf32>
    %446 = vector.broadcast %445 : vector<4x1xf32> to vector<4x16xf32>
    %447 = arith.mulf %437, %446 : vector<4x16xf32>
    %cst_98 = arith.constant dense<0.000000e+00> : vector<16xf32>
    %448 = vector.multi_reduction <add>, %447, %cst_98 [0] : vector<4x16xf32> to vector<16xf32>
    %449 = vector.shape_cast %448 : vector<16xf32> to vector<1x16xf32>
    %450 = vector.extract_strided_slice %114 {offsets = [6, 0, 0], sizes = [1, 4, 16], strides = [1, 1, 1]} : vector<16x4x16xf32> to vector<1x4x16xf32>
    %451 = vector.shape_cast %450 : vector<1x4x16xf32> to vector<4x16xf32>
    %452 = arith.mulf %451, %407 : vector<4x16xf32>
    %453 = vector.extract_strided_slice %120 {offsets = [6, 0, 0], sizes = [1, 4, 16], strides = [1, 1, 1]} : vector<16x4x16xf32> to vector<1x4x16xf32>
    %454 = vector.shape_cast %453 : vector<1x4x16xf32> to vector<4x16xf32>
    %455 = arith.addf %452, %454 : vector<4x16xf32>
    %456 = vector.extract_strided_slice %151 {offsets = [1, 0, 0], sizes = [1, 4, 16], strides = [1, 1, 1]} : vector<16x4x16xf32> to vector<1x4x16xf32>
    %457 = vector.shape_cast %456 : vector<1x4x16xf32> to vector<4x16xf32>
    %458 = arith.mulf %457, %413 : vector<4x16xf32>
    %459 = vector.extract_strided_slice %157 {offsets = [1, 0, 0], sizes = [1, 4, 16], strides = [1, 1, 1]} : vector<16x4x16xf32> to vector<1x4x16xf32>
    %460 = vector.shape_cast %459 : vector<1x4x16xf32> to vector<4x16xf32>
    %461 = arith.addf %458, %460 : vector<4x16xf32>
    %462 = vector.extract_strided_slice %121 {offsets = [6, 0, 0], sizes = [1, 4, 1], strides = [1, 1, 1]} : vector<16x4x1xf32> to vector<1x4x1xf32>
    %463 = vector.shape_cast %462 : vector<1x4x1xf32> to vector<4x1xf32>
    %464 = vector.broadcast %463 : vector<4x1xf32> to vector<4x16xf32>
    %465 = arith.mulf %455, %464 : vector<4x16xf32>
    %cst_99 = arith.constant dense<0.000000e+00> : vector<16xf32>
    %466 = vector.multi_reduction <add>, %465, %cst_99 [0] : vector<4x16xf32> to vector<16xf32>
    %467 = vector.shape_cast %466 : vector<16xf32> to vector<1x16xf32>
    %468 = vector.extract_strided_slice %158 {offsets = [1, 0, 0], sizes = [1, 4, 1], strides = [1, 1, 1]} : vector<16x4x1xf32> to vector<1x4x1xf32>
    %469 = vector.shape_cast %468 : vector<1x4x1xf32> to vector<4x1xf32>
    %470 = vector.broadcast %469 : vector<4x1xf32> to vector<4x16xf32>
    %471 = arith.mulf %461, %470 : vector<4x16xf32>
    %cst_100 = arith.constant dense<0.000000e+00> : vector<16xf32>
    %472 = vector.multi_reduction <add>, %471, %cst_100 [0] : vector<4x16xf32> to vector<16xf32>
    %473 = vector.shape_cast %472 : vector<16xf32> to vector<1x16xf32>
    %474 = vector.extract_strided_slice %114 {offsets = [14, 0, 0], sizes = [1, 4, 16], strides = [1, 1, 1]} : vector<16x4x16xf32> to vector<1x4x16xf32>
    %475 = vector.shape_cast %474 : vector<1x4x16xf32> to vector<4x16xf32>
    %476 = arith.mulf %475, %431 : vector<4x16xf32>
    %477 = vector.extract_strided_slice %120 {offsets = [14, 0, 0], sizes = [1, 4, 16], strides = [1, 1, 1]} : vector<16x4x16xf32> to vector<1x4x16xf32>
    %478 = vector.shape_cast %477 : vector<1x4x16xf32> to vector<4x16xf32>
    %479 = arith.addf %476, %478 : vector<4x16xf32>
    %480 = vector.extract_strided_slice %151 {offsets = [9, 0, 0], sizes = [1, 4, 16], strides = [1, 1, 1]} : vector<16x4x16xf32> to vector<1x4x16xf32>
    %481 = vector.shape_cast %480 : vector<1x4x16xf32> to vector<4x16xf32>
    %482 = arith.mulf %481, %437 : vector<4x16xf32>
    %483 = vector.extract_strided_slice %157 {offsets = [9, 0, 0], sizes = [1, 4, 16], strides = [1, 1, 1]} : vector<16x4x16xf32> to vector<1x4x16xf32>
    %484 = vector.shape_cast %483 : vector<1x4x16xf32> to vector<4x16xf32>
    %485 = arith.addf %482, %484 : vector<4x16xf32>
    %486 = vector.extract_strided_slice %121 {offsets = [14, 0, 0], sizes = [1, 4, 1], strides = [1, 1, 1]} : vector<16x4x1xf32> to vector<1x4x1xf32>
    %487 = vector.shape_cast %486 : vector<1x4x1xf32> to vector<4x1xf32>
    %488 = vector.broadcast %487 : vector<4x1xf32> to vector<4x16xf32>
    %489 = arith.mulf %479, %488 : vector<4x16xf32>
    %cst_101 = arith.constant dense<0.000000e+00> : vector<16xf32>
    %490 = vector.multi_reduction <add>, %489, %cst_101 [0] : vector<4x16xf32> to vector<16xf32>
    %491 = vector.shape_cast %490 : vector<16xf32> to vector<1x16xf32>
    %492 = vector.extract_strided_slice %158 {offsets = [9, 0, 0], sizes = [1, 4, 1], strides = [1, 1, 1]} : vector<16x4x1xf32> to vector<1x4x1xf32>
    %493 = vector.shape_cast %492 : vector<1x4x1xf32> to vector<4x1xf32>
    %494 = vector.broadcast %493 : vector<4x1xf32> to vector<4x16xf32>
    %495 = arith.mulf %485, %494 : vector<4x16xf32>
    %cst_102 = arith.constant dense<0.000000e+00> : vector<16xf32>
    %496 = vector.multi_reduction <add>, %495, %cst_102 [0] : vector<4x16xf32> to vector<16xf32>
    %497 = vector.shape_cast %496 : vector<16xf32> to vector<1x16xf32>
    %498 = vector.extract_strided_slice %114 {offsets = [7, 0, 0], sizes = [1, 4, 16], strides = [1, 1, 1]} : vector<16x4x16xf32> to vector<1x4x16xf32>
    %499 = vector.shape_cast %498 : vector<1x4x16xf32> to vector<4x16xf32>
    %500 = arith.mulf %499, %455 : vector<4x16xf32>
    %501 = vector.extract_strided_slice %120 {offsets = [7, 0, 0], sizes = [1, 4, 16], strides = [1, 1, 1]} : vector<16x4x16xf32> to vector<1x4x16xf32>
    %502 = vector.shape_cast %501 : vector<1x4x16xf32> to vector<4x16xf32>
    %503 = arith.addf %500, %502 : vector<4x16xf32>
    %504 = vector.extract_strided_slice %151 {offsets = [0, 0, 0], sizes = [1, 4, 16], strides = [1, 1, 1]} : vector<16x4x16xf32> to vector<1x4x16xf32>
    %505 = vector.shape_cast %504 : vector<1x4x16xf32> to vector<4x16xf32>
    %506 = arith.mulf %505, %461 : vector<4x16xf32>
    %507 = vector.extract_strided_slice %157 {offsets = [0, 0, 0], sizes = [1, 4, 16], strides = [1, 1, 1]} : vector<16x4x16xf32> to vector<1x4x16xf32>
    %508 = vector.shape_cast %507 : vector<1x4x16xf32> to vector<4x16xf32>
    %509 = arith.addf %506, %508 : vector<4x16xf32>
    %510 = vector.extract_strided_slice %121 {offsets = [7, 0, 0], sizes = [1, 4, 1], strides = [1, 1, 1]} : vector<16x4x1xf32> to vector<1x4x1xf32>
    %511 = vector.shape_cast %510 : vector<1x4x1xf32> to vector<4x1xf32>
    %512 = vector.broadcast %511 : vector<4x1xf32> to vector<4x16xf32>
    %513 = arith.mulf %503, %512 : vector<4x16xf32>
    %cst_103 = arith.constant dense<0.000000e+00> : vector<16xf32>
    %514 = vector.multi_reduction <add>, %513, %cst_103 [0] : vector<4x16xf32> to vector<16xf32>
    %515 = vector.shape_cast %514 : vector<16xf32> to vector<1x16xf32>
    %516 = vector.extract_strided_slice %158 {offsets = [0, 0, 0], sizes = [1, 4, 1], strides = [1, 1, 1]} : vector<16x4x1xf32> to vector<1x4x1xf32>
    %517 = vector.shape_cast %516 : vector<1x4x1xf32> to vector<4x1xf32>
    %518 = vector.broadcast %517 : vector<4x1xf32> to vector<4x16xf32>
    %519 = arith.mulf %509, %518 : vector<4x16xf32>
    %cst_104 = arith.constant dense<0.000000e+00> : vector<16xf32>
    %520 = vector.multi_reduction <add>, %519, %cst_104 [0] : vector<4x16xf32> to vector<16xf32>
    %521 = vector.shape_cast %520 : vector<16xf32> to vector<1x16xf32>
    %522 = vector.extract_strided_slice %114 {offsets = [15, 0, 0], sizes = [1, 4, 16], strides = [1, 1, 1]} : vector<16x4x16xf32> to vector<1x4x16xf32>
    %523 = vector.shape_cast %522 : vector<1x4x16xf32> to vector<4x16xf32>
    %524 = arith.mulf %523, %479 : vector<4x16xf32>
    %525 = vector.extract_strided_slice %120 {offsets = [15, 0, 0], sizes = [1, 4, 16], strides = [1, 1, 1]} : vector<16x4x16xf32> to vector<1x4x16xf32>
    %526 = vector.shape_cast %525 : vector<1x4x16xf32> to vector<4x16xf32>
    %527 = arith.addf %524, %526 : vector<4x16xf32>
    %528 = vector.extract_strided_slice %151 {offsets = [8, 0, 0], sizes = [1, 4, 16], strides = [1, 1, 1]} : vector<16x4x16xf32> to vector<1x4x16xf32>
    %529 = vector.shape_cast %528 : vector<1x4x16xf32> to vector<4x16xf32>
    %530 = arith.mulf %529, %485 : vector<4x16xf32>
    %531 = vector.extract_strided_slice %157 {offsets = [8, 0, 0], sizes = [1, 4, 16], strides = [1, 1, 1]} : vector<16x4x16xf32> to vector<1x4x16xf32>
    %532 = vector.shape_cast %531 : vector<1x4x16xf32> to vector<4x16xf32>
    %533 = arith.addf %530, %532 : vector<4x16xf32>
    %534 = vector.extract_strided_slice %121 {offsets = [15, 0, 0], sizes = [1, 4, 1], strides = [1, 1, 1]} : vector<16x4x1xf32> to vector<1x4x1xf32>
    %535 = vector.shape_cast %534 : vector<1x4x1xf32> to vector<4x1xf32>
    %536 = vector.broadcast %535 : vector<4x1xf32> to vector<4x16xf32>
    %537 = arith.mulf %527, %536 : vector<4x16xf32>
    %cst_105 = arith.constant dense<0.000000e+00> : vector<16xf32>
    %538 = vector.multi_reduction <add>, %537, %cst_105 [0] : vector<4x16xf32> to vector<16xf32>
    %539 = vector.shape_cast %538 : vector<16xf32> to vector<1x16xf32>
    %540 = vector.extract_strided_slice %158 {offsets = [8, 0, 0], sizes = [1, 4, 1], strides = [1, 1, 1]} : vector<16x4x1xf32> to vector<1x4x1xf32>
    %541 = vector.shape_cast %540 : vector<1x4x1xf32> to vector<4x1xf32>
    %542 = vector.broadcast %541 : vector<4x1xf32> to vector<4x16xf32>
    %543 = arith.mulf %533, %542 : vector<4x16xf32>
    %cst_106 = arith.constant dense<0.000000e+00> : vector<16xf32>
    %544 = vector.multi_reduction <add>, %543, %cst_106 [0] : vector<4x16xf32> to vector<16xf32>
    %545 = vector.shape_cast %544 : vector<16xf32> to vector<1x16xf32>
    %546 = tpu.concatenate %179, %227, %275, %323, %371, %419, %467, %515, %203, %251, %299, %347, %395, %443, %491, %539 in 0 : vector<1x16xf32>, vector<1x16xf32>, vector<1x16xf32>, vector<1x16xf32>, vector<1x16xf32>, vector<1x16xf32>, vector<1x16xf32>, vector<1x16xf32>, vector<1x16xf32>, vector<1x16xf32>, vector<1x16xf32>, vector<1x16xf32>, vector<1x16xf32>, vector<1x16xf32>, vector<1x16xf32>, vector<1x16xf32> -> vector<16x16xf32>
    %547 = vector.broadcast %159 : vector<1x16xf32> to vector<16x16xf32>
    %548 = arith.mulf %75, %547 : vector<16x16xf32>
    %549 = arith.addf %546, %548 : vector<16x16xf32>
    %550 = tpu.concatenate %521, %473, %425, %377, %329, %281, %233, %185, %545, %497, %449, %401, %353, %305, %257, %209 in 0 : vector<1x16xf32>, vector<1x16xf32>, vector<1x16xf32>, vector<1x16xf32>, vector<1x16xf32>, vector<1x16xf32>, vector<1x16xf32>, vector<1x16xf32>, vector<1x16xf32>, vector<1x16xf32>, vector<1x16xf32>, vector<1x16xf32>, vector<1x16xf32>, vector<1x16xf32>, vector<1x16xf32>, vector<1x16xf32> -> vector<16x16xf32>
    %551 = vector.broadcast %160 : vector<1x16xf32> to vector<16x16xf32>
    %552 = arith.mulf %76, %551 : vector<16x16xf32>
    %553 = arith.addf %550, %552 : vector<16x16xf32>
    %554 = arith.addf %549, %553 : vector<16x16xf32>
    %555 = arith.mulf %84, %554 : vector<16x16xf32>
    %c0_107 = arith.constant 0 : index
    %c0_108 = arith.constant 0 : index
    %556 = vector.load %arg12[%c0_107, %c0_108] : memref<16x32xf32, #tpu.memory_space<vmem>>, vector<16x32xf32>
    %cst_109 = arith.constant dense<0.000000e+00> : vector<16x32xf32>
    %557 = tpu.matmul %555, %556, %cst_109 {dimension_numbers = #tpu.dot_dimension_numbers<[1], [0], [0], [1], [0, 0, 1, 1], [], []>} : vector<16x16xf32>, vector<16x32xf32>, vector<16x32xf32> -> vector<16x32xf32>
    %c0_110 = arith.constant 0 : index
    %c0_111 = arith.constant 0 : index
    %558 = vector.load %arg13[%c0_110, %c0_111] : memref<1x32xf32, #tpu.memory_space<vmem>>, vector<1x32xf32>
    %559 = vector.broadcast %558 : vector<1x32xf32> to vector<16x32xf32>
    %560 = arith.addf %557, %559 : vector<16x32xf32>
    %561 = vector.shape_cast %560 : vector<16x32xf32> to vector<2x8x32xf32>
    %562 = arith.addf %561, %35 : vector<2x8x32xf32>
    %563 = vector.broadcast %3 : vector<2x1x32xf32> to vector<2x8x32xf32>
    %564 = arith.mulf %563, %562 : vector<2x8x32xf32>
    %565 = arith.addf %0, %564 : vector<2x8x32xf32>
    %c0_112 = arith.constant 0 : index
    %c0_113 = arith.constant 0 : index
    %c0_114 = arith.constant 0 : index
    %566 = vector.load %arg24[%c0_112, %c0_113, %c0_114] : memref<2x8x32xf32, #tpu.memory_space<vmem>>, vector<2x8x32xf32>
    tpu.vector_store %arg24[%c0_112, %c0_113, %c0_114], %565 {strides = array<i32>} : memref<2x8x32xf32, #tpu.memory_space<vmem>>, vector<2x8x32xf32>,
    return
  }
}

</mosaic_0001>

<llo_original>
// kernel: tpu_custom_call.1
$region0: #{tpu_custom_call.1}
  #allocation0 [shape = 'u32[]', space=smem, size = 0x4, offset = 0x4, fixed_abs, tag = 'smem constant byte address 0x4 - core index']
  #allocation1 [shape = 'u32[72,128]{1,0:T(1,128)}', space=vmem, size = 0x9000, scoped, tag = 'internal scratch']
  %s0 = inlined_call_operand.hbm [shape: f32[2,8,32], index: 0, kind: input, shape index: {}]
  %s1 = inlined_call_operand.hbm [shape: f32[2,1,32], index: 1, kind: input, shape index: {}]
  %s2 = inlined_call_operand.hbm [shape: f32[2,1,32], index: 2, kind: input, shape index: {}]
  %s3 = inlined_call_operand.hbm [shape: f32[2,1,32], index: 3, kind: input, shape index: {}]
  %s4 = inlined_call_operand.hbm [shape: f32[1,32], index: 4, kind: input, shape index: {}]
  %s5 = inlined_call_operand.hbm [shape: f32[1,32], index: 5, kind: input, shape index: {}]
  %s6 = inlined_call_operand.hbm [shape: f32[1,32], index: 6, kind: input, shape index: {}]
  %s7 = inlined_call_operand.hbm [shape: f32[1,32], index: 7, kind: input, shape index: {}]
  %s8 = inlined_call_operand.hbm [shape: f32[32,32], index: 8, kind: input, shape index: {}]
  %s9 = inlined_call_operand.hbm [shape: f32[1,32], index: 9, kind: input, shape index: {}]
  %s10 = inlined_call_operand.hbm [shape: f32[16,32], index: 10, kind: input, shape index: {}]
  %s11 = inlined_call_operand.hbm [shape: f32[1,32], index: 11, kind: input, shape index: {}]
  %s12 = inlined_call_operand.hbm [shape: f32[16,32], index: 12, kind: input, shape index: {}]
  %s13 = inlined_call_operand.hbm [shape: f32[1,32], index: 13, kind: input, shape index: {}]
  %s14 = inlined_call_operand.hbm [shape: f32[16,12], index: 14, kind: input, shape index: {}]
  %s15 = inlined_call_operand.hbm [shape: f32[4,16], index: 15, kind: input, shape index: {}]
  %s16 = inlined_call_operand.hbm [shape: f32[1,16], index: 16, kind: input, shape index: {}]
  %s17 = inlined_call_operand.hbm [shape: f32[4,16], index: 17, kind: input, shape index: {}]
  %s18 = inlined_call_operand.hbm [shape: f32[1,16], index: 18, kind: input, shape index: {}]
  %s19 = inlined_call_operand.vmem [shape: f32[16,12], index: 19, kind: input, shape index: {}]
  %s20 = inlined_call_operand.hbm [shape: f32[4,16], index: 20, kind: input, shape index: {}]
  %s21 = inlined_call_operand.hbm [shape: f32[1,16], index: 21, kind: input, shape index: {}]
  %s22 = inlined_call_operand.vmem [shape: f32[4,16], index: 22, kind: input, shape index: {}]
  %s23 = inlined_call_operand.vmem [shape: f32[1,16], index: 23, kind: input, shape index: {}]
  %s24 = inlined_call_operand.hbm [shape: f32[2,8,32], index: 24, kind: output, shape index: {}]
  %s25 = sld [smem:[#allocation0]]
  $region190: #{tpu_custom_call.1} parent=0
    _
  %s27 = ssub.s32 1, %s25
  %s28 = scalar_select 0, %s27, %s25
  $region1: #{tpu_custom_call.1} parent=0
    #allocation2 [shape = 'u8[8192]{0}', space=vmem, size = 0x2000, scoped, tag = 'input window, operand 0, single buffered']
    #allocation3 [shape = 's32[1]{0}', space=sflag, size = 0x4, scoped, tag = 'scoped memory for tpu_custom_call.1']
    #allocation4 [shape = 's32[1]{0}', space=sflag, size = 0x4, scoped, tag = 'scoped memory for tpu_custom_call.1']
    #allocation5 [shape = 'u8[1024]{0}', space=vmem, size = 0x400, scoped, tag = 'input window, operand 1, single buffered']
    #allocation6 [shape = 's32[1]{0}', space=sflag, size = 0x4, scoped, tag = 'scoped memory for tpu_custom_call.1']
    #allocation7 [shape = 'u8[1024]{0}', space=vmem, size = 0x400, scoped, tag = 'input window, operand 2, single buffered']
    #allocation8 [shape = 'u8[1024]{0}', space=vmem, size = 0x400, scoped, tag = 'input window, operand 3, single buffered']
    #allocation9 [shape = 's32[1]{0}', space=sflag, size = 0x4, scoped, tag = 'scoped memory for tpu_custom_call.1']
    #allocation10 [shape = 'u8[512]{0}', space=vmem, size = 0x400, scoped, tag = 'input window, operand 4, single buffered']
    #allocation11 [shape = 'u8[512]{0}', space=vmem, size = 0x400, scoped, tag = 'input window, operand 5, single buffered']
    #allocation12 [shape = 's32[1]{0}', space=sflag, size = 0x4, scoped, tag = 'scoped memory for tpu_custom_call.1']
    #allocation13 [shape = 'u8[512]{0}', space=vmem, size = 0x400, scoped, tag = 'input window, operand 6, single buffered']
    #allocation14 [shape = 'u8[512]{0}', space=vmem, size = 0x400, scoped, tag = 'input window, operand 7, single buffered']
    #allocation15 [shape = 's32[1]{0}', space=sflag, size = 0x4, scoped, tag = 'scoped memory for tpu_custom_call.1']
    #allocation16 [shape = 'u8[16384]{0}', space=vmem, size = 0x4000, scoped, tag = 'input window, operand 8, single buffered']
    #allocation17 [shape = 'u8[512]{0}', space=vmem, size = 0x400, scoped, tag = 'input window, operand 9, single buffered']
    #allocation18 [shape = 's32[1]{0}', space=sflag, size = 0x4, scoped, tag = 'scoped memory for tpu_custom_call.1']
    #allocation19 [shape = 'u8[8192]{0}', space=vmem, size = 0x2000, scoped, tag = 'input window, operand 10, single buffered']
    #allocation20 [shape = 'u8[512]{0}', space=vmem, size = 0x400, scoped, tag = 'input window, operand 11, single buffered']
    #allocation21 [shape = 's32[1]{0}', space=sflag, size = 0x4, scoped, tag = 'scoped memory for tpu_custom_call.1']
    #allocation22 [shape = 'u8[8192]{0}', space=vmem, size = 0x2000, scoped, tag = 'input window, operand 12, single buffered']
    #allocation23 [shape = 'u8[512]{0}', space=vmem, size = 0x400, scoped, tag = 'input window, operand 13, single buffered']
    #allocation24 [shape = 's32[1]{0}', space=sflag, size = 0x4, scoped, tag = 'scoped memory for tpu_custom_call.1']
    #allocation25 [shape = 'u8[8192]{0}', space=vmem, size = 0x2000, scoped, tag = 'input window, operand 14, single buffered']
    #allocation26 [shape = 'u8[2048]{0}', space=vmem, size = 0x800, scoped, tag = 'input window, operand 15, single buffered']
    #allocation27 [shape = 's32[1]{0}', space=sflag, size = 0x4, scoped, tag = 'scoped memory for tpu_custom_call.1']
    #allocation28 [shape = 'u8[512]{0}', space=vmem, size = 0x400, scoped, tag = 'input window, operand 16, single buffered']
    #allocation29 [shape = 'u8[2048]{0}', space=vmem, size = 0x800, scoped, tag = 'input window, operand 17, single buffered']
    #allocation30 [shape = 's32[1]{0}', space=sflag, size = 0x4, scoped, tag = 'scoped memory for tpu_custom_call.1']
    #allocation31 [shape = 'u8[512]{0}', space=vmem, size = 0x400, scoped, tag = 'input window, operand 18, single buffered']
    #allocation32 [shape = 'u8[2048]{0}', space=vmem, size = 0x800, scoped, tag = 'input window, operand 20, single buffered']
    #allocation33 [shape = 's32[1]{0}', space=sflag, size = 0x4, scoped, tag = 'scoped memory for tpu_custom_call.1']
    #allocation34 [shape = 'u8[512]{0}', space=vmem, size = 0x400, scoped, tag = 'input window, operand 21, single buffered']
    #allocation35 [shape = 'u8[8192]{0}', space=vmem, size = 0x2000, scoped, tag = 'output window, operand 0, single buffered']
    %29 = vsyncpa [#allocation3], 0
    %30 = vsyncpa [#allocation6], 0
    %31 = vsyncpa [#allocation9], 0
    %32 = vsyncpa [#allocation12], 0
    %33 = vsyncpa [#allocation15], 0
    %34 = vsyncpa [#allocation18], 0
    %35 = vsyncpa [#allocation21], 0
    %36 = vsyncpa [#allocation24], 0
    %37 = vsyncpa [#allocation27], 0
    %38 = vsyncpa [#allocation30], 0
    %39 = vsyncpa [#allocation33], 0
    %40 = vsyncpa [#allocation4], 0
    // Predicated region
    $region2: #{tpu_custom_call.1} parent=1 // pred_check
      _
    $region3: #{tpu_custom_call.1} parent=1 // pred_check_branch
      %42 = sbr.rel (0) target = $region5
    $region4: #{tpu_custom_call.1} parent=1 // pred_region
      %44 = vsyncadd [#allocation3], 0
      %s45 = sshll.u32 %s0, 4
      %s46 = int_to_ptr.hbm [resolvable:$true] %s45
      %s47 = sshll.u32 [#allocation2], 4
      %s48 = int_to_ptr.vmem [resolvable:$true] %s47
      %53 = dma.hbm_to_vmem [thread:$0]  %s46, 256, %s48, [#allocation3], 128, 128, 8
    $region5: #{tpu_custom_call.1} parent=1 // pred_fallthru
      _
    // Predicated region
    $region6: #{tpu_custom_call.1} parent=1 // pred_check
      _
    $region7: #{tpu_custom_call.1} parent=1 // pred_check_branch
      %55 = sbr.rel (0) target = $region9
    $region8: #{tpu_custom_call.1} parent=1 // pred_region
      %57 = vsyncadd [#allocation6], 0
      %s58 = sshll.u32 %s1, 4
      %s59 = int_to_ptr.hbm [resolvable:$true] %s58
      %s60 = sshll.u32 [#allocation5], 4
      %s61 = int_to_ptr.vmem [resolvable:$true] %s60
      %66 = dma.hbm_to_vmem [thread:$0]  %s59, 32, %s61, [#allocation6], 16, 16, 1
    $region9: #{tpu_custom_call.1} parent=1 // pred_fallthru
      _
    // Predicated region
    $region10: #{tpu_custom_call.1} parent=1 // pred_check
      _
    $region11: #{tpu_custom_call.1} parent=1 // pred_check_branch
      %68 = sbr.rel (0) target = $region13
    $region12: #{tpu_custom_call.1} parent=1 // pred_region
      %70 = vsyncadd [#allocation6], 0
      %s71 = sshll.u32 %s2, 4
      %s72 = int_to_ptr.hbm [resolvable:$true] %s71
      %s73 = sshll.u32 [#allocation7], 4
      %s74 = int_to_ptr.vmem [resolvable:$true] %s73
      %79 = dma.hbm_to_vmem [thread:$0]  %s72, 32, %s74, [#allocation6], 16, 16, 1
    $region13: #{tpu_custom_call.1} parent=1 // pred_fallthru
      _
    // Predicated region
    $region14: #{tpu_custom_call.1} parent=1 // pred_check
      _
    $region15: #{tpu_custom_call.1} parent=1 // pred_check_branch
      %81 = sbr.rel (0) target = $region17
    $region16: #{tpu_custom_call.1} parent=1 // pred_region
      %83 = vsyncadd [#allocation9], 0
      %s84 = sshll.u32 %s3, 4
      %s85 = int_to_ptr.hbm [resolvable:$true] %s84
      %s86 = sshll.u32 [#allocation8], 4
      %s87 = int_to_ptr.vmem [resolvable:$true] %s86
      %92 = dma.hbm_to_vmem [thread:$0]  %s85, 32, %s87, [#allocation9], 16, 16, 1
    $region17: #{tpu_custom_call.1} parent=1 // pred_fallthru
      _
    // Predicated region
    $region18: #{tpu_custom_call.1} parent=1 // pred_check
      _
    $region19: #{tpu_custom_call.1} parent=1 // pred_check_branch
      %94 = sbr.rel (0) target = $region21
    $region20: #{tpu_custom_call.1} parent=1 // pred_region
      %96 = vsyncadd [#allocation9], 0
      %s98 = sshll.u32 %s4, 4
      %s99 = int_to_ptr.hbm [resolvable:$true] %s98
      %s100 = sshll.u32 [#allocation10], 4
      %s101 = int_to_ptr.vmem [resolvable:$true] %s100
      %103 = dma.hbm_to_vmem [thread:$0]  %s99, 16, %s101, [#allocation9]
    $region21: #{tpu_custom_call.1} parent=1 // pred_fallthru
      _
    // Predicated region
    $region22: #{tpu_custom_call.1} parent=1 // pred_check
      _
    $region23: #{tpu_custom_call.1} parent=1 // pred_check_branch
      %105 = sbr.rel (0) target = $region25
    $region24: #{tpu_custom_call.1} parent=1 // pred_region
      %107 = vsyncadd [#allocation12], 0
      %s109 = sshll.u32 %s5, 4
      %s110 = int_to_ptr.hbm [resolvable:$true] %s109
      %s111 = sshll.u32 [#allocation11], 4
      %s112 = int_to_ptr.vmem [resolvable:$true] %s111
      %114 = dma.hbm_to_vmem [thread:$0]  %s110, 16, %s112, [#allocation12]
    $region25: #{tpu_custom_call.1} parent=1 // pred_fallthru
      _
    // Predicated region
    $region26: #{tpu_custom_call.1} parent=1 // pred_check
      _
    $region27: #{tpu_custom_call.1} parent=1 // pred_check_branch
      %116 = sbr.rel (0) target = $region29
    $region28: #{tpu_custom_call.1} parent=1 // pred_region
      %118 = vsyncadd [#allocation12], 0
      %s120 = sshll.u32 %s6, 4
      %s121 = int_to_ptr.hbm [resolvable:$true] %s120
      %s122 = sshll.u32 [#allocation13], 4
      %s123 = int_to_ptr.vmem [resolvable:$true] %s122
      %125 = dma.hbm_to_vmem [thread:$0]  %s121, 16, %s123, [#allocation12]
    $region29: #{tpu_custom_call.1} parent=1 // pred_fallthru
      _
    // Predicated region
    $region30: #{tpu_custom_call.1} parent=1 // pred_check
      _
    $region31: #{tpu_custom_call.1} parent=1 // pred_check_branch
      %127 = sbr.rel (0) target = $region33
    $region32: #{tpu_custom_call.1} parent=1 // pred_region
      %129 = vsyncadd [#allocation15], 0
      %s131 = sshll.u32 %s7, 4
      %s132 = int_to_ptr.hbm [resolvable:$true] %s131
      %s133 = sshll.u32 [#allocation14], 4
      %s134 = int_to_ptr.vmem [resolvable:$true] %s133
      %136 = dma.hbm_to_vmem [thread:$0]  %s132, 16, %s134, [#allocation15]
    $region33: #{tpu_custom_call.1} parent=1 // pred_fallthru
      _
    // Predicated region
    $region34: #{tpu_custom_call.1} parent=1 // pred_check
      _
    $region35: #{tpu_custom_call.1} parent=1 // pred_check_branch
      %138 = sbr.rel (0) target = $region37
    $region36: #{tpu_custom_call.1} parent=1 // pred_region
      %140 = vsyncadd [#allocation15], 0
      %s141 = sshll.u32 %s8, 4
      %s142 = int_to_ptr.hbm [resolvable:$true] %s141
      %s143 = sshll.u32 [#allocation16], 4
      %s144 = int_to_ptr.vmem [resolvable:$true] %s143
      %149 = dma.hbm_to_vmem [thread:$0]  %s142, 512, %s144, [#allocation15], 128, 128, 8
    $region37: #{tpu_custom_call.1} parent=1 // pred_fallthru
      _
    // Predicated region
    $region38: #{tpu_custom_call.1} parent=1 // pred_check
      _
    $region39: #{tpu_custom_call.1} parent=1 // pred_check_branch
      %151 = sbr.rel (0) target = $region41
    $region40: #{tpu_custom_call.1} parent=1 // pred_region
      %153 = vsyncadd [#allocation18], 0
      %s155 = sshll.u32 %s9, 4
      %s156 = int_to_ptr.hbm [resolvable:$true] %s155
      %s157 = sshll.u32 [#allocation17], 4
      %s158 = int_to_ptr.vmem [resolvable:$true] %s157
      %160 = dma.hbm_to_vmem [thread:$0]  %s156, 16, %s158, [#allocation18]
    $region41: #{tpu_custom_call.1} parent=1 // pred_fallthru
      _
    // Predicated region
    $region42: #{tpu_custom_call.1} parent=1 // pred_check
      _
    $region43: #{tpu_custom_call.1} parent=1 // pred_check_branch
      %162 = sbr.rel (0) target = $region45
    $region44: #{tpu_custom_call.1} parent=1 // pred_region
      %164 = vsyncadd [#allocation18], 0
      %s165 = sshll.u32 %s10, 4
      %s166 = int_to_ptr.hbm [resolvable:$true] %s165
      %s167 = sshll.u32 [#allocation19], 4
      %s168 = int_to_ptr.vmem [resolvable:$true] %s167
      %173 = dma.hbm_to_vmem [thread:$0]  %s166, 256, %s168, [#allocation18], 128, 128, 8
    $region45: #{tpu_custom_call.1} parent=1 // pred_fallthru
      _
    // Predicated region
    $region46: #{tpu_custom_call.1} parent=1 // pred_check
      _
    $region47: #{tpu_custom_call.1} parent=1 // pred_check_branch
      %175 = sbr.rel (0) target = $region49
    $region48: #{tpu_custom_call.1} parent=1 // pred_region
      %177 = vsyncadd [#allocation21], 0
      %s179 = sshll.u32 %s11, 4
      %s180 = int_to_ptr.hbm [resolvable:$true] %s179
      %s181 = sshll.u32 [#allocation20], 4
      %s182 = int_to_ptr.vmem [resolvable:$true] %s181
      %184 = dma.hbm_to_vmem [thread:$0]  %s180, 16, %s182, [#allocation21]
    $region49: #{tpu_custom_call.1} parent=1 // pred_fallthru
      _
    // Predicated region
    $region50: #{tpu_custom_call.1} parent=1 // pred_check
      _
    $region51: #{tpu_custom_call.1} parent=1 // pred_check_branch
      %186 = sbr.rel (0) target = $region53
    $region52: #{tpu_custom_call.1} parent=1 // pred_region
      %188 = vsyncadd [#allocation21], 0
      %s189 = sshll.u32 %s12, 4
      %s190 = int_to_ptr.hbm [resolvable:$true] %s189
      %s191 = sshll.u32 [#allocation22], 4
      %s192 = int_to_ptr.vmem [resolvable:$true] %s191
      %197 = dma.hbm_to_vmem [thread:$0]  %s190, 256, %s192, [#allocation21], 128, 128, 8
    $region53: #{tpu_custom_call.1} parent=1 // pred_fallthru
      _
    // Predicated region
    $region54: #{tpu_custom_call.1} parent=1 // pred_check
      _
    $region55: #{tpu_custom_call.1} parent=1 // pred_check_branch
      %199 = sbr.rel (0) target = $region57
    $region56: #{tpu_custom_call.1} parent=1 // pred_region
      %201 = vsyncadd [#allocation24], 0
      %s203 = sshll.u32 %s13, 4
      %s204 = int_to_ptr.hbm [resolvable:$true] %s203
      %s205 = sshll.u32 [#allocation23], 4
      %s206 = int_to_ptr.vmem [resolvable:$true] %s205
      %208 = dma.hbm_to_vmem [thread:$0]  %s204, 16, %s206, [#allocation24]
    $region57: #{tpu_custom_call.1} parent=1 // pred_fallthru
      _
    // Predicated region
    $region58: #{tpu_custom_call.1} parent=1 // pred_check
      _
    $region59: #{tpu_custom_call.1} parent=1 // pred_check_branch
      %210 = sbr.rel (0) target = $region61
    $region60: #{tpu_custom_call.1} parent=1 // pred_region
      %212 = vsyncadd [#allocation24], 0
      %s213 = sshll.u32 %s14, 4
      %s214 = int_to_ptr.hbm [resolvable:$true] %s213
      %s215 = sshll.u32 [#allocation25], 4
      %s216 = int_to_ptr.vmem [resolvable:$true] %s215
      %221 = dma.hbm_to_vmem [thread:$0]  %s214, 256, %s216, [#allocation24], 128, 128, 8
    $region61: #{tpu_custom_call.1} parent=1 // pred_fallthru
      _
    // Predicated region
    $region62: #{tpu_custom_call.1} parent=1 // pred_check
      _
    $region63: #{tpu_custom_call.1} parent=1 // pred_check_branch
      %223 = sbr.rel (0) target = $region65
    $region64: #{tpu_custom_call.1} parent=1 // pred_region
      %225 = vsyncadd [#allocation27], 0
      %s227 = sshll.u32 %s15, 4
      %s228 = int_to_ptr.hbm [resolvable:$true] %s227
      %s229 = sshll.u32 [#allocation26], 4
      %s230 = int_to_ptr.vmem [resolvable:$true] %s229
      %232 = dma.hbm_to_vmem [thread:$0]  %s228, 64, %s230, [#allocation27]
    $region65: #{tpu_custom_call.1} parent=1 // pred_fallthru
      _
    // Predicated region
    $region66: #{tpu_custom_call.1} parent=1 // pred_check
      _
    $region67: #{tpu_custom_call.1} parent=1 // pred_check_branch
      %234 = sbr.rel (0) target = $region69
    $region68: #{tpu_custom_call.1} parent=1 // pred_region
      %236 = vsyncadd [#allocation27], 0
      %s238 = sshll.u32 %s16, 4
      %s239 = int_to_ptr.hbm [resolvable:$true] %s238
      %s240 = sshll.u32 [#allocation28], 4
      %s241 = int_to_ptr.vmem [resolvable:$true] %s240
      %243 = dma.hbm_to_vmem [thread:$0]  %s239, 16, %s241, [#allocation27]
    $region69: #{tpu_custom_call.1} parent=1 // pred_fallthru
      _
    // Predicated region
    $region70: #{tpu_custom_call.1} parent=1 // pred_check
      _
    $region71: #{tpu_custom_call.1} parent=1 // pred_check_branch
      %245 = sbr.rel (0) target = $region73
    $region72: #{tpu_custom_call.1} parent=1 // pred_region
      %247 = vsyncadd [#allocation30], 0
      %s249 = sshll.u32 %s17, 4
      %s250 = int_to_ptr.hbm [resolvable:$true] %s249
      %s251 = sshll.u32 [#allocation29], 4
      %s252 = int_to_ptr.vmem [resolvable:$true] %s251
      %254 = dma.hbm_to_vmem [thread:$0]  %s250, 64, %s252, [#allocation30]
    $region73: #{tpu_custom_call.1} parent=1 // pred_fallthru
      _
    // Predicated region
    $region74: #{tpu_custom_call.1} parent=1 // pred_check
      _
    $region75: #{tpu_custom_call.1} parent=1 // pred_check_branch
      %256 = sbr.rel (0) target = $region77
    $region76: #{tpu_custom_call.1} parent=1 // pred_region
      %258 = vsyncadd [#allocation30], 0
      %s260 = sshll.u32 %s18, 4
      %s261 = int_to_ptr.hbm [resolvable:$true] %s260
      %s262 = sshll.u32 [#allocation31], 4
      %s263 = int_to_ptr.vmem [resolvable:$true] %s262
      %265 = dma.hbm_to_vmem [thread:$0]  %s261, 16, %s263, [#allocation30]
    $region77: #{tpu_custom_call.1} parent=1 // pred_fallthru
      _
    // Predicated region
    $region78: #{tpu_custom_call.1} parent=1 // pred_check
      _
    $region79: #{tpu_custom_call.1} parent=1 // pred_check_branch
      %267 = sbr.rel (0) target = $region81
    $region80: #{tpu_custom_call.1} parent=1 // pred_region
      _
    $region81: #{tpu_custom_call.1} parent=1 // pred_fallthru
      _
    // Predicated region
    $region82: #{tpu_custom_call.1} parent=1 // pred_check
      _
    $region83: #{tpu_custom_call.1} parent=1 // pred_check_branch
      %269 = sbr.rel (0) target = $region85
    $region84: #{tpu_custom_call.1} parent=1 // pred_region
      %271 = vsyncadd [#allocation33], 0
      %s273 = sshll.u32 %s20, 4
      %s274 = int_to_ptr.hbm [resolvable:$true] %s273
      %s275 = sshll.u32 [#allocation32], 4
      %s276 = int_to_ptr.vmem [resolvable:$true] %s275
      %278 = dma.hbm_to_vmem [thread:$0]  %s274, 64, %s276, [#allocation33]
    $region85: #{tpu_custom_call.1} parent=1 // pred_fallthru
      _
    // Predicated region
    $region86: #{tpu_custom_call.1} parent=1 // pred_check
      _
    $region87: #{tpu_custom_call.1} parent=1 // pred_check_branch
      %280 = sbr.rel (0) target = $region89
    $region88: #{tpu_custom_call.1} parent=1 // pred_region
      %282 = vsyncadd [#allocation33], 0
      %s284 = sshll.u32 %s21, 4
      %s285 = int_to_ptr.hbm [resolvable:$true] %s284
      %s286 = sshll.u32 [#allocation34], 4
      %s287 = int_to_ptr.vmem [resolvable:$true] %s286
      %289 = dma.hbm_to_vmem [thread:$0]  %s285, 16, %s287, [#allocation33]
    $region89: #{tpu_custom_call.1} parent=1 // pred_fallthru
      _
    // Predicated region
    $region90: #{tpu_custom_call.1} parent=1 // pred_check
      _
    $region91: #{tpu_custom_call.1} parent=1 // pred_check_branch
      %291 = sbr.rel (0) target = $region93
    $region92: #{tpu_custom_call.1} parent=1 // pred_region
      _
    $region93: #{tpu_custom_call.1} parent=1 // pred_fallthru
      _
    // Predicated region
    $region94: #{tpu_custom_call.1} parent=1 // pred_check
      _
    $region95: #{tpu_custom_call.1} parent=1 // pred_check_branch
      %293 = sbr.rel (0) target = $region97
    $region96: #{tpu_custom_call.1} parent=1 // pred_region
      _
    $region97: #{tpu_custom_call.1} parent=1 // pred_fallthru
      _
    // Predicated region
    $region98: #{tpu_custom_call.1} parent=1 // pred_check
      _
    $region99: #{tpu_custom_call.1} parent=1 // pred_check_branch
      %295 = sbr.rel (0) target = $region101
    $region100: #{tpu_custom_call.1} parent=1 // pred_region
      %297 = dma.done [#allocation3], 256
    $region101: #{tpu_custom_call.1} parent=1 // pred_fallthru
      _
    // Predicated region
    $region102: #{tpu_custom_call.1} parent=1 // pred_check
      _
    $region103: #{tpu_custom_call.1} parent=1 // pred_check_branch
      %299 = sbr.rel (0) target = $region105
    $region104: #{tpu_custom_call.1} parent=1 // pred_region
      %301 = dma.done [#allocation6], 32
    $region105: #{tpu_custom_call.1} parent=1 // pred_fallthru
      _
    // Predicated region
    $region106: #{tpu_custom_call.1} parent=1 // pred_check
      _
    $region107: #{tpu_custom_call.1} parent=1 // pred_check_branch
      %303 = sbr.rel (0) target = $region109
    $region108: #{tpu_custom_call.1} parent=1 // pred_region
      %305 = dma.done [#allocation6], 32
    $region109: #{tpu_custom_call.1} parent=1 // pred_fallthru
      _
    // Predicated region
    $region110: #{tpu_custom_call.1} parent=1 // pred_check
      _
    $region111: #{tpu_custom_call.1} parent=1 // pred_check_branch
      %307 = sbr.rel (0) target = $region113
    $region112: #{tpu_custom_call.1} parent=1 // pred_region
      %309 = dma.done [#allocation9], 32
    $region113: #{tpu_custom_call.1} parent=1 // pred_fallthru
      _
    // Predicated region
    $region114: #{tpu_custom_call.1} parent=1 // pred_check
      _
    $region115: #{tpu_custom_call.1} parent=1 // pred_check_branch
      %311 = sbr.rel (0) target = $region117
    $region116: #{tpu_custom_call.1} parent=1 // pred_region
      %313 = dma.done [#allocation9], 16
    $region117: #{tpu_custom_call.1} parent=1 // pred_fallthru
      _
    // Predicated region
    $region118: #{tpu_custom_call.1} parent=1 // pred_check
      _
    $region119: #{tpu_custom_call.1} parent=1 // pred_check_branch
      %315 = sbr.rel (0) target = $region121
    $region120: #{tpu_custom_call.1} parent=1 // pred_region
      %317 = dma.done [#allocation12], 16
    $region121: #{tpu_custom_call.1} parent=1 // pred_fallthru
      _
    // Predicated region
    $region122: #{tpu_custom_call.1} parent=1 // pred_check
      _
    $region123: #{tpu_custom_call.1} parent=1 // pred_check_branch
      %319 = sbr.rel (0) target = $region125
    $region124: #{tpu_custom_call.1} parent=1 // pred_region
      %321 = dma.done [#allocation12], 16
    $region125: #{tpu_custom_call.1} parent=1 // pred_fallthru
      _
    // Predicated region
    $region126: #{tpu_custom_call.1} parent=1 // pred_check
      _
    $region127: #{tpu_custom_call.1} parent=1 // pred_check_branch
      %323 = sbr.rel (0) target = $region129
    $region128: #{tpu_custom_call.1} parent=1 // pred_region
      %325 = dma.done [#allocation15], 16
    $region129: #{tpu_custom_call.1} parent=1 // pred_fallthru
      _
    // Predicated region
    $region130: #{tpu_custom_call.1} parent=1 // pred_check
      _
    $region131: #{tpu_custom_call.1} parent=1 // pred_check_branch
      %327 = sbr.rel (0) target = $region133
    $region132: #{tpu_custom_call.1} parent=1 // pred_region
      %329 = dma.done [#allocation15], 512
    $region133: #{tpu_custom_call.1} parent=1 // pred_fallthru
      _
    // Predicated region
    $region134: #{tpu_custom_call.1} parent=1 // pred_check
      _
    $region135: #{tpu_custom_call.1} parent=1 // pred_check_branch
      %331 = sbr.rel (0) target = $region137
    $region136: #{tpu_custom_call.1} parent=1 // pred_region
      %333 = dma.done [#allocation18], 16
    $region137: #{tpu_custom_call.1} parent=1 // pred_fallthru
      _
    // Predicated region
    $region138: #{tpu_custom_call.1} parent=1 // pred_check
      _
    $region139: #{tpu_custom_call.1} parent=1 // pred_check_branch
      %335 = sbr.rel (0) target = $region141
    $region140: #{tpu_custom_call.1} parent=1 // pred_region
      %337 = dma.done [#allocation18], 256
    $region141: #{tpu_custom_call.1} parent=1 // pred_fallthru
      _
    // Predicated region
    $region142: #{tpu_custom_call.1} parent=1 // pred_check
      _
    $region143: #{tpu_custom_call.1} parent=1 // pred_check_branch
      %339 = sbr.rel (0) target = $region145
    $region144: #{tpu_custom_call.1} parent=1 // pred_region
      %341 = dma.done [#allocation21], 16
    $region145: #{tpu_custom_call.1} parent=1 // pred_fallthru
      _
    // Predicated region
    $region146: #{tpu_custom_call.1} parent=1 // pred_check
      _
    $region147: #{tpu_custom_call.1} parent=1 // pred_check_branch
      %343 = sbr.rel (0) target = $region149
    $region148: #{tpu_custom_call.1} parent=1 // pred_region
      %345 = dma.done [#allocation21], 256
    $region149: #{tpu_custom_call.1} parent=1 // pred_fallthru
      _
    // Predicated region
    $region150: #{tpu_custom_call.1} parent=1 // pred_check
      _
    $region151: #{tpu_custom_call.1} parent=1 // pred_check_branch
      %347 = sbr.rel (0) target = $region153
    $region152: #{tpu_custom_call.1} parent=1 // pred_region
      %349 = dma.done [#allocation24], 16
    $region153: #{tpu_custom_call.1} parent=1 // pred_fallthru
      _
    // Predicated region
    $region154: #{tpu_custom_call.1} parent=1 // pred_check
      _
    $region155: #{tpu_custom_call.1} parent=1 // pred_check_branch
      %351 = sbr.rel (0) target = $region157
    $region156: #{tpu_custom_call.1} parent=1 // pred_region
      %353 = dma.done [#allocation24], 256
    $region157: #{tpu_custom_call.1} parent=1 // pred_fallthru
      _
    // Predicated region
    $region158: #{tpu_custom_call.1} parent=1 // pred_check
      _
    $region159: #{tpu_custom_call.1} parent=1 // pred_check_branch
      %355 = sbr.rel (0) target = $region161
    $region160: #{tpu_custom_call.1} parent=1 // pred_region
      %357 = dma.done [#allocation27], 64
    $region161: #{tpu_custom_call.1} parent=1 // pred_fallthru
      _
    // Predicated region
    $region162: #{tpu_custom_call.1} parent=1 // pred_check
      _
    $region163: #{tpu_custom_call.1} parent=1 // pred_check_branch
      %359 = sbr.rel (0) target = $region165
    $region164: #{tpu_custom_call.1} parent=1 // pred_region
      %361 = dma.done [#allocation27], 16
    $region165: #{tpu_custom_call.1} parent=1 // pred_fallthru
      _
    // Predicated region
    $region166: #{tpu_custom_call.1} parent=1 // pred_check
      _
    $region167: #{tpu_custom_call.1} parent=1 // pred_check_branch
      %363 = sbr.rel (0) target = $region169
    $region168: #{tpu_custom_call.1} parent=1 // pred_region
      %365 = dma.done [#allocation30], 64
    $region169: #{tpu_custom_call.1} parent=1 // pred_fallthru
      _
    // Predicated region
    $region170: #{tpu_custom_call.1} parent=1 // pred_check
      _
    $region171: #{tpu_custom_call.1} parent=1 // pred_check_branch
      %367 = sbr.rel (0) target = $region173
    $region172: #{tpu_custom_call.1} parent=1 // pred_region
      %369 = dma.done [#allocation30], 16
    $region173: #{tpu_custom_call.1} parent=1 // pred_fallthru
      _
    // Predicated region
    $region174: #{tpu_custom_call.1} parent=1 // pred_check
      _
    $region175: #{tpu_custom_call.1} parent=1 // pred_check_branch
      %371 = sbr.rel (0) target = $region177
    $region176: #{tpu_custom_call.1} parent=1 // pred_region
      %373 = dma.done [#allocation33], 64
    $region177: #{tpu_custom_call.1} parent=1 // pred_fallthru
      _
    // Predicated region
    $region178: #{tpu_custom_call.1} parent=1 // pred_check
      _
    $region179: #{tpu_custom_call.1} parent=1 // pred_check_branch
      %375 = sbr.rel (0) target = $region181
    $region180: #{tpu_custom_call.1} parent=1 // pred_region
      %377 = dma.done [#allocation33], 16
    $region181: #{tpu_custom_call.1} parent=1 // pred_fallthru
      _
    %v378 = vld [vmem:[#allocation2] sm:$0xff]
    %v379 = vld [vmem:[#allocation2 + $0x8] sm:$0xff]
    %v380 = vld [vmem:[#allocation5] sm:$0x1]
    %v381 = vld [vmem:[#allocation5 + $0x1] sm:$0x1]
    %v382 = vld [vmem:[#allocation7] sm:$0x1]
    %v383 = vld [vmem:[#allocation7 + $0x1] sm:$0x1]
    %v384 = vld [vmem:[#allocation8] sm:$0x1]
    %v385 = vld [vmem:[#allocation8 + $0x1] sm:$0x1]
    %v386 = vld [vmem:[#allocation10] sm:$0x1]
    %v387 = vld [vmem:[#allocation11] sm:$0x1]
    %vm388 = vcmask 261120
    %v389 = vsel %vm388, %v378, 0.0
    %390 = vadd.xlane.f32.xlu0 %v389
    %v391 = vpop.xlane.xlu0 %390
    %v392 = vsel %vm388, %v379, 0.0
    %393 = vadd.xlane.f32.xlu0 %v392
    %v394 = vpop.xlane.xlu0 %393
    %v395 = vrcp.pop 32.0
    %v396 = vmul.f32 32.0, %v395
    %v397 = vsub.f32 1.0, %v396
    %v398 = vmul.f32 %v395, %v397
    %v399 = vadd.f32 %v395, %v398
    %vm400 = vweird.f32 %v395
    %v401 = vsel %vm400, %v395, %v399
    %v402 = vmul.f32 %v391, %v401
    %v403 = vmul.f32 %v394, %v401
    %v404 = vsub.f32 %v378, %v402
    %v405 = vsub.f32 %v379, %v403
    %v406 = vmul.f32 %v404, %v404
    %v407 = vmul.f32 %v405, %v405
    %v408 = vsel %vm388, %v406, 0.0
    %409 = vadd.xlane.f32.xlu0 %v408
    %v410 = vpop.xlane.xlu0 %409
    %v411 = vsel %vm388, %v407, 0.0
    %412 = vadd.xlane.f32.xlu0 %v411
    %v413 = vpop.xlane.xlu0 %412
    %v414 = vmul.f32 %v410, %v401
    %v415 = vmul.f32 %v413, %v401
    %v416 = vadd.f32 %v414, 1e-05
    %v417 = vadd.f32 %v415, 1e-05
    %v418 = vrsqrt.pop %v416
    %v419 = vmul.f32 %v418, %v416
    %v420 = vmul.f32 %v419, %v418
    %v421 = vmul.f32 0.5, %v420
    %v422 = vsub.f32 1.5, %v421
    %v423 = vmul.f32 %v418, %v422
    %vm424 = vweird.f32 %v416
    %vm425 = vweird.f32 %v418
    %vm426 = vmor %vm424, %vm425
    %v427 = vsel %vm426, %v418, %v423
    %v428 = vrsqrt.pop %v417
    %v429 = vmul.f32 %v428, %v417
    %v430 = vmul.f32 %v429, %v428
    %v431 = vmul.f32 0.5, %v430
    %v432 = vsub.f32 1.5, %v431
    %v433 = vmul.f32 %v428, %v432
    %vm434 = vweird.f32 %v417
    %vm435 = vweird.f32 %v428
    %vm436 = vmor %vm434, %vm435
    %v437 = vsel %vm436, %v428, %v433
    %v438 = vmul.f32 %v404, %v427
    %v439 = vmul.f32 %v405, %v437
    %v441 = vperm.slane %v386, 0
    %v443 = vmul.f32 %v438, %v441
    %v444 = vmul.f32 %v439, %v441
    %v446 = vperm.slane %v387, 0
    %v448 = vadd.f32 %v443, %v446
    %v449 = vadd.f32 %v444, %v446
    %v450 = vadd.f32 %v382, 1.0
    %v451 = vadd.f32 %v383, 1.0
    %v454 = vperm.slane %v450, 0
    %v455 = vperm.slane %v451, 0
    %v458 = vmul.f32 %v448, %v454
    %v459 = vmul.f32 %v449, %v455
    %v462 = vperm.slane %v380, 0
    %v463 = vperm.slane %v381, 0
    %v466 = vadd.f32 %v458, %v462
    %v467 = vadd.f32 %v459, %v463
    %v468 = vld [vmem:[#allocation13] sm:$0x1]
    %v469 = vld [vmem:[#allocation14] sm:$0x1]
    %v470 = vsel %vm388, %v466, 0.0
    %471 = vadd.xlane.f32.xlu0 %v470
    %v472 = vpop.xlane.xlu0 %471
    %v473 = vsel %vm388, %v467, 0.0
    %474 = vadd.xlane.f32.xlu0 %v473
    %v475 = vpop.xlane.xlu0 %474
    %v476 = vmul.f32 %v472, %v401
    %v477 = vmul.f32 %v475, %v401
    %v478 = vsub.f32 %v466, %v476
    %v479 = vsub.f32 %v467, %v477
    %v480 = vmul.f32 %v478, %v478
    %v481 = vmul.f32 %v479, %v479
    %v482 = vsel %vm388, %v480, 0.0
    %483 = vadd.xlane.f32.xlu0 %v482
    %v484 = vpop.xlane.xlu0 %483
    %v485 = vsel %vm388, %v481, 0.0
    %486 = vadd.xlane.f32.xlu0 %v485
    %v487 = vpop.xlane.xlu0 %486
    %v488 = vmul.f32 %v484, %v401
    %v489 = vmul.f32 %v487, %v401
    %v490 = vadd.f32 %v488, 1e-05
    %v491 = vadd.f32 %v489, 1e-05
    %v492 = vrsqrt.pop %v490
    %v493 = vmul.f32 %v492, %v490
    %v494 = vmul.f32 %v493, %v492
    %v495 = vmul.f32 0.5, %v494
    %v496 = vsub.f32 1.5, %v495
    %v497 = vmul.f32 %v492, %v496
    %vm498 = vweird.f32 %v490
    %vm499 = vweird.f32 %v492
    %vm500 = vmor %vm498, %vm499
    %v501 = vsel %vm500, %v492, %v497
    %v502 = vrsqrt.pop %v491
    %v503 = vmul.f32 %v502, %v491
    %v504 = vmul.f32 %v503, %v502
    %v505 = vmul.f32 0.5, %v504
    %v506 = vsub.f32 1.5, %v505
    %v507 = vmul.f32 %v502, %v506
    %vm508 = vweird.f32 %v491
    %vm509 = vweird.f32 %v502
    %vm510 = vmor %vm508, %vm509
    %v511 = vsel %vm510, %v502, %v507
    %v512 = vmul.f32 %v478, %v501
    %v513 = vmul.f32 %v479, %v511
    %v515 = vperm.slane %v468, 0
    %v517 = vmul.f32 %v512, %v515
    %v518 = vmul.f32 %v513, %v515
    %v520 = vperm.slane %v469, 0
    %v522 = vadd.f32 %v517, %v520
    %v523 = vadd.f32 %v518, %v520
    %v524 = vld [vmem:[#allocation16] sm:$0xff]
    %v525 = vld [vmem:[#allocation16 + $0x8] sm:$0xff]
    %v526 = vld [vmem:[#allocation16 + $0x10] sm:$0xff]
    %v527 = vld [vmem:[#allocation16 + $0x18] sm:$0xff]
    %v528 = vld [vmem:[#allocation17] sm:$0x1]
    %v530 = vperm.slane %v528, 0
    %v533 = vsel %vm388, %v522, 0
    %v536 = vsel %vm388, %v523, 0
    %538 = vmatpush.msra.mxu0 0.0
    %539 = vmatpush.msra.mxu0 0.0
    %540 = vmatpush.msra.mxu0 0.0
    %541 = vmatpush.msra.mxu0 0.0
    %542 = vmatpush.msra.mxu0 0.0
    %543 = vmatpush.msra.mxu0 0.0
    %544 = vmatpush.msra.mxu0 0.0
    %545 = vmatpush.msra.mxu0 0.0
    %546 = vmatpush.msra.mxu0 0.0
    %547 = vmatpush.msra.mxu0 0.0
    %548 = vmatpush.msra.mxu0 0.0
    %549 = vmatpush.msra.mxu0 0.0
    %550 = vmatpush.msra.mxu0 %v527
    %551 = vmatpush.msra.mxu0 %v526
    %552 = vmatpush.msra.mxu0 %v525
    %553 = vmatpush.msra.mxu0 %v524
    %554 = vmatmul.f32.gmra.mxu0 %v533
    %v555 = vpop.f32.mrf.mxu0
    %v556 = vadd.f32 %v530, %v555
    %557 = vmatmul.f32.gmra.mxu0 %v536
    %v558 = vpop.f32.mrf.mxu0
    %v559 = vadd.f32 %v530, %v558
    %560 = vdwg.mxu0
    %v561 = vld [vmem:[#allocation19] sm:$0xff]
    %v562 = vld [vmem:[#allocation19 + $0x8] sm:$0xff]
    %v563 = vld [vmem:[#allocation20] sm:$0x1]
    %v565 = vperm.slane %v563, 0
    %vm567 = vcmask 130048
    %v569 = vsel %vm567, %v556, 0
    %v572 = vsel %vm567, %v559, 0
    %574 = vmatpush.msra.mxu0 0.0
    %575 = vmatpush.msra.mxu0 0.0
    %576 = vmatpush.msra.mxu0 0.0
    %577 = vmatpush.msra.mxu0 0.0
    %578 = vmatpush.msra.mxu0 0.0
    %579 = vmatpush.msra.mxu0 0.0
    %580 = vmatpush.msra.mxu0 0.0
    %581 = vmatpush.msra.mxu0 0.0
    %582 = vmatpush.msra.mxu0 0.0
    %583 = vmatpush.msra.mxu0 0.0
    %584 = vmatpush.msra.mxu0 0.0
    %585 = vmatpush.msra.mxu0 0.0
    %586 = vmatpush.msra.mxu0 0.0
    %587 = vmatpush.msra.mxu0 0.0
    %588 = vmatpush.msra.mxu0 %v562
    %589 = vmatpush.msra.mxu0 %v561
    %590 = vmatmul.f32.gmra.mxu0 %v569
    %v591 = vpop.f32.mrf.mxu0
    %v592 = vadd.f32 %v565, %v591
    %593 = vmatmul.f32.gmra.mxu0 %v572
    %v594 = vpop.f32.mrf.mxu0
    %v595 = vadd.f32 %v565, %v594
    %596 = vdwg.mxu0
    %v597 = vsub.f32 0.0, %v556
    %v598 = vsub.f32 0.0, %v559
    %v599 = vmul.f32 %v597, 1.442695
    %v600 = vpow.pop %v599
    %v601 = vmul.f32 %v598, 1.442695
    %v602 = vpow.pop %v601
    %v603 = vadd.f32 %v600, 1.0
    %v604 = vadd.f32 %v602, 1.0
    %v605 = vrcp.pop %v603
    %v606 = vmul.f32 %v603, %v605
    %v607 = vsub.f32 1.0, %v606
    %v608 = vmul.f32 %v605, %v607
    %v609 = vadd.f32 %v605, %v608
    %vm610 = vweird.f32 %v603
    %vm611 = vweird.f32 %v605
    %vm612 = vmor %vm610, %vm611
    %v613 = vsel %vm612, %v605, %v609
    %v614 = vand.u32 2147483647, %v603
    %vm615 = vcmp.eq.f32.partialorder %v614, 8.507059e+37
    %v616 = vand.u32 %v603, 2147483648
    %v617 = vor.u32 1.1754944e-38, %v616
    %v618 = vsel %vm615, %v617, %v613
    %v619 = vmul.f32 1.0, %v618
    %v620 = vrcp.pop %v604
    %v621 = vmul.f32 %v604, %v620
    %v622 = vsub.f32 1.0, %v621
    %v623 = vmul.f32 %v620, %v622
    %v624 = vadd.f32 %v620, %v623
    %vm625 = vweird.f32 %v604
    %vm626 = vweird.f32 %v620
    %vm627 = vmor %vm625, %vm626
    %v628 = vsel %vm627, %v620, %v624
    %v629 = vand.u32 2147483647, %v604
    %vm630 = vcmp.eq.f32.partialorder %v629, 8.507059e+37
    %v631 = vand.u32 %v604, 2147483648
    %v632 = vor.u32 1.1754944e-38, %v631
    %v633 = vsel %vm630, %v632, %v628
    %v634 = vmul.f32 1.0, %v633
    %v635 = vmul.f32 %v556, %v619
    %v636 = vmul.f32 %v559, %v634
    %v637 = vld [vmem:[#allocation25] sm:$0xff]
    %v638 = vld [vmem:[#allocation25 + $0x8] sm:$0xff]
    %v639 = vld [vmem:[#allocation26] sm:$0xf]
    %v640 = vld [vmem:[#allocation28] sm:$0x1]
    %v641 = vld [vmem:[#allocation29] sm:$0xf]
    %v642 = vmul.f32 %v641, 1.442695
    %v643 = vpow.pop %v642
    %v644 = vsub.f32 0.0, %v643
    %v646 = vsel %vm567, %v592, 0
    %v649 = vsel %vm567, %v595, 0
    %651 = vmatpush.msra.mxu0 0.0
    %652 = vmatpush.msra.mxu0 0.0
    %653 = vmatpush.msra.mxu0 0.0
    %654 = vmatpush.msra.mxu0 0.0
    %655 = vmatpush.msra.mxu0 0.0
    %656 = vmatpush.msra.mxu0 0.0
    %657 = vmatpush.msra.mxu0 0.0
    %658 = vmatpush.msra.mxu0 0.0
    %659 = vmatpush.msra.mxu0 0.0
    %660 = vmatpush.msra.mxu0 0.0
    %661 = vmatpush.msra.mxu0 0.0
    %662 = vmatpush.msra.mxu0 0.0
    %663 = vmatpush.msra.mxu0 0.0
    %664 = vmatpush.msra.mxu0 0.0
    %665 = vmatpush.msra.mxu0 %v638
    %666 = vmatpush.msra.mxu0 %v637
    %667 = vmatmul.f32.gmra.mxu0 %v646
    %v668 = vpop.f32.mrf.mxu0
    %v669 = vadd.f32 0.0, %v668
    %670 = vmatmul.f32.gmra.mxu0 %v649
    %v671 = vpop.f32.mrf.mxu0
    %v672 = vadd.f32 0.0, %v671
    %673 = vdwg.mxu0
    %v675 = vperm.slane %v640, 0
    %vm677 = vcmask 31744
    %v679 = vsel %vm677, %v669, 0
    %v682 = vsel %vm677, %v672, 0
    %vm684 = vcmask 1043456
    %v686 = vsel %vm684, %v639, 0
    %688 = vmatpush.msra.mxu0 0.0
    %689 = vmatpush.msra.mxu0 0.0
    %690 = vmatpush.msra.mxu0 0.0
    %691 = vmatpush.msra.mxu0 0.0
    %692 = vmatpush.msra.mxu0 0.0
    %693 = vmatpush.msra.mxu0 0.0
    %694 = vmatpush.msra.mxu0 0.0
    %695 = vmatpush.msra.mxu0 0.0
    %696 = vmatpush.msra.mxu0 0.0
    %697 = vmatpush.msra.mxu0 0.0
    %698 = vmatpush.msra.mxu0 0.0
    %699 = vmatpush.msra.mxu0 0.0
    %700 = vmatpush.msra.mxu0 0.0
    %701 = vmatpush.msra.mxu0 0.0
    %702 = vmatpush.msra.mxu0 0.0
    %703 = vmatpush.msra.mxu0 %v686
    %704 = vmatmul.f32.gmra.mxu0 %v679
    %v705 = vpop.f32.mrf.mxu0
    %v706 = vadd.f32 %v675, %v705
    %707 = vmatmul.f32.gmra.mxu0 %v682
    %v708 = vpop.f32.mrf.mxu0
    %v709 = vadd.f32 %v675, %v708
    %710 = vdwg.mxu0
    %v711 = vmax.f32 %v706, 0.0
    %v712 = vmax.f32 %v709, 0.0
    %v713 = vand.u32 2147483647, %v706
    %v714 = vand.u32 2147483647, %v709
    %v715 = vsub.f32 0.0, %v713
    %v716 = vsub.f32 0.0, %v714
    %v717 = vmul.f32 %v715, 1.442695
    %v718 = vpow.pop %v717
    %v719 = vmul.f32 %v716, 1.442695
    %v720 = vpow.pop %v719
    %v721 = vadd.f32 %v718, 1.0
    %v722 = vadd.f32 %v720, 1.0
    %v723 = vlog2.pop %v721
    %v724 = vmul.f32 %v723, 0.6931472
    %v725 = vlog2.pop %v722
    %v726 = vmul.f32 %v725, 0.6931472
    %v727 = vadd.f32 %v711, %v724
    %v728 = vadd.f32 %v712, %v726
    %v731 = vrot.slane %v727, 1
    %v732 = vrot.slane %v727, 2
    %v733 = vrot.slane %v727, 3
    %v734 = vrot.slane %v727, 4
    %v735 = vrot.slane %v727, 5
    %v736 = vrot.slane %v727, 6
    %v737 = vrot.slane %v727, 7
    %v738 = vrot.slane %v728, 1
    %v739 = vrot.slane %v728, 2
    %v740 = vrot.slane %v728, 3
    %v741 = vrot.slane %v728, 4
    %v742 = vrot.slane %v728, 5
    %v743 = vrot.slane %v728, 6
    %v744 = vrot.slane %v728, 7
    %v745 = vperm.slane %v727, 0
    %v746 = vperm.slane %v731, 0
    %v747 = vperm.slane %v732, 0
    %v748 = vperm.slane %v733, 0
    %v749 = vperm.slane %v734, 0
    %v750 = vperm.slane %v735, 0
    %v751 = vperm.slane %v736, 0
    %v752 = vperm.slane %v737, 0
    %v753 = vperm.slane %v728, 0
    %v754 = vperm.slane %v738, 0
    %v755 = vperm.slane %v739, 0
    %v756 = vperm.slane %v740, 0
    %v757 = vperm.slane %v741, 0
    %v758 = vperm.slane %v742, 0
    %v759 = vperm.slane %v743, 0
    %v760 = vperm.slane %v744, 0
    %v777 = vmul.f32 %v745, %v644
    %v778 = vmul.f32 %v746, %v644
    %v779 = vmul.f32 %v747, %v644
    %v780 = vmul.f32 %v748, %v644
    %v781 = vmul.f32 %v749, %v644
    %v782 = vmul.f32 %v750, %v644
    %v783 = vmul.f32 %v751, %v644
    %v784 = vmul.f32 %v752, %v644
    %v785 = vmul.f32 %v753, %v644
    %v786 = vmul.f32 %v754, %v644
    %v787 = vmul.f32 %v755, %v644
    %v788 = vmul.f32 %v756, %v644
    %v789 = vmul.f32 %v757, %v644
    %v790 = vmul.f32 %v758, %v644
    %v791 = vmul.f32 %v759, %v644
    %v792 = vmul.f32 %v760, %v644
    %v793 = vmul.f32 %v777, 1.442695
    %v794 = vpow.pop %v793
    %v795 = vmul.f32 %v778, 1.442695
    %v796 = vpow.pop %v795
    %v797 = vmul.f32 %v779, 1.442695
    %v798 = vpow.pop %v797
    %v799 = vmul.f32 %v780, 1.442695
    %v800 = vpow.pop %v799
    %v801 = vmul.f32 %v781, 1.442695
    %v802 = vpow.pop %v801
    %v803 = vmul.f32 %v782, 1.442695
    %v804 = vpow.pop %v803
    %v805 = vmul.f32 %v783, 1.442695
    %v806 = vpow.pop %v805
    %v807 = vmul.f32 %v784, 1.442695
    %v808 = vpow.pop %v807
    %v809 = vmul.f32 %v785, 1.442695
    %v810 = vpow.pop %v809
    %v811 = vmul.f32 %v786, 1.442695
    %v812 = vpow.pop %v811
    %v813 = vmul.f32 %v787, 1.442695
    %v814 = vpow.pop %v813
    %v815 = vmul.f32 %v788, 1.442695
    %v816 = vpow.pop %v815
    %v817 = vmul.f32 %v789, 1.442695
    %v818 = vpow.pop %v817
    %v819 = vmul.f32 %v790, 1.442695
    %v820 = vpow.pop %v819
    %v821 = vmul.f32 %v791, 1.442695
    %v822 = vpow.pop %v821
    %v823 = vmul.f32 %v792, 1.442695
    %v824 = vpow.pop %v823
    %v825 = vperm.slane %v669, 0
    %v826 = vlaneseq
    %v827 = vshrl.u32 %v826, 7
    %v828 = vadd.s32 %v827, 4
    %829 = vset.pattern.permute.xlu0 %v828
    %830 = vperm.xlu0 %829, %v825
    %v831 = vpop.permute.xlu0 %830
    %v832 = vperm.slane %v669, 1
    %v833 = vlaneseq
    %v834 = vshrl.u32 %v833, 7
    %v835 = vadd.s32 %v834, 4
    %836 = vset.pattern.permute.xlu0 %v835
    %837 = vperm.xlu0 %836, %v832
    %v838 = vpop.permute.xlu0 %837
    %v839 = vperm.slane %v669, 2
    %v840 = vlaneseq
    %v841 = vshrl.u32 %v840, 7
    %v842 = vadd.s32 %v841, 4
    %843 = vset.pattern.permute.xlu0 %v842
    %844 = vperm.xlu0 %843, %v839
    %v845 = vpop.permute.xlu0 %844
    %v846 = vperm.slane %v669, 3
    %v847 = vlaneseq
    %v848 = vshrl.u32 %v847, 7
    %v849 = vadd.s32 %v848, 4
    %850 = vset.pattern.permute.xlu0 %v849
    %851 = vperm.xlu0 %850, %v846
    %v852 = vpop.permute.xlu0 %851
    %v853 = vperm.slane %v669, 4
    %v854 = vlaneseq
    %v855 = vshrl.u32 %v854, 7
    %v856 = vadd.s32 %v855, 4
    %857 = vset.pattern.permute.xlu0 %v856
    %858 = vperm.xlu0 %857, %v853
    %v859 = vpop.permute.xlu0 %858
    %v860 = vperm.slane %v669, 5
    %v861 = vlaneseq
    %v862 = vshrl.u32 %v861, 7
    %v863 = vadd.s32 %v862, 4
    %864 = vset.pattern.permute.xlu0 %v863
    %865 = vperm.xlu0 %864, %v860
    %v866 = vpop.permute.xlu0 %865
    %v867 = vperm.slane %v669, 6
    %v868 = vlaneseq
    %v869 = vshrl.u32 %v868, 7
    %v870 = vadd.s32 %v869, 4
    %871 = vset.pattern.permute.xlu0 %v870
    %872 = vperm.xlu0 %871, %v867
    %v873 = vpop.permute.xlu0 %872
    %v874 = vperm.slane %v669, 7
    %v875 = vlaneseq
    %v876 = vshrl.u32 %v875, 7
    %v877 = vadd.s32 %v876, 4
    %878 = vset.pattern.permute.xlu0 %v877
    %879 = vperm.xlu0 %878, %v874
    %v880 = vpop.permute.xlu0 %879
    %v881 = vperm.slane %v672, 0
    %v882 = vlaneseq
    %v883 = vshrl.u32 %v882, 7
    %v884 = vadd.s32 %v883, 4
    %885 = vset.pattern.permute.xlu0 %v884
    %886 = vperm.xlu0 %885, %v881
    %v887 = vpop.permute.xlu0 %886
    %v888 = vperm.slane %v672, 1
    %v889 = vlaneseq
    %v890 = vshrl.u32 %v889, 7
    %v891 = vadd.s32 %v890, 4
    %892 = vset.pattern.permute.xlu0 %v891
    %893 = vperm.xlu0 %892, %v888
    %v894 = vpop.permute.xlu0 %893
    %v895 = vperm.slane %v672, 2
    %v896 = vlaneseq
    %v897 = vshrl.u32 %v896, 7
    %v898 = vadd.s32 %v897, 4
    %899 = vset.pattern.permute.xlu0 %v898
    %900 = vperm.xlu0 %899, %v895
    %v901 = vpop.permute.xlu0 %900
    %v902 = vperm.slane %v672, 3
    %v903 = vlaneseq
    %v904 = vshrl.u32 %v903, 7
    %v905 = vadd.s32 %v904, 4
    %906 = vset.pattern.permute.xlu0 %v905
    %907 = vperm.xlu0 %906, %v902
    %v908 = vpop.permute.xlu0 %907
    %v909 = vperm.slane %v672, 4
    %v910 = vlaneseq
    %v911 = vshrl.u32 %v910, 7
    %v912 = vadd.s32 %v911, 4
    %913 = vset.pattern.permute.xlu0 %v912
    %914 = vperm.xlu0 %913, %v909
    %v915 = vpop.permute.xlu0 %914
    %v916 = vperm.slane %v672, 5
    %v917 = vlaneseq
    %v918 = vshrl.u32 %v917, 7
    %v919 = vadd.s32 %v918, 4
    %920 = vset.pattern.permute.xlu0 %v919
    %921 = vperm.xlu0 %920, %v916
    %v922 = vpop.permute.xlu0 %921
    %v923 = vperm.slane %v672, 6
    %v924 = vlaneseq
    %v925 = vshrl.u32 %v924, 7
    %v926 = vadd.s32 %v925, 4
    %927 = vset.pattern.permute.xlu0 %v926
    %928 = vperm.xlu0 %927, %v923
    %v929 = vpop.permute.xlu0 %928
    %v930 = vperm.slane %v672, 7
    %v931 = vlaneseq
    %v932 = vshrl.u32 %v931, 7
    %v933 = vadd.s32 %v932, 4
    %934 = vset.pattern.permute.xlu0 %v933
    %935 = vperm.xlu0 %934, %v930
    %v936 = vpop.permute.xlu0 %935
    %v937 = vmul.f32 %v727, %v592
    %v938 = vmul.f32 %v728, %v595
    %v941 = vrot.slane %v937, 1
    %v942 = vrot.slane %v937, 2
    %v943 = vrot.slane %v937, 3
    %v944 = vrot.slane %v937, 4
    %v945 = vrot.slane %v937, 5
    %v946 = vrot.slane %v937, 6
    %v947 = vrot.slane %v937, 7
    %v948 = vrot.slane %v938, 1
    %v949 = vrot.slane %v938, 2
    %v950 = vrot.slane %v938, 3
    %v951 = vrot.slane %v938, 4
    %v952 = vrot.slane %v938, 5
    %v953 = vrot.slane %v938, 6
    %v954 = vrot.slane %v938, 7
    %v955 = vperm.slane %v937, 0
    %v956 = vperm.slane %v941, 0
    %v957 = vperm.slane %v942, 0
    %v958 = vperm.slane %v943, 0
    %v959 = vperm.slane %v944, 0
    %v960 = vperm.slane %v945, 0
    %v961 = vperm.slane %v946, 0
    %v962 = vperm.slane %v947, 0
    %v963 = vperm.slane %v938, 0
    %v964 = vperm.slane %v948, 0
    %v965 = vperm.slane %v949, 0
    %v966 = vperm.slane %v950, 0
    %v967 = vperm.slane %v951, 0
    %v968 = vperm.slane %v952, 0
    %v969 = vperm.slane %v953, 0
    %v970 = vperm.slane %v954, 0
    %v987 = vmul.f32 %v831, %v955
    %v988 = vmul.f32 %v838, %v956
    %v989 = vmul.f32 %v845, %v957
    %v990 = vmul.f32 %v852, %v958
    %v991 = vmul.f32 %v859, %v959
    %v992 = vmul.f32 %v866, %v960
    %v993 = vmul.f32 %v873, %v961
    %v994 = vmul.f32 %v880, %v962
    %v995 = vmul.f32 %v887, %v963
    %v996 = vmul.f32 %v894, %v964
    %v997 = vmul.f32 %v901, %v965
    %v998 = vmul.f32 %v908, %v966
    %v999 = vmul.f32 %v915, %v967
    %v1000 = vmul.f32 %v922, %v968
    %v1001 = vmul.f32 %v929, %v969
    %v1002 = vmul.f32 %v936, %v970
    %v1003 = vlaneseq
    %v1004 = vshrl.u32 %v1003, 7
    %v1005 = vadd.s32 %v1004, 8
    %1006 = vset.pattern.permute.xlu0 %v1005
    %1007 = vperm.xlu0 %1006, %v825
    %v1008 = vpop.permute.xlu0 %1007
    %v1009 = vlaneseq
    %v1010 = vshrl.u32 %v1009, 7
    %v1011 = vadd.s32 %v1010, 8
    %1012 = vset.pattern.permute.xlu0 %v1011
    %1013 = vperm.xlu0 %1012, %v832
    %v1014 = vpop.permute.xlu0 %1013
    %v1015 = vlaneseq
    %v1016 = vshrl.u32 %v1015, 7
    %v1017 = vadd.s32 %v1016, 8
    %1018 = vset.pattern.permute.xlu0 %v1017
    %1019 = vperm.xlu0 %1018, %v839
    %v1020 = vpop.permute.xlu0 %1019
    %v1021 = vlaneseq
    %v1022 = vshrl.u32 %v1021, 7
    %v1023 = vadd.s32 %v1022, 8
    %1024 = vset.pattern.permute.xlu0 %v1023
    %1025 = vperm.xlu0 %1024, %v846
    %v1026 = vpop.permute.xlu0 %1025
    %v1027 = vlaneseq
    %v1028 = vshrl.u32 %v1027, 7
    %v1029 = vadd.s32 %v1028, 8
    %1030 = vset.pattern.permute.xlu0 %v1029
    %1031 = vperm.xlu0 %1030, %v853
    %v1032 = vpop.permute.xlu0 %1031
    %v1033 = vlaneseq
    %v1034 = vshrl.u32 %v1033, 7
    %v1035 = vadd.s32 %v1034, 8
    %1036 = vset.pattern.permute.xlu0 %v1035
    %1037 = vperm.xlu0 %1036, %v860
    %v1038 = vpop.permute.xlu0 %1037
    %v1039 = vlaneseq
    %v1040 = vshrl.u32 %v1039, 7
    %v1041 = vadd.s32 %v1040, 8
    %1042 = vset.pattern.permute.xlu0 %v1041
    %1043 = vperm.xlu0 %1042, %v867
    %v1044 = vpop.permute.xlu0 %1043
    %v1045 = vlaneseq
    %v1046 = vshrl.u32 %v1045, 7
    %v1047 = vadd.s32 %v1046, 8
    %1048 = vset.pattern.permute.xlu0 %v1047
    %1049 = vperm.xlu0 %1048, %v874
    %v1050 = vpop.permute.xlu0 %1049
    %v1051 = vlaneseq
    %v1052 = vshrl.u32 %v1051, 7
    %v1053 = vadd.s32 %v1052, 8
    %1054 = vset.pattern.permute.xlu0 %v1053
    %1055 = vperm.xlu0 %1054, %v881
    %v1056 = vpop.permute.xlu0 %1055
    %v1057 = vlaneseq
    %v1058 = vshrl.u32 %v1057, 7
    %v1059 = vadd.s32 %v1058, 8
    %1060 = vset.pattern.permute.xlu0 %v1059
    %1061 = vperm.xlu0 %1060, %v888
    %v1062 = vpop.permute.xlu0 %1061
    %v1063 = vlaneseq
    %v1064 = vshrl.u32 %v1063, 7
    %v1065 = vadd.s32 %v1064, 8
    %1066 = vset.pattern.permute.xlu0 %v1065
    %1067 = vperm.xlu0 %1066, %v895
    %v1068 = vpop.permute.xlu0 %1067
    %v1069 = vlaneseq
    %v1070 = vshrl.u32 %v1069, 7
    %v1071 = vadd.s32 %v1070, 8
    %1072 = vset.pattern.permute.xlu0 %v1071
    %1073 = vperm.xlu0 %1072, %v902
    %v1074 = vpop.permute.xlu0 %1073
    %v1075 = vlaneseq
    %v1076 = vshrl.u32 %v1075, 7
    %v1077 = vadd.s32 %v1076, 8
    %1078 = vset.pattern.permute.xlu0 %v1077
    %1079 = vperm.xlu0 %1078, %v909
    %v1080 = vpop.permute.xlu0 %1079
    %v1081 = vlaneseq
    %v1082 = vshrl.u32 %v1081, 7
    %v1083 = vadd.s32 %v1082, 8
    %1084 = vset.pattern.permute.xlu0 %v1083
    %1085 = vperm.xlu0 %1084, %v916
    %v1086 = vpop.permute.xlu0 %1085
    %v1087 = vlaneseq
    %v1088 = vshrl.u32 %v1087, 7
    %v1089 = vadd.s32 %v1088, 8
    %1090 = vset.pattern.permute.xlu0 %v1089
    %1091 = vperm.xlu0 %1090, %v923
    %v1092 = vpop.permute.xlu0 %1091
    %v1093 = vlaneseq
    %v1094 = vshrl.u32 %v1093, 7
    %v1095 = vadd.s32 %v1094, 8
    %1096 = vset.pattern.permute.xlu0 %v1095
    %1097 = vperm.xlu0 %1096, %v930
    %v1098 = vpop.permute.xlu0 %1097
    %v1099 = vld [vmem:[%s19] sm:$0xff]
    %v1100 = vld [vmem:[%s19 + $0x8] sm:$0xff]
    %v1101 = vld [vmem:[#allocation32] sm:$0xf]
    %v1102 = vld [vmem:[#allocation34] sm:$0x1]
    %v1103 = vld [vmem:[%s22] sm:$0xf]
    %v1104 = vmul.f32 %v1103, 1.442695
    %v1105 = vpow.pop %v1104
    %v1106 = vsub.f32 0.0, %v1105
    %1107 = vrot.lane.b32.xlu0 %v592, 112
    %v1108 = vpop.permute.xlu0 %1107
    %1109 = vrot.lane.b32.xlu0 %v595, 112
    %v1110 = vpop.permute.xlu0 %1109
    %v1111 = vsel %vm567, %v1108, 0
    %v1113 = vsel %vm567, %v1110, 0
    %1115 = vmatpush.msra.mxu0 0.0
    %1116 = vmatpush.msra.mxu0 0.0
    %1117 = vmatpush.msra.mxu0 0.0
    %1118 = vmatpush.msra.mxu0 0.0
    %1119 = vmatpush.msra.mxu0 0.0
    %1120 = vmatpush.msra.mxu0 0.0
    %1121 = vmatpush.msra.mxu0 0.0
    %1122 = vmatpush.msra.mxu0 0.0
    %1123 = vmatpush.msra.mxu0 0.0
    %1124 = vmatpush.msra.mxu0 0.0
    %1125 = vmatpush.msra.mxu0 0.0
    %1126 = vmatpush.msra.mxu0 0.0
    %1127 = vmatpush.msra.mxu0 0.0
    %1128 = vmatpush.msra.mxu0 0.0
    %1129 = vmatpush.msra.mxu0 %v1100
    %1130 = vmatpush.msra.mxu0 %v1099
    %1131 = vmatmul.f32.gmra.mxu0 %v1111
    %v1132 = vpop.f32.mrf.mxu0
    %v1133 = vadd.f32 0.0, %v1132
    %1134 = vmatmul.f32.gmra.mxu0 %v1113
    %v1135 = vpop.f32.mrf.mxu0
    %v1136 = vadd.f32 0.0, %v1135
    %1137 = vdwg.mxu0
    %v1139 = vperm.slane %v1102, 0
    %v1142 = vsel %vm677, %v1133, 0
    %v1145 = vsel %vm677, %v1136, 0
    %v1148 = vsel %vm684, %v1101, 0
    %1150 = vmatpush.msra.mxu0 0.0
    %1151 = vmatpush.msra.mxu0 0.0
    %1152 = vmatpush.msra.mxu0 0.0
    %1153 = vmatpush.msra.mxu0 0.0
    %1154 = vmatpush.msra.mxu0 0.0
    %1155 = vmatpush.msra.mxu0 0.0
    %1156 = vmatpush.msra.mxu0 0.0
    %1157 = vmatpush.msra.mxu0 0.0
    %1158 = vmatpush.msra.mxu0 0.0
    %1159 = vmatpush.msra.mxu0 0.0
    %1160 = vmatpush.msra.mxu0 0.0
    %1161 = vmatpush.msra.mxu0 0.0
    %1162 = vmatpush.msra.mxu0 0.0
    %1163 = vmatpush.msra.mxu0 0.0
    %1164 = vmatpush.msra.mxu0 0.0
    %1165 = vmatpush.msra.mxu0 %v1148
    %1166 = vmatmul.f32.gmra.mxu0 %v1142
    %v1167 = vpop.f32.mrf.mxu0
    %v1168 = vadd.f32 %v1139, %v1167
    %1169 = vmatmul.f32.gmra.mxu0 %v1145
    %v1170 = vpop.f32.mrf.mxu0
    %v1171 = vadd.f32 %v1139, %v1170
    %1172 = vdwg.mxu0
    %v1173 = vmax.f32 %v1168, 0.0
    %v1174 = vmax.f32 %v1171, 0.0
    %v1175 = vand.u32 2147483647, %v1168
    %v1176 = vand.u32 2147483647, %v1171
    %v1177 = vsub.f32 0.0, %v1175
    %v1178 = vsub.f32 0.0, %v1176
    %v1179 = vmul.f32 %v1177, 1.442695
    %v1180 = vpow.pop %v1179
    %v1181 = vmul.f32 %v1178, 1.442695
    %v1182 = vpow.pop %v1181
    %v1183 = vadd.f32 %v1180, 1.0
    %v1184 = vadd.f32 %v1182, 1.0
    %v1185 = vlog2.pop %v1183
    %v1186 = vmul.f32 %v1185, 0.6931472
    %v1187 = vlog2.pop %v1184
    %v1188 = vmul.f32 %v1187, 0.6931472
    %v1189 = vadd.f32 %v1173, %v1186
    %v1190 = vadd.f32 %v1174, %v1188
    %v1193 = vrot.slane %v1189, 1
    %v1194 = vrot.slane %v1189, 2
    %v1195 = vrot.slane %v1189, 3
    %v1196 = vrot.slane %v1189, 4
    %v1197 = vrot.slane %v1189, 5
    %v1198 = vrot.slane %v1189, 6
    %v1199 = vrot.slane %v1189, 7
    %v1200 = vrot.slane %v1190, 1
    %v1201 = vrot.slane %v1190, 2
    %v1202 = vrot.slane %v1190, 3
    %v1203 = vrot.slane %v1190, 4
    %v1204 = vrot.slane %v1190, 5
    %v1205 = vrot.slane %v1190, 6
    %v1206 = vrot.slane %v1190, 7
    %v1207 = vperm.slane %v1189, 0
    %v1208 = vperm.slane %v1193, 0
    %v1209 = vperm.slane %v1194, 0
    %v1210 = vperm.slane %v1195, 0
    %v1211 = vperm.slane %v1196, 0
    %v1212 = vperm.slane %v1197, 0
    %v1213 = vperm.slane %v1198, 0
    %v1214 = vperm.slane %v1199, 0
    %v1215 = vperm.slane %v1190, 0
    %v1216 = vperm.slane %v1200, 0
    %v1217 = vperm.slane %v1201, 0
    %v1218 = vperm.slane %v1202, 0
    %v1219 = vperm.slane %v1203, 0
    %v1220 = vperm.slane %v1204, 0
    %v1221 = vperm.slane %v1205, 0
    %v1222 = vperm.slane %v1206, 0
    %v1239 = vmul.f32 %v1207, %v1106
    %v1240 = vmul.f32 %v1208, %v1106
    %v1241 = vmul.f32 %v1209, %v1106
    %v1242 = vmul.f32 %v1210, %v1106
    %v1243 = vmul.f32 %v1211, %v1106
    %v1244 = vmul.f32 %v1212, %v1106
    %v1245 = vmul.f32 %v1213, %v1106
    %v1246 = vmul.f32 %v1214, %v1106
    %v1247 = vmul.f32 %v1215, %v1106
    %v1248 = vmul.f32 %v1216, %v1106
    %v1249 = vmul.f32 %v1217, %v1106
    %v1250 = vmul.f32 %v1218, %v1106
    %v1251 = vmul.f32 %v1219, %v1106
    %v1252 = vmul.f32 %v1220, %v1106
    %v1253 = vmul.f32 %v1221, %v1106
    %v1254 = vmul.f32 %v1222, %v1106
    %v1255 = vmul.f32 %v1239, 1.442695
    %v1256 = vpow.pop %v1255
    %v1257 = vmul.f32 %v1240, 1.442695
    %v1258 = vpow.pop %v1257
    %v1259 = vmul.f32 %v1241, 1.442695
    %v1260 = vpow.pop %v1259
    %v1261 = vmul.f32 %v1242, 1.442695
    %v1262 = vpow.pop %v1261
    %v1263 = vmul.f32 %v1243, 1.442695
    %v1264 = vpow.pop %v1263
    %v1265 = vmul.f32 %v1244, 1.442695
    %v1266 = vpow.pop %v1265
    %v1267 = vmul.f32 %v1245, 1.442695
    %v1268 = vpow.pop %v1267
    %v1269 = vmul.f32 %v1246, 1.442695
    %v1270 = vpow.pop %v1269
    %v1271 = vmul.f32 %v1247, 1.442695
    %v1272 = vpow.pop %v1271
    %v1273 = vmul.f32 %v1248, 1.442695
    %v1274 = vpow.pop %v1273
    %v1275 = vmul.f32 %v1249, 1.442695
    %v1276 = vpow.pop %v1275
    %v1277 = vmul.f32 %v1250, 1.442695
    %v1278 = vpow.pop %v1277
    %v1279 = vmul.f32 %v1251, 1.442695
    %v1280 = vpow.pop %v1279
    %v1281 = vmul.f32 %v1252, 1.442695
    %v1282 = vpow.pop %v1281
    %v1283 = vmul.f32 %v1253, 1.442695
    %v1284 = vpow.pop %v1283
    %v1285 = vmul.f32 %v1254, 1.442695
    %v1286 = vpow.pop %v1285
    %v1287 = vperm.slane %v1133, 0
    %v1288 = vlaneseq
    %v1289 = vshrl.u32 %v1288, 7
    %v1290 = vadd.s32 %v1289, 4
    %1291 = vset.pattern.permute.xlu0 %v1290
    %1292 = vperm.xlu0 %1291, %v1287
    %v1293 = vpop.permute.xlu0 %1292
    %v1294 = vperm.slane %v1133, 1
    %v1295 = vlaneseq
    %v1296 = vshrl.u32 %v1295, 7
    %v1297 = vadd.s32 %v1296, 4
    %1298 = vset.pattern.permute.xlu0 %v1297
    %1299 = vperm.xlu0 %1298, %v1294
    %v1300 = vpop.permute.xlu0 %1299
    %v1301 = vperm.slane %v1133, 2
    %v1302 = vlaneseq
    %v1303 = vshrl.u32 %v1302, 7
    %v1304 = vadd.s32 %v1303, 4
    %1305 = vset.pattern.permute.xlu0 %v1304
    %1306 = vperm.xlu0 %1305, %v1301
    %v1307 = vpop.permute.xlu0 %1306
    %v1308 = vperm.slane %v1133, 3
    %v1309 = vlaneseq
    %v1310 = vshrl.u32 %v1309, 7
    %v1311 = vadd.s32 %v1310, 4
    %1312 = vset.pattern.permute.xlu0 %v1311
    %1313 = vperm.xlu0 %1312, %v1308
    %v1314 = vpop.permute.xlu0 %1313
    %v1315 = vperm.slane %v1133, 4
    %v1316 = vlaneseq
    %v1317 = vshrl.u32 %v1316, 7
    %v1318 = vadd.s32 %v1317, 4
    %1319 = vset.pattern.permute.xlu0 %v1318
    %1320 = vperm.xlu0 %1319, %v1315
    %v1321 = vpop.permute.xlu0 %1320
    %v1322 = vperm.slane %v1133, 5
    %v1323 = vlaneseq
    %v1324 = vshrl.u32 %v1323, 7
    %v1325 = vadd.s32 %v1324, 4
    %1326 = vset.pattern.permute.xlu0 %v1325
    %1327 = vperm.xlu0 %1326, %v1322
    %v1328 = vpop.permute.xlu0 %1327
    %v1329 = vperm.slane %v1133, 6
    %v1330 = vlaneseq
    %v1331 = vshrl.u32 %v1330, 7
    %v1332 = vadd.s32 %v1331, 4
    %1333 = vset.pattern.permute.xlu0 %v1332
    %1334 = vperm.xlu0 %1333, %v1329
    %v1335 = vpop.permute.xlu0 %1334
    %v1336 = vperm.slane %v1133, 7
    %v1337 = vlaneseq
    %v1338 = vshrl.u32 %v1337, 7
    %v1339 = vadd.s32 %v1338, 4
    %1340 = vset.pattern.permute.xlu0 %v1339
    %1341 = vperm.xlu0 %1340, %v1336
    %v1342 = vpop.permute.xlu0 %1341
    %v1343 = vperm.slane %v1136, 0
    %v1344 = vlaneseq
    %v1345 = vshrl.u32 %v1344, 7
    %v1346 = vadd.s32 %v1345, 4
    %1347 = vset.pattern.permute.xlu0 %v1346
    %1348 = vperm.xlu0 %1347, %v1343
    %v1349 = vpop.permute.xlu0 %1348
    %v1350 = vperm.slane %v1136, 1
    %v1351 = vlaneseq
    %v1352 = vshrl.u32 %v1351, 7
    %v1353 = vadd.s32 %v1352, 4
    %1354 = vset.pattern.permute.xlu0 %v1353
    %1355 = vperm.xlu0 %1354, %v1350
    %v1356 = vpop.permute.xlu0 %1355
    %v1357 = vperm.slane %v1136, 2
    %v1358 = vlaneseq
    %v1359 = vshrl.u32 %v1358, 7
    %v1360 = vadd.s32 %v1359, 4
    %1361 = vset.pattern.permute.xlu0 %v1360
    %1362 = vperm.xlu0 %1361, %v1357
    %v1363 = vpop.permute.xlu0 %1362
    %v1364 = vperm.slane %v1136, 3
    %v1365 = vlaneseq
    %v1366 = vshrl.u32 %v1365, 7
    %v1367 = vadd.s32 %v1366, 4
    %1368 = vset.pattern.permute.xlu0 %v1367
    %1369 = vperm.xlu0 %1368, %v1364
    %v1370 = vpop.permute.xlu0 %1369
    %v1371 = vperm.slane %v1136, 4
    %v1372 = vlaneseq
    %v1373 = vshrl.u32 %v1372, 7
    %v1374 = vadd.s32 %v1373, 4
    %1375 = vset.pattern.permute.xlu0 %v1374
    %1376 = vperm.xlu0 %1375, %v1371
    %v1377 = vpop.permute.xlu0 %1376
    %v1378 = vperm.slane %v1136, 5
    %v1379 = vlaneseq
    %v1380 = vshrl.u32 %v1379, 7
    %v1381 = vadd.s32 %v1380, 4
    %1382 = vset.pattern.permute.xlu0 %v1381
    %1383 = vperm.xlu0 %1382, %v1378
    %v1384 = vpop.permute.xlu0 %1383
    %v1385 = vperm.slane %v1136, 6
    %v1386 = vlaneseq
    %v1387 = vshrl.u32 %v1386, 7
    %v1388 = vadd.s32 %v1387, 4
    %1389 = vset.pattern.permute.xlu0 %v1388
    %1390 = vperm.xlu0 %1389, %v1385
    %v1391 = vpop.permute.xlu0 %1390
    %v1392 = vperm.slane %v1136, 7
    %v1393 = vlaneseq
    %v1394 = vshrl.u32 %v1393, 7
    %v1395 = vadd.s32 %v1394, 4
    %1396 = vset.pattern.permute.xlu0 %v1395
    %1397 = vperm.xlu0 %1396, %v1392
    %v1398 = vpop.permute.xlu0 %1397
    %v1401 = vmul.f32 %v1189, %v1108
    %v1402 = vmul.f32 %v1190, %v1110
    %v1405 = vrot.slane %v1401, 1
    %v1406 = vrot.slane %v1401, 2
    %v1407 = vrot.slane %v1401, 3
    %v1408 = vrot.slane %v1401, 4
    %v1409 = vrot.slane %v1401, 5
    %v1410 = vrot.slane %v1401, 6
    %v1411 = vrot.slane %v1401, 7
    %v1412 = vrot.slane %v1402, 1
    %v1413 = vrot.slane %v1402, 2
    %v1414 = vrot.slane %v1402, 3
    %v1415 = vrot.slane %v1402, 4
    %v1416 = vrot.slane %v1402, 5
    %v1417 = vrot.slane %v1402, 6
    %v1418 = vrot.slane %v1402, 7
    %v1419 = vperm.slane %v1401, 0
    %v1420 = vperm.slane %v1405, 0
    %v1421 = vperm.slane %v1406, 0
    %v1422 = vperm.slane %v1407, 0
    %v1423 = vperm.slane %v1408, 0
    %v1424 = vperm.slane %v1409, 0
    %v1425 = vperm.slane %v1410, 0
    %v1426 = vperm.slane %v1411, 0
    %v1427 = vperm.slane %v1402, 0
    %v1428 = vperm.slane %v1412, 0
    %v1429 = vperm.slane %v1413, 0
    %v1430 = vperm.slane %v1414, 0
    %v1431 = vperm.slane %v1415, 0
    %v1432 = vperm.slane %v1416, 0
    %v1433 = vperm.slane %v1417, 0
    %v1434 = vperm.slane %v1418, 0
    %v1451 = vmul.f32 %v1293, %v1419
    %v1452 = vmul.f32 %v1300, %v1420
    %v1453 = vmul.f32 %v1307, %v1421
    %v1454 = vmul.f32 %v1314, %v1422
    %v1455 = vmul.f32 %v1321, %v1423
    %v1456 = vmul.f32 %v1328, %v1424
    %v1457 = vmul.f32 %v1335, %v1425
    %v1458 = vmul.f32 %v1342, %v1426
    %v1459 = vmul.f32 %v1349, %v1427
    %v1460 = vmul.f32 %v1356, %v1428
    %v1461 = vmul.f32 %v1363, %v1429
    %v1462 = vmul.f32 %v1370, %v1430
    %v1463 = vmul.f32 %v1377, %v1431
    %v1464 = vmul.f32 %v1384, %v1432
    %v1465 = vmul.f32 %v1391, %v1433
    %v1466 = vmul.f32 %v1398, %v1434
    %v1467 = vlaneseq
    %v1468 = vshrl.u32 %v1467, 7
    %v1469 = vadd.s32 %v1468, 8
    %1470 = vset.pattern.permute.xlu0 %v1469
    %1471 = vperm.xlu0 %1470, %v1287
    %v1472 = vpop.permute.xlu0 %1471
    %v1473 = vlaneseq
    %v1474 = vshrl.u32 %v1473, 7
    %v1475 = vadd.s32 %v1474, 8
    %1476 = vset.pattern.permute.xlu0 %v1475
    %1477 = vperm.xlu0 %1476, %v1294
    %v1478 = vpop.permute.xlu0 %1477
    %v1479 = vlaneseq
    %v1480 = vshrl.u32 %v1479, 7
    %v1481 = vadd.s32 %v1480, 8
    %1482 = vset.pattern.permute.xlu0 %v1481
    %1483 = vperm.xlu0 %1482, %v1301
    %v1484 = vpop.permute.xlu0 %1483
    %v1485 = vlaneseq
    %v1486 = vshrl.u32 %v1485, 7
    %v1487 = vadd.s32 %v1486, 8
    %1488 = vset.pattern.permute.xlu0 %v1487
    %1489 = vperm.xlu0 %1488, %v1308
    %v1490 = vpop.permute.xlu0 %1489
    %v1491 = vlaneseq
    %v1492 = vshrl.u32 %v1491, 7
    %v1493 = vadd.s32 %v1492, 8
    %1494 = vset.pattern.permute.xlu0 %v1493
    %1495 = vperm.xlu0 %1494, %v1315
    %v1496 = vpop.permute.xlu0 %1495
    %v1497 = vlaneseq
    %v1498 = vshrl.u32 %v1497, 7
    %v1499 = vadd.s32 %v1498, 8
    %1500 = vset.pattern.permute.xlu0 %v1499
    %1501 = vperm.xlu0 %1500, %v1322
    %v1502 = vpop.permute.xlu0 %1501
    %v1503 = vlaneseq
    %v1504 = vshrl.u32 %v1503, 7
    %v1505 = vadd.s32 %v1504, 8
    %1506 = vset.pattern.permute.xlu0 %v1505
    %1507 = vperm.xlu0 %1506, %v1329
    %v1508 = vpop.permute.xlu0 %1507
    %v1509 = vlaneseq
    %v1510 = vshrl.u32 %v1509, 7
    %v1511 = vadd.s32 %v1510, 8
    %1512 = vset.pattern.permute.xlu0 %v1511
    %1513 = vperm.xlu0 %1512, %v1336
    %v1514 = vpop.permute.xlu0 %1513
    %v1515 = vlaneseq
    %v1516 = vshrl.u32 %v1515, 7
    %v1517 = vadd.s32 %v1516, 8
    %1518 = vset.pattern.permute.xlu0 %v1517
    %1519 = vperm.xlu0 %1518, %v1343
    %v1520 = vpop.permute.xlu0 %1519
    %v1521 = vlaneseq
    %v1522 = vshrl.u32 %v1521, 7
    %v1523 = vadd.s32 %v1522, 8
    %1524 = vset.pattern.permute.xlu0 %v1523
    %1525 = vperm.xlu0 %1524, %v1350
    %v1526 = vpop.permute.xlu0 %1525
    %v1527 = vlaneseq
    %v1528 = vshrl.u32 %v1527, 7
    %v1529 = vadd.s32 %v1528, 8
    %1530 = vset.pattern.permute.xlu0 %v1529
    %1531 = vperm.xlu0 %1530, %v1357
    %v1532 = vpop.permute.xlu0 %1531
    %v1533 = vlaneseq
    %v1534 = vshrl.u32 %v1533, 7
    %v1535 = vadd.s32 %v1534, 8
    %1536 = vset.pattern.permute.xlu0 %v1535
    %1537 = vperm.xlu0 %1536, %v1364
    %v1538 = vpop.permute.xlu0 %1537
    %v1539 = vlaneseq
    %v1540 = vshrl.u32 %v1539, 7
    %v1541 = vadd.s32 %v1540, 8
    %1542 = vset.pattern.permute.xlu0 %v1541
    %1543 = vperm.xlu0 %1542, %v1371
    %v1544 = vpop.permute.xlu0 %1543
    %v1545 = vlaneseq
    %v1546 = vshrl.u32 %v1545, 7
    %v1547 = vadd.s32 %v1546, 8
    %1548 = vset.pattern.permute.xlu0 %v1547
    %1549 = vperm.xlu0 %1548, %v1378
    %v1550 = vpop.permute.xlu0 %1549
    %v1551 = vlaneseq
    %v1552 = vshrl.u32 %v1551, 7
    %v1553 = vadd.s32 %v1552, 8
    %1554 = vset.pattern.permute.xlu0 %v1553
    %1555 = vperm.xlu0 %1554, %v1385
    %v1556 = vpop.permute.xlu0 %1555
    %v1557 = vlaneseq
    %v1558 = vshrl.u32 %v1557, 7
    %v1559 = vadd.s32 %v1558, 8
    %1560 = vset.pattern.permute.xlu0 %v1559
    %1561 = vperm.xlu0 %1560, %v1392
    %v1562 = vpop.permute.xlu0 %1561
    %v1563 = vld [vmem:[#allocation31] sm:$0x1]
    %v1564 = vld [vmem:[%s23] sm:$0x1]
    %v1565 = vmul.f32 %v794, 0.0
    %v1566 = vadd.f32 %v1565, %v987
    %v1567 = vmul.f32 %v1270, 0.0
    %v1568 = vadd.f32 %v1567, %v1458
    %v1569 = vmul.f32 %v1566, %v1008
    %vm1570 = vcmask 125952
    %v1571 = vsel %vm1570, %v1569, 0.0
    %v1572 = vrot.slane %v1571, 4
    %v1573 = vadd.f32 %v1571, %v1572
    %v1574 = vrot.slane %v1573, 2
    %v1575 = vadd.f32 %v1573, %v1574
    %v1576 = vrot.slane %v1575, 1
    %v1577 = vadd.f32 %v1575, %v1576
    %v1578 = vmul.f32 %v1568, %v1514
    %v1579 = vsel %vm1570, %v1578, 0.0
    %v1580 = vrot.slane %v1579, 4
    %v1581 = vadd.f32 %v1579, %v1580
    %v1582 = vrot.slane %v1581, 2
    %v1583 = vadd.f32 %v1581, %v1582
    %v1584 = vrot.slane %v1583, 1
    %v1585 = vadd.f32 %v1583, %v1584
    %v1586 = vmul.f32 %v810, 0.0
    %v1587 = vadd.f32 %v1586, %v995
    %v1588 = vmul.f32 %v1286, 0.0
    %v1589 = vadd.f32 %v1588, %v1466
    %v1590 = vmul.f32 %v1587, %v1056
    %v1591 = vsel %vm1570, %v1590, 0.0
    %v1592 = vrot.slane %v1591, 4
    %v1593 = vadd.f32 %v1591, %v1592
    %v1594 = vrot.slane %v1593, 2
    %v1595 = vadd.f32 %v1593, %v1594
    %v1596 = vrot.slane %v1595, 1
    %v1597 = vadd.f32 %v1595, %v1596
    %v1598 = vmul.f32 %v1589, %v1562
    %v1599 = vsel %vm1570, %v1598, 0.0
    %v1600 = vrot.slane %v1599, 4
    %v1601 = vadd.f32 %v1599, %v1600
    %v1602 = vrot.slane %v1601, 2
    %v1603 = vadd.f32 %v1601, %v1602
    %v1604 = vrot.slane %v1603, 1
    %v1605 = vadd.f32 %v1603, %v1604
    %v1606 = vmul.f32 %v796, %v1566
    %v1607 = vadd.f32 %v1606, %v988
    %v1608 = vmul.f32 %v1268, %v1568
    %v1609 = vadd.f32 %v1608, %v1457
    %v1610 = vmul.f32 %v1607, %v1014
    %v1611 = vsel %vm1570, %v1610, 0.0
    %v1612 = vrot.slane %v1611, 4
    %v1613 = vadd.f32 %v1611, %v1612
    %v1614 = vrot.slane %v1613, 2
    %v1615 = vadd.f32 %v1613, %v1614
    %v1616 = vrot.slane %v1615, 1
    %v1617 = vadd.f32 %v1615, %v1616
    %v1618 = vmul.f32 %v1609, %v1508
    %v1619 = vsel %vm1570, %v1618, 0.0
    %v1620 = vrot.slane %v1619, 4
    %v1621 = vadd.f32 %v1619, %v1620
    %v1622 = vrot.slane %v1621, 2
    %v1623 = vadd.f32 %v1621, %v1622
    %v1624 = vrot.slane %v1623, 1
    %v1625 = vadd.f32 %v1623, %v1624
    %v1626 = vmul.f32 %v812, %v1587
    %v1627 = vadd.f32 %v1626, %v996
    %v1628 = vmul.f32 %v1284, %v1589
    %v1629 = vadd.f32 %v1628, %v1465
    %v1630 = vmul.f32 %v1627, %v1062
    %v1631 = vsel %vm1570, %v1630, 0.0
    %v1632 = vrot.slane %v1631, 4
    %v1633 = vadd.f32 %v1631, %v1632
    %v1634 = vrot.slane %v1633, 2
    %v1635 = vadd.f32 %v1633, %v1634
    %v1636 = vrot.slane %v1635, 1
    %v1637 = vadd.f32 %v1635, %v1636
    %v1638 = vmul.f32 %v1629, %v1556
    %v1639 = vsel %vm1570, %v1638, 0.0
    %v1640 = vrot.slane %v1639, 4
    %v1641 = vadd.f32 %v1639, %v1640
    %v1642 = vrot.slane %v1641, 2
    %v1643 = vadd.f32 %v1641, %v1642
    %v1644 = vrot.slane %v1643, 1
    %v1645 = vadd.f32 %v1643, %v1644
    %v1646 = vmul.f32 %v798, %v1607
    %v1647 = vadd.f32 %v1646, %v989
    %v1648 = vmul.f32 %v1266, %v1609
    %v1649 = vadd.f32 %v1648, %v1456
    %v1650 = vmul.f32 %v1647, %v1020
    %v1651 = vsel %vm1570, %v1650, 0.0
    %v1652 = vrot.slane %v1651, 4
    %v1653 = vadd.f32 %v1651, %v1652
    %v1654 = vrot.slane %v1653, 2
    %v1655 = vadd.f32 %v1653, %v1654
    %v1656 = vrot.slane %v1655, 1
    %v1657 = vadd.f32 %v1655, %v1656
    %v1658 = vmul.f32 %v1649, %v1502
    %v1659 = vsel %vm1570, %v1658, 0.0
    %v1660 = vrot.slane %v1659, 4
    %v1661 = vadd.f32 %v1659, %v1660
    %v1662 = vrot.slane %v1661, 2
    %v1663 = vadd.f32 %v1661, %v1662
    %v1664 = vrot.slane %v1663, 1
    %v1665 = vadd.f32 %v1663, %v1664
    %v1666 = vmul.f32 %v814, %v1627
    %v1667 = vadd.f32 %v1666, %v997
    %v1668 = vmul.f32 %v1282, %v1629
    %v1669 = vadd.f32 %v1668, %v1464
    %v1670 = vmul.f32 %v1667, %v1068
    %v1671 = vsel %vm1570, %v1670, 0.0
    %v1672 = vrot.slane %v1671, 4
    %v1673 = vadd.f32 %v1671, %v1672
    %v1674 = vrot.slane %v1673, 2
    %v1675 = vadd.f32 %v1673, %v1674
    %v1676 = vrot.slane %v1675, 1
    %v1677 = vadd.f32 %v1675, %v1676
    %v1678 = vmul.f32 %v1669, %v1550
    %v1679 = vsel %vm1570, %v1678, 0.0
    %v1680 = vrot.slane %v1679, 4
    %v1681 = vadd.f32 %v1679, %v1680
    %v1682 = vrot.slane %v1681, 2
    %v1683 = vadd.f32 %v1681, %v1682
    %v1684 = vrot.slane %v1683, 1
    %v1685 = vadd.f32 %v1683, %v1684
    %v1686 = vmul.f32 %v800, %v1647
    %v1687 = vadd.f32 %v1686, %v990
    %v1688 = vmul.f32 %v1264, %v1649
    %v1689 = vadd.f32 %v1688, %v1455
    %v1690 = vmul.f32 %v1687, %v1026
    %v1691 = vsel %vm1570, %v1690, 0.0
    %v1692 = vrot.slane %v1691, 4
    %v1693 = vadd.f32 %v1691, %v1692
    %v1694 = vrot.slane %v1693, 2
    %v1695 = vadd.f32 %v1693, %v1694
    %v1696 = vrot.slane %v1695, 1
    %v1697 = vadd.f32 %v1695, %v1696
    %v1698 = vmul.f32 %v1689, %v1496
    %v1699 = vsel %vm1570, %v1698, 0.0
    %v1700 = vrot.slane %v1699, 4
    %v1701 = vadd.f32 %v1699, %v1700
    %v1702 = vrot.slane %v1701, 2
    %v1703 = vadd.f32 %v1701, %v1702
    %v1704 = vrot.slane %v1703, 1
    %v1705 = vadd.f32 %v1703, %v1704
    %v1706 = vmul.f32 %v816, %v1667
    %v1707 = vadd.f32 %v1706, %v998
    %v1708 = vmul.f32 %v1280, %v1669
    %v1709 = vadd.f32 %v1708, %v1463
    %v1710 = vmul.f32 %v1707, %v1074
    %v1711 = vsel %vm1570, %v1710, 0.0
    %v1712 = vrot.slane %v1711, 4
    %v1713 = vadd.f32 %v1711, %v1712
    %v1714 = vrot.slane %v1713, 2
    %v1715 = vadd.f32 %v1713, %v1714
    %v1716 = vrot.slane %v1715, 1
    %v1717 = vadd.f32 %v1715, %v1716
    %v1718 = vmul.f32 %v1709, %v1544
    %v1719 = vsel %vm1570, %v1718, 0.0
    %v1720 = vrot.slane %v1719, 4
    %v1721 = vadd.f32 %v1719, %v1720
    %v1722 = vrot.slane %v1721, 2
    %v1723 = vadd.f32 %v1721, %v1722
    %v1724 = vrot.slane %v1723, 1
    %v1725 = vadd.f32 %v1723, %v1724
    %v1726 = vmul.f32 %v802, %v1687
    %v1727 = vadd.f32 %v1726, %v991
    %v1728 = vmul.f32 %v1262, %v1689
    %v1729 = vadd.f32 %v1728, %v1454
    %v1730 = vmul.f32 %v1727, %v1032
    %v1731 = vsel %vm1570, %v1730, 0.0
    %v1732 = vrot.slane %v1731, 4
    %v1733 = vadd.f32 %v1731, %v1732
    %v1734 = vrot.slane %v1733, 2
    %v1735 = vadd.f32 %v1733, %v1734
    %v1736 = vrot.slane %v1735, 1
    %v1737 = vadd.f32 %v1735, %v1736
    %v1738 = vmul.f32 %v1729, %v1490
    %v1739 = vsel %vm1570, %v1738, 0.0
    %v1740 = vrot.slane %v1739, 4
    %v1741 = vadd.f32 %v1739, %v1740
    %v1742 = vrot.slane %v1741, 2
    %v1743 = vadd.f32 %v1741, %v1742
    %v1744 = vrot.slane %v1743, 1
    %v1745 = vadd.f32 %v1743, %v1744
    %v1746 = vmul.f32 %v818, %v1707
    %v1747 = vadd.f32 %v1746, %v999
    %v1748 = vmul.f32 %v1278, %v1709
    %v1749 = vadd.f32 %v1748, %v1462
    %v1750 = vmul.f32 %v1747, %v1080
    %v1751 = vsel %vm1570, %v1750, 0.0
    %v1752 = vrot.slane %v1751, 4
    %v1753 = vadd.f32 %v1751, %v1752
    %v1754 = vrot.slane %v1753, 2
    %v1755 = vadd.f32 %v1753, %v1754
    %v1756 = vrot.slane %v1755, 1
    %v1757 = vadd.f32 %v1755, %v1756
    %v1758 = vmul.f32 %v1749, %v1538
    %v1759 = vsel %vm1570, %v1758, 0.0
    %v1760 = vrot.slane %v1759, 4
    %v1761 = vadd.f32 %v1759, %v1760
    %v1762 = vrot.slane %v1761, 2
    %v1763 = vadd.f32 %v1761, %v1762
    %v1764 = vrot.slane %v1763, 1
    %v1765 = vadd.f32 %v1763, %v1764
    %v1766 = vmul.f32 %v804, %v1727
    %v1767 = vadd.f32 %v1766, %v992
    %v1768 = vmul.f32 %v1260, %v1729
    %v1769 = vadd.f32 %v1768, %v1453
    %v1770 = vmul.f32 %v1767, %v1038
    %v1771 = vsel %vm1570, %v1770, 0.0
    %v1772 = vrot.slane %v1771, 4
    %v1773 = vadd.f32 %v1771, %v1772
    %v1774 = vrot.slane %v1773, 2
    %v1775 = vadd.f32 %v1773, %v1774
    %v1776 = vrot.slane %v1775, 1
    %v1777 = vadd.f32 %v1775, %v1776
    %v1778 = vmul.f32 %v1769, %v1484
    %v1779 = vsel %vm1570, %v1778, 0.0
    %v1780 = vrot.slane %v1779, 4
    %v1781 = vadd.f32 %v1779, %v1780
    %v1782 = vrot.slane %v1781, 2
    %v1783 = vadd.f32 %v1781, %v1782
    %v1784 = vrot.slane %v1783, 1
    %v1785 = vadd.f32 %v1783, %v1784
    %v1786 = vmul.f32 %v820, %v1747
    %v1787 = vadd.f32 %v1786, %v1000
    %v1788 = vmul.f32 %v1276, %v1749
    %v1789 = vadd.f32 %v1788, %v1461
    %v1790 = vmul.f32 %v1787, %v1086
    %v1791 = vsel %vm1570, %v1790, 0.0
    %v1792 = vrot.slane %v1791, 4
    %v1793 = vadd.f32 %v1791, %v1792
    %v1794 = vrot.slane %v1793, 2
    %v1795 = vadd.f32 %v1793, %v1794
    %v1796 = vrot.slane %v1795, 1
    %v1797 = vadd.f32 %v1795, %v1796
    %v1798 = vmul.f32 %v1789, %v1532
    %v1799 = vsel %vm1570, %v1798, 0.0
    %v1800 = vrot.slane %v1799, 4
    %v1801 = vadd.f32 %v1799, %v1800
    %v1802 = vrot.slane %v1801, 2
    %v1803 = vadd.f32 %v1801, %v1802
    %v1804 = vrot.slane %v1803, 1
    %v1805 = vadd.f32 %v1803, %v1804
    %v1806 = vmul.f32 %v806, %v1767
    %v1807 = vadd.f32 %v1806, %v993
    %v1808 = vmul.f32 %v1258, %v1769
    %v1809 = vadd.f32 %v1808, %v1452
    %v1810 = vmul.f32 %v1807, %v1044
    %v1811 = vsel %vm1570, %v1810, 0.0
    %v1812 = vrot.slane %v1811, 4
    %v1813 = vadd.f32 %v1811, %v1812
    %v1814 = vrot.slane %v1813, 2
    %v1815 = vadd.f32 %v1813, %v1814
    %v1816 = vrot.slane %v1815, 1
    %v1817 = vadd.f32 %v1815, %v1816
    %v1818 = vmul.f32 %v1809, %v1478
    %v1819 = vsel %vm1570, %v1818, 0.0
    %v1820 = vrot.slane %v1819, 4
    %v1821 = vadd.f32 %v1819, %v1820
    %v1822 = vrot.slane %v1821, 2
    %v1823 = vadd.f32 %v1821, %v1822
    %v1824 = vrot.slane %v1823, 1
    %v1825 = vadd.f32 %v1823, %v1824
    %v1826 = vmul.f32 %v822, %v1787
    %v1827 = vadd.f32 %v1826, %v1001
    %v1828 = vmul.f32 %v1274, %v1789
    %v1829 = vadd.f32 %v1828, %v1460
    %v1830 = vmul.f32 %v1827, %v1092
    %v1831 = vsel %vm1570, %v1830, 0.0
    %v1832 = vrot.slane %v1831, 4
    %v1833 = vadd.f32 %v1831, %v1832
    %v1834 = vrot.slane %v1833, 2
    %v1835 = vadd.f32 %v1833, %v1834
    %v1836 = vrot.slane %v1835, 1
    %v1837 = vadd.f32 %v1835, %v1836
    %v1838 = vmul.f32 %v1829, %v1526
    %v1839 = vsel %vm1570, %v1838, 0.0
    %v1840 = vrot.slane %v1839, 4
    %v1841 = vadd.f32 %v1839, %v1840
    %v1842 = vrot.slane %v1841, 2
    %v1843 = vadd.f32 %v1841, %v1842
    %v1844 = vrot.slane %v1843, 1
    %v1845 = vadd.f32 %v1843, %v1844
    %v1846 = vmul.f32 %v808, %v1807
    %v1847 = vadd.f32 %v1846, %v994
    %v1848 = vmul.f32 %v1256, %v1809
    %v1849 = vadd.f32 %v1848, %v1451
    %v1850 = vmul.f32 %v1847, %v1050
    %v1851 = vsel %vm1570, %v1850, 0.0
    %v1852 = vrot.slane %v1851, 4
    %v1853 = vadd.f32 %v1851, %v1852
    %v1854 = vrot.slane %v1853, 2
    %v1855 = vadd.f32 %v1853, %v1854
    %v1856 = vrot.slane %v1855, 1
    %v1857 = vadd.f32 %v1855, %v1856
    %v1858 = vmul.f32 %v1849, %v1472
    %v1859 = vsel %vm1570, %v1858, 0.0
    %v1860 = vrot.slane %v1859, 4
    %v1861 = vadd.f32 %v1859, %v1860
    %v1862 = vrot.slane %v1861, 2
    %v1863 = vadd.f32 %v1861, %v1862
    %v1864 = vrot.slane %v1863, 1
    %v1865 = vadd.f32 %v1863, %v1864
    %v1866 = vmul.f32 %v824, %v1827
    %v1867 = vadd.f32 %v1866, %v1002
    %v1868 = vmul.f32 %v1272, %v1829
    %v1869 = vadd.f32 %v1868, %v1459
    %v1870 = vmul.f32 %v1867, %v1098
    %v1871 = vsel %vm1570, %v1870, 0.0
    %v1872 = vrot.slane %v1871, 4
    %v1873 = vadd.f32 %v1871, %v1872
    %v1874 = vrot.slane %v1873, 2
    %v1875 = vadd.f32 %v1873, %v1874
    %v1876 = vrot.slane %v1875, 1
    %v1877 = vadd.f32 %v1875, %v1876
    %v1878 = vmul.f32 %v1869, %v1520
    %v1879 = vsel %vm1570, %v1878, 0.0
    %v1880 = vrot.slane %v1879, 4
    %v1881 = vadd.f32 %v1879, %v1880
    %v1882 = vrot.slane %v1881, 2
    %v1883 = vadd.f32 %v1881, %v1882
    %v1884 = vrot.slane %v1883, 1
    %v1885 = vadd.f32 %v1883, %v1884
    %vm1886 = vcmask 1040384
    %v1887 = vsel %vm1886, %v1577, %v1617
    %vm1888 = vcmask 1041408
    %v1889 = vsel %vm1888, %v1887, %v1657
    %vm1890 = vcmask 1042432
    %v1891 = vsel %vm1890, %v1889, %v1697
    %v1892 = vsel %vm684, %v1891, %v1737
    %vm1893 = vcmask 1044480
    %v1894 = vsel %vm1893, %v1892, %v1777
    %vm1895 = vcmask 1045504
    %v1896 = vsel %vm1895, %v1894, %v1817
    %vm1897 = vcmask 1046528
    %v1898 = vsel %vm1897, %v1896, %v1857
    %v1899 = vsel %vm1886, %v1597, %v1637
    %v1900 = vsel %vm1888, %v1899, %v1677
    %v1901 = vsel %vm1890, %v1900, %v1717
    %v1902 = vsel %vm684, %v1901, %v1757
    %v1903 = vsel %vm1893, %v1902, %v1797
    %v1904 = vsel %vm1895, %v1903, %v1837
    %v1905 = vsel %vm1897, %v1904, %v1877
    %v1907 = vperm.slane %v1563, 0
    %v1909 = vmul.f32 %v592, %v1907
    %v1910 = vmul.f32 %v595, %v1907
    %v1911 = vadd.f32 %v1898, %v1909
    %v1912 = vadd.f32 %v1905, %v1910
    %v1913 = vsel %vm1886, %v1865, %v1825
    %v1914 = vsel %vm1888, %v1913, %v1785
    %v1915 = vsel %vm1890, %v1914, %v1745
    %v1916 = vsel %vm684, %v1915, %v1705
    %v1917 = vsel %vm1893, %v1916, %v1665
    %v1918 = vsel %vm1895, %v1917, %v1625
    %v1919 = vsel %vm1897, %v1918, %v1585
    %v1920 = vsel %vm1886, %v1885, %v1845
    %v1921 = vsel %vm1888, %v1920, %v1805
    %v1922 = vsel %vm1890, %v1921, %v1765
    %v1923 = vsel %vm684, %v1922, %v1725
    %v1924 = vsel %vm1893, %v1923, %v1685
    %v1925 = vsel %vm1895, %v1924, %v1645
    %v1926 = vsel %vm1897, %v1925, %v1605
    %v1928 = vperm.slane %v1564, 0
    %1929 = vrot.lane.b32.xlu0 %v1928, 16
    %v1930 = vpop.permute.xlu0 %1929
    %v1932 = vmul.f32 %v592, %v1930
    %v1933 = vmul.f32 %v595, %v1930
    %1936 = vrot.lane.b32.xlu0 %v1932, 112
    %v1937 = vpop.permute.xlu0 %1936
    %1938 = vrot.lane.b32.xlu0 %v1933, 112
    %v1939 = vpop.permute.xlu0 %1938
    %v1942 = vadd.f32 %v1919, %v1937
    %v1943 = vadd.f32 %v1926, %v1939
    %v1944 = vadd.f32 %v1911, %v1942
    %v1945 = vadd.f32 %v1912, %v1943
    %1948 = vrot.lane.b32.xlu0 %v1944, 16
    %v1949 = vpop.permute.xlu0 %1948
    %1950 = vrot.lane.b32.xlu0 %v1945, 16
    %v1951 = vpop.permute.xlu0 %1950
    %v1954 = vmul.f32 %v635, %v1949
    %v1955 = vmul.f32 %v636, %v1951
    %v1956 = vld [vmem:[#allocation22] sm:$0xff]
    %v1957 = vld [vmem:[#allocation22 + $0x8] sm:$0xff]
    %v1958 = vld [vmem:[#allocation23] sm:$0x1]
    %v1960 = vperm.slane %v1958, 0
    %1964 = vrot.lane.b32.xlu0 %v1954, 112
    %v1965 = vpop.permute.xlu0 %1964
    %1966 = vrot.lane.b32.xlu0 %v1955, 112
    %v1967 = vpop.permute.xlu0 %1966
    %v1968 = vsel %vm567, %v1965, 0
    %v1970 = vsel %vm567, %v1967, 0
    %1972 = vmatpush.msra.mxu0 0.0
    %1973 = vmatpush.msra.mxu0 0.0
    %1974 = vmatpush.msra.mxu0 0.0
    %1975 = vmatpush.msra.mxu0 0.0
    %1976 = vmatpush.msra.mxu0 0.0
    %1977 = vmatpush.msra.mxu0 0.0
    %1978 = vmatpush.msra.mxu0 0.0
    %1979 = vmatpush.msra.mxu0 0.0
    %1980 = vmatpush.msra.mxu0 0.0
    %1981 = vmatpush.msra.mxu0 0.0
    %1982 = vmatpush.msra.mxu0 0.0
    %1983 = vmatpush.msra.mxu0 0.0
    %1984 = vmatpush.msra.mxu0 0.0
    %1985 = vmatpush.msra.mxu0 0.0
    %1986 = vmatpush.msra.mxu0 %v1957
    %1987 = vmatpush.msra.mxu0 %v1956
    %1988 = vmatmul.f32.gmra.mxu0 %v1968
    %v1989 = vpop.f32.mrf.mxu0
    %v1990 = vadd.f32 %v1960, %v1989
    %1991 = vmatmul.f32.gmra.mxu0 %v1970
    %v1992 = vpop.f32.mrf.mxu0
    %v1993 = vadd.f32 %v1960, %v1992
    %1994 = vdwg.mxu0
    %v1995 = vadd.f32 %v1990, %v466
    %v1996 = vadd.f32 %v1993, %v467
    %v1999 = vperm.slane %v384, 0
    %v2000 = vperm.slane %v385, 0
    %v2003 = vmul.f32 %v1999, %v1995
    %v2004 = vmul.f32 %v2000, %v1996
    %v2005 = vadd.f32 %v378, %v2003
    %v2006 = vadd.f32 %v379, %v2004
    %2007 = vst.msk [vmem:[#allocation35] sm:$0xff] %vm388, %v2005
    %2008 = vst.msk [vmem:[#allocation35 + $0x8] sm:$0xff] %vm388, %v2006
    // Predicated region
    $region182: #{tpu_custom_call.1} parent=1 // pred_check
      _
    $region183: #{tpu_custom_call.1} parent=1 // pred_check_branch
      %2010 = sbr.rel (0) target = $region185
    $region184: #{tpu_custom_call.1} parent=1 // pred_region
      %2012 = vsyncadd [#allocation4], 0
      %s2013 = sshll.u32 [#allocation35], 4
      %s2014 = int_to_ptr.vmem [resolvable:$true] %s2013
      %s2015 = sshll.u32 %s24, 4
      %s2016 = int_to_ptr.hbm [resolvable:$true] %s2015
      %2021 = dma.vmem_to_hbm [thread:$0]  %s2014, 256, %s2016, [#allocation4], 128, 128, 8
    $region185: #{tpu_custom_call.1} parent=1 // pred_fallthru
      _
    // Predicated region
    $region186: #{tpu_custom_call.1} parent=1 // pred_check
      _
    $region187: #{tpu_custom_call.1} parent=1 // pred_check_branch
      %2023 = sbr.rel (0) target = $region189
    $region188: #{tpu_custom_call.1} parent=1 // pred_region
      %2025 = dma.done [#allocation4], 256
    $region189: #{tpu_custom_call.1} parent=1 // pred_fallthru
      _
    %2026 = vsyncpa [#allocation3], 1
    %2027 = vsyncpa [#allocation6], 1
    %2028 = vsyncpa [#allocation9], 1
    %2029 = vsyncpa [#allocation12], 1
    %2030 = vsyncpa [#allocation15], 1
    %2031 = vsyncpa [#allocation18], 1
    %2032 = vsyncpa [#allocation21], 1
    %2033 = vsyncpa [#allocation24], 1
    %2034 = vsyncpa [#allocation27], 1
    %2035 = vsyncpa [#allocation30], 1
    %2036 = vsyncpa [#allocation33], 1
    %2037 = vsyncpa [#allocation4], 1

</llo_original>
